<compile_context>
chip_gen: v6e
topology: v6e:2x2x1
jax: 0.10.0
libtpu: 0.0.40
codegen_flags: <defaults>
</compile_context>

<pallas_src>
import jax
import jax.numpy as jnp
from jax.experimental import pallas as pl
from jax.experimental.pallas import tpu as pltpu


def _round_up(x, m):
    return (x + m - 1) // m * m


def _vmem_limit_bytes(block_bytes):
    # double-buffered blocks + slack, clamped to a range that is safe on
    # v5e (16 MiB scoped default) through v7x (64 MiB physical VMEM).
    need = 2 * int(block_bytes) + (4 << 20)
    return int(min(max(need, 16 << 20), 32 << 20))


# ----------------------------------------------------------------------------
# LBP kernel: 8-neighbor >= comparisons against the center pixel, packed into
# an 8-bit code (stored as float32, exactly like torch's float `lbp` buffer).
# Single grid step over the whole (B*C, H, W_lane) slab, lane-dense output.
# ----------------------------------------------------------------------------
def _lbp_kernel(xp_ref, out_ref):
    # xp_ref : (BC, H+2, Wl+2) zero-padded images (W already padded to lanes)
    # out_ref: (BC, H, Wl)     LBP codes in [0, 255] as float32
    H = out_ref.shape[1]
    Wl = out_ref.shape[2]
    c = xp_ref[:, 1:H + 1, 1:Wl + 1]
    val = (xp_ref[:, 0:H, 1:Wl + 1] >= c).astype(jnp.float32)            # * 1
    val = val + (xp_ref[:, 0:H, 2:Wl + 2] >= c).astype(jnp.float32) * 2.0
    val = val + (xp_ref[:, 1:H + 1, 2:Wl + 2] >= c).astype(jnp.float32) * 4.0
    val = val + (xp_ref[:, 2:H + 2, 2:Wl + 2] >= c).astype(jnp.float32) * 8.0
    val = val + (xp_ref[:, 2:H + 2, 1:Wl + 1] >= c).astype(jnp.float32) * 16.0
    val = val + (xp_ref[:, 2:H + 2, 0:Wl] >= c).astype(jnp.float32) * 32.0
    val = val + (xp_ref[:, 1:H + 1, 0:Wl] >= c).astype(jnp.float32) * 64.0
    val = val + (xp_ref[:, 0:H, 0:Wl] >= c).astype(jnp.float32) * 128.0
    out_ref[...] = val


def lbp_extractor_rgb_pallas(x):
    """x: (B, C, H, W) float32 -> (B, C, H, W) float32 LBP codes (0..255)."""
    B, C, H, W = x.shape
    Wl = _round_up(W, 128)                  # lane-dense output width
    # zero pad: 1 row top/bottom, 1 col left, (Wl - W + 1) cols right; the
    # extra right columns are zeros so codes in columns < W are unchanged.
    xp = jnp.pad(x, ((0, 0), (0, 0), (1, 1), (1, Wl - W + 1)))
    xp = xp.reshape(B * C, H + 2, Wl + 2)

    blk_bytes = (B * C) * ((H + 2) * (Wl + 2) + H * Wl) * 4
    out = pl.pallas_call(
        _lbp_kernel,
        out_shape=jax.ShapeDtypeStruct((B * C, H, Wl), jnp.float32),
        grid=(1,),                          # one step: amortize per-step overhead
        in_specs=[pl.BlockSpec((B * C, H + 2, Wl + 2), lambda i: (0, 0, 0))],
        out_specs=pl.BlockSpec((B * C, H, Wl), lambda i: (0, 0, 0)),
        compiler_params=pltpu.CompilerParams(
            vmem_limit_bytes=_vmem_limit_bytes(blk_bytes)),
    )(xp)
    return out[:, :, :W].reshape(B, C, H, W)


# ----------------------------------------------------------------------------
# Conv2d(k=3, stride=2, padding=1) on NHWC activations:
#   4 stride-2 parity phases outside (single read of the input, no 9x im2col),
#   9-tap in-kernel accumulation, bf16 operands / f32 accumulate, bias epilogue.
# ----------------------------------------------------------------------------
def _conv3x3_s2_kernel(p00_ref, p01_ref, p10_ref, p11_ref, w_ref, b_ref, o_ref):
    # p??_ref: (1, Ho+1, Wo+1, Cs) bf16 stride-2 parity phases of padded input
    # w_ref  : (9, Cs, Cn)         bf16 tap-major weights (index = kh*3 + kw)
    # b_ref  : (1, Cn)             f32  bias
    # o_ref  : (1, Ho, Wo, Cn)     f32  output tile (Cn lane-dense)
    Ho = o_ref.shape[1]
    Wo = o_ref.shape[2]
    Cn = o_ref.shape[3]
    phases = (p00_ref, p01_ref, p10_ref, p11_ref)
    bias = b_ref[...]                       # hoisted out of the loops
    # Per-output-row accumulation keeps every dot a plain 2-D (Wo,Cs)x(Cs,Cn)
    # MXU matmul and avoids any in-kernel relayout/reshape of spatial dims.
    for r in range(Ho):
        acc = jnp.zeros((Wo, Cn), jnp.float32)
        for kh in range(3):
            dh = kh // 2
            for kw in range(3):
                dw = kw // 2
                ph = phases[(kh % 2) * 2 + (kw % 2)]
                a = ph[0, r + dh, dw:dw + Wo, :]          # (Wo, Cs) bf16
                acc = acc + jnp.dot(a, w_ref[kh * 3 + kw],
                                    preferred_element_type=jnp.float32)
        o_ref[0, r, :, :] = acc + bias


def conv3x3_s2_nhwc_pallas(x, w9, bias):
    """PyTorch Conv2d(k=3, stride=2, padding=1) semantics on NHWC activations.

    x    : (B, H, W, Cs)  float32/bfloat16 (Cs = stored input channels)
    w9   : (9, Cs, Cop)   bfloat16, tap-major (index = kh*3 + kw)
    bias : (1, Cop)       float32
    Returns (B, Ho, Wo, Cop) float32.
    """
    B, H, W, Cs = x.shape
    Cop = w9.shape[2]
    Ho = (H - 1) // 2 + 1
    Wo = (W - 1) // 2 + 1

    # Pad once (spatial padding=1 plus up to one extra zero row/col so every
    # stride-2 parity phase is exactly (Ho+1, Wo+1)); input is read once.
    Hp = 2 * (Ho + 1)
    Wp = 2 * (Wo + 1)
    xp = jnp.pad(x.astype(jnp.bfloat16),
                 ((0, 0), (1, Hp - H - 1), (1, Wp - W - 1), (0, 0)))
    p00 = xp[:, 0::2, 0::2, :]
    p01 = xp[:, 0::2, 1::2, :]
    p10 = xp[:, 1::2, 0::2, :]
    p11 = xp[:, 1::2, 1::2, :]

    tn = 128 if Cop % 128 == 0 else Cop     # lane-dense Cout tiles
    nj = Cop // tn

    phase_spec = pl.BlockSpec((1, Ho + 1, Wo + 1, Cs), lambda b, j: (b, 0, 0, 0))
    blk_bytes = (4 * (Ho + 1) * (Wo + 1) * Cs * 2       # phases (bf16)
                 + 9 * Cs * tn * 2                      # weights (bf16)
                 + tn * 4                               # bias (f32)
                 + Ho * Wo * tn * 4)                    # output (f32)

    out = pl.pallas_call(
        _conv3x3_s2_kernel,
        out_shape=jax.ShapeDtypeStruct((B, Ho, Wo, Cop), jnp.float32),
        grid=(B, nj),
        in_specs=[
            phase_spec, phase_spec, phase_spec, phase_spec,
            pl.BlockSpec((9, Cs, tn), lambda b, j: (0, 0, j)),
            pl.BlockSpec((1, tn), lambda b, j: (0, j)),
        ],
        out_specs=pl.BlockSpec((1, Ho, Wo, tn), lambda b, j: (b, 0, 0, j)),
        compiler_params=pltpu.CompilerParams(
            dimension_semantics=("parallel", "parallel"),
            vmem_limit_bytes=_vmem_limit_bytes(blk_bytes)),
    )(p00, p01, p10, p11, w9, bias)
    return out


# ----------------------------------------------------------------------------
# Parameters (deterministic synthetic weights, no checkpoint load)
# ----------------------------------------------------------------------------
def _make_conv_params(key, cin, cout):
    kw_, kb = jax.random.split(key)
    fan_in = cin * 9
    w = jax.random.normal(kw_, (cout, cin, 3, 3), jnp.float32) * (2.0 / fan_in) ** 0.5
    b = jax.random.normal(kb, (cout,), jnp.float32) * 0.01
    return w, b


def _prep_conv(w, b, cin_store, cout_store):
    """(Cout,Cin,3,3)/(Cout,) torch-layout params -> Pallas operands with the
    channel dims zero-padded to the stored (lane-dense) sizes and cast bf16."""
    cout, cin = w.shape[0], w.shape[1]
    w9 = jnp.transpose(w, (2, 3, 1, 0)).reshape(9, cin, cout)     # tap-major
    w9 = jnp.pad(w9, ((0, 0), (0, cin_store - cin), (0, cout_store - cout)))
    bb = jnp.pad(b, (0, cout_store - cout)).reshape(1, cout_store)
    return w9.astype(jnp.bfloat16), bb.astype(jnp.float32)


class LBPExtractorPallas:
    def __init__(self, dims=(64, 128, 256), seed=0):
        self.dims = tuple(dims)
        key = jax.random.PRNGKey(seed)
        keys = jax.random.split(key, 2 * len(dims))
        in_chs = (3,) + self.dims[:-1]
        # raw float32 parameters (also used by the pure-JAX reference)
        self.backbone_raw = [_make_conv_params(keys[i], in_chs[i], self.dims[i])
                             for i in range(len(dims))]
        self.convs_raw = [_make_conv_params(keys[len(dims) + i],
                                            self.dims[i], self.dims[i])
                          for i in range(len(dims))]
        # stored (lane-dense) channel counts between stages
        store_out = [_round_up(d, 128) for d in self.dims]
        store_in = [3] + store_out[:-1]
        self.backbone_k = [_prep_conv(w, b, store_in[i], store_out[i])
                           for i, (w, b) in enumerate(self.backbone_raw)]
        self.convs_k = [_prep_conv(w, b, store_out[i], _round_up(self.dims[i], 128))
                        for i, (w, b) in enumerate(self.convs_raw)]

    def __call__(self, x):
        lbp = lbp_extractor_rgb_pallas(x)              # (B, 3, H, W)
        h = jnp.transpose(lbp, (0, 2, 3, 1))           # NHWC once, at boundary
        # TODO(synk): LBP->first-conv fusion would save one HBM round trip of
        #             the LBP map; kept as separate kernels for clarity.
        feats = []
        for (w9, bias) in self.backbone_k:             # stand-in ir50 pyramid
            h = conv3x3_s2_nhwc_pallas(h, w9, bias)
            feats.append(h)
        outs = []
        for i, (w9, bias) in enumerate(self.convs_k):
            o = conv3x3_s2_nhwc_pallas(feats[i], w9, bias)
            # drop channel padding + back to NCHW only at the module boundary
            outs.append(jnp.transpose(o[..., :self.dims[i]], (0, 3, 1, 2)))
        return outs


# ----------------------------------------------------------------------------
# Pure-JAX references (correctness checks only)
# ----------------------------------------------------------------------------
def _lbp_ref(x):
    xp = jnp.pad(x, ((0, 0), (0, 0), (1, 1), (1, 1)))
    H, W = x.shape[2], x.shape[3]
    c = xp[:, :, 1:H + 1, 1:W + 1]
    weights = [1, 2, 4, 8, 16, 32, 64, 128]
    offs = [(0, 1), (0, 2), (1, 2), (2, 2), (2, 1), (2, 0), (1, 0), (0, 0)]
    val = jnp.zeros_like(c)
    for wgt, (dh, dw) in zip(weights, offs):
        nb = xp[:, :, dh:dh + H, dw:dw + W]
        val = val + (nb >= c).astype(jnp.float32) * wgt
    return val


def _conv_ref_nchw(x, w, b):
    y = jax.lax.conv_general_dilated(
        x, w, window_strides=(2, 2), padding=((1, 1), (1, 1)),
        dimension_numbers=("NCHW", "OIHW", "NCHW"),
        precision=jax.lax.Precision.HIGHEST)
    return y + b.reshape(1, -1, 1, 1)


def _module_ref(model, x):
    h = _lbp_ref(x)
    feats = []
    for (w, b) in model.backbone_raw:
        h = _conv_ref_nchw(h, w, b)
        feats.append(h)
    return [_conv_ref_nchw(feats[i], *model.convs_raw[i])
            for i in range(len(model.dims))]


if __name__ == "__main__":
    B, C, H, W = 2, 3, 32, 32
    key = jax.random.PRNGKey(0)
    x = jax.random.uniform(key, (B, C, H, W), jnp.float32) * 255.0

    model = LBPExtractorPallas(dims=(64, 128, 256), seed=0)

    # exact check of the Pallas LBP stage (integer-valued comparisons -> exact)
    lbp_out = jax.block_until_ready(lbp_extractor_rgb_pallas(x))
    lbp_exp = jax.block_until_ready(_lbp_ref(x))
    assert jnp.array_equal(lbp_out, lbp_exp), "LBP kernel mismatch"

    fwd = jax.jit(lambda inp: model(inp))
    outs = [jax.block_until_ready(o) for o in fwd(x)]

    expected_shapes = [(B, 64, 8, 8), (B, 128, 4, 4), (B, 256, 2, 2)]
    refs = _module_ref(model, x)
    for o, r, s in zip(outs, refs, expected_shapes):
        assert o.shape == s and o.dtype == jnp.float32, (o.shape, o.dtype)
        # bf16-operand / f32-accumulate conv chain: tolerance-gated check
        err = float(jnp.linalg.norm(o - r) / (jnp.linalg.norm(r) + 1e-6))
        assert err < 5e-2, f"conv chain mismatch: rel_err={err}"

    print("KERNEL_OK")
</pallas_src>

<mosaic_0001>
module attributes {stable_mosaic.version = 11 : i64} {
  func.func @_lbp_kernel(%arg0: i32, %arg1: memref<6x34x130xf32, #tpu.memory_space<vmem>>, %arg2: memref<6x32x128xf32, #tpu.memory_space<vmem>>) attributes {dimension_semantics = [#tpu.dimension_semantics<arbitrary>], iteration_bounds = array<i64: 1>, scalar_prefetch = 0 : i64, scratch_operands = 0 : i64, tpu.core_type = #tpu.core_type<tc>, window_params = [{pipeline_mode = #tpu.pipeline_mode<synchronous>, transform_indices = @transform_0, window_bounds = array<i64: 6, 34, 130>}, {pipeline_mode = #tpu.pipeline_mode<synchronous>, transform_indices = @transform_1, window_bounds = array<i64: 6, 32, 128>}]} {
    %c0 = arith.constant 0 : index
    %c1 = arith.constant 1 : index
    %c1_0 = arith.constant 1 : index
    %0 = vector.load %arg1[%c0, %c1, %c1_0] : memref<6x34x130xf32, #tpu.memory_space<vmem>>, vector<6x32x128xf32>
    %c0_1 = arith.constant 0 : index
    %c0_2 = arith.constant 0 : index
    %c1_3 = arith.constant 1 : index
    %1 = vector.load %arg1[%c0_1, %c0_2, %c1_3] : memref<6x34x130xf32, #tpu.memory_space<vmem>>, vector<6x32x128xf32>
    %2 = arith.cmpf oge, %1, %0 : vector<6x32x128xf32>
    %3 = arith.extui %2 : vector<6x32x128xi1> to vector<6x32x128xi32>
    %4 = arith.sitofp %3 : vector<6x32x128xi32> to vector<6x32x128xf32>
    %c0_4 = arith.constant 0 : index
    %c0_5 = arith.constant 0 : index
    %c2 = arith.constant 2 : index
    %5 = vector.load %arg1[%c0_4, %c0_5, %c2] : memref<6x34x130xf32, #tpu.memory_space<vmem>>, vector<6x32x128xf32>
    %6 = arith.cmpf oge, %5, %0 : vector<6x32x128xf32>
    %7 = arith.extui %6 : vector<6x32x128xi1> to vector<6x32x128xi32>
    %8 = arith.sitofp %7 : vector<6x32x128xi32> to vector<6x32x128xf32>
    %cst = arith.constant 2.000000e+00 : f32
    %9 = vector.broadcast %cst : f32 to vector<6x32x128xf32>
    %10 = arith.mulf %8, %9 : vector<6x32x128xf32>
    %11 = arith.addf %4, %10 : vector<6x32x128xf32>
    %c0_6 = arith.constant 0 : index
    %c1_7 = arith.constant 1 : index
    %c2_8 = arith.constant 2 : index
    %12 = vector.load %arg1[%c0_6, %c1_7, %c2_8] : memref<6x34x130xf32, #tpu.memory_space<vmem>>, vector<6x32x128xf32>
    %13 = arith.cmpf oge, %12, %0 : vector<6x32x128xf32>
    %14 = arith.extui %13 : vector<6x32x128xi1> to vector<6x32x128xi32>
    %15 = arith.sitofp %14 : vector<6x32x128xi32> to vector<6x32x128xf32>
    %cst_9 = arith.constant 4.000000e+00 : f32
    %16 = vector.broadcast %cst_9 : f32 to vector<6x32x128xf32>
    %17 = arith.mulf %15, %16 : vector<6x32x128xf32>
    %18 = arith.addf %11, %17 : vector<6x32x128xf32>
    %c0_10 = arith.constant 0 : index
    %c2_11 = arith.constant 2 : index
    %c2_12 = arith.constant 2 : index
    %19 = vector.load %arg1[%c0_10, %c2_11, %c2_12] : memref<6x34x130xf32, #tpu.memory_space<vmem>>, vector<6x32x128xf32>
    %20 = arith.cmpf oge, %19, %0 : vector<6x32x128xf32>
    %21 = arith.extui %20 : vector<6x32x128xi1> to vector<6x32x128xi32>
    %22 = arith.sitofp %21 : vector<6x32x128xi32> to vector<6x32x128xf32>
    %cst_13 = arith.constant 8.000000e+00 : f32
    %23 = vector.broadcast %cst_13 : f32 to vector<6x32x128xf32>
    %24 = arith.mulf %22, %23 : vector<6x32x128xf32>
    %25 = arith.addf %18, %24 : vector<6x32x128xf32>
    %c0_14 = arith.constant 0 : index
    %c2_15 = arith.constant 2 : index
    %c1_16 = arith.constant 1 : index
    %26 = vector.load %arg1[%c0_14, %c2_15, %c1_16] : memref<6x34x130xf32, #tpu.memory_space<vmem>>, vector<6x32x128xf32>
    %27 = arith.cmpf oge, %26, %0 : vector<6x32x128xf32>
    %28 = arith.extui %27 : vector<6x32x128xi1> to vector<6x32x128xi32>
    %29 = arith.sitofp %28 : vector<6x32x128xi32> to vector<6x32x128xf32>
    %cst_17 = arith.constant 1.600000e+01 : f32
    %30 = vector.broadcast %cst_17 : f32 to vector<6x32x128xf32>
    %31 = arith.mulf %29, %30 : vector<6x32x128xf32>
    %32 = arith.addf %25, %31 : vector<6x32x128xf32>
    %c0_18 = arith.constant 0 : index
    %c2_19 = arith.constant 2 : index
    %c0_20 = arith.constant 0 : index
    %33 = vector.load %arg1[%c0_18, %c2_19, %c0_20] : memref<6x34x130xf32, #tpu.memory_space<vmem>>, vector<6x32x128xf32>
    %34 = arith.cmpf oge, %33, %0 : vector<6x32x128xf32>
    %35 = arith.extui %34 : vector<6x32x128xi1> to vector<6x32x128xi32>
    %36 = arith.sitofp %35 : vector<6x32x128xi32> to vector<6x32x128xf32>
    %cst_21 = arith.constant 3.200000e+01 : f32
    %37 = vector.broadcast %cst_21 : f32 to vector<6x32x128xf32>
    %38 = arith.mulf %36, %37 : vector<6x32x128xf32>
    %39 = arith.addf %32, %38 : vector<6x32x128xf32>
    %c0_22 = arith.constant 0 : index
    %c1_23 = arith.constant 1 : index
    %c0_24 = arith.constant 0 : index
    %40 = vector.load %arg1[%c0_22, %c1_23, %c0_24] : memref<6x34x130xf32, #tpu.memory_space<vmem>>, vector<6x32x128xf32>
    %41 = arith.cmpf oge, %40, %0 : vector<6x32x128xf32>
    %42 = arith.extui %41 : vector<6x32x128xi1> to vector<6x32x128xi32>
    %43 = arith.sitofp %42 : vector<6x32x128xi32> to vector<6x32x128xf32>
    %cst_25 = arith.constant 6.400000e+01 : f32
    %44 = vector.broadcast %cst_25 : f32 to vector<6x32x128xf32>
    %45 = arith.mulf %43, %44 : vector<6x32x128xf32>
    %46 = arith.addf %39, %45 : vector<6x32x128xf32>
    %c0_26 = arith.constant 0 : index
    %c0_27 = arith.constant 0 : index
    %c0_28 = arith.constant 0 : index
    %47 = vector.load %arg1[%c0_26, %c0_27, %c0_28] : memref<6x34x130xf32, #tpu.memory_space<vmem>>, vector<6x32x128xf32>
    %48 = arith.cmpf oge, %47, %0 : vector<6x32x128xf32>
    %49 = arith.extui %48 : vector<6x32x128xi1> to vector<6x32x128xi32>
    %50 = arith.sitofp %49 : vector<6x32x128xi32> to vector<6x32x128xf32>
    %cst_29 = arith.constant 1.280000e+02 : f32
    %51 = vector.broadcast %cst_29 : f32 to vector<6x32x128xf32>
    %52 = arith.mulf %50, %51 : vector<6x32x128xf32>
    %53 = arith.addf %46, %52 : vector<6x32x128xf32>
    %c0_30 = arith.constant 0 : index
    %c0_31 = arith.constant 0 : index
    %c0_32 = arith.constant 0 : index
    %54 = vector.load %arg2[%c0_30, %c0_31, %c0_32] : memref<6x32x128xf32, #tpu.memory_space<vmem>>, vector<6x32x128xf32>
    tpu.vector_store %arg2[%c0_30, %c0_31, %c0_32], %53 {strides = array<i32>} : memref<6x32x128xf32, #tpu.memory_space<vmem>>, vector<6x32x128xf32>,
    return
  }
  func.func @transform_0(%arg0: i32) -> (i32, i32, i32) {
    %c0_i32 = arith.constant 0 : i32
    %c0_i32_0 = arith.constant 0 : i32
    %c0_i32_1 = arith.constant 0 : i32
    %c0_i32_2 = arith.constant 0 : i32
    return %c0_i32, %c0_i32_0, %c0_i32_1 : i32, i32, i32
  }
  func.func @transform_1(%arg0: i32) -> (i32, i32, i32) {
    %c0_i32 = arith.constant 0 : i32
    %c0_i32_0 = arith.constant 0 : i32
    %c0_i32_1 = arith.constant 0 : i32
    %c0_i32_2 = arith.constant 0 : i32
    return %c0_i32, %c0_i32_0, %c0_i32_1 : i32, i32, i32
  }
}

</mosaic_0001>

<llo_original>
// kernel: tpu_custom_call.1
$region0: #{tpu_custom_call.1}
  #allocation0 [shape = 'u32[]', space=smem, size = 0x4, offset = 0x4, fixed_abs, tag = 'smem constant byte address 0x4 - core index']
  #allocation1 [shape = 'u32[144,128]{1,0:T(1,128)}', space=vmem, size = 0x12000, scoped, tag = 'internal scratch']
  %s0 = inlined_call_operand.hbm [shape: f32[6,34,130], index: 0, kind: input, shape index: {}]
  %s1 = inlined_call_operand.hbm [shape: f32[6,32,128], index: 1, kind: output, shape index: {}]
  %s2 = sld [smem:[#allocation0]]
  $region18: #{tpu_custom_call.1} parent=0
    _
  %s4 = ssub.s32 1, %s2
  %s5 = scalar_select 0, %s4, %s2
  $region1: #{tpu_custom_call.1} parent=0
    #allocation2 [shape = 'u8[245760]{0}', space=vmem, size = 0x3c000, scoped, tag = 'input window, operand 0, single buffered']
    #allocation3 [shape = 's32[1]{0}', space=sflag, size = 0x4, scoped, tag = 'scoped memory for tpu_custom_call.1']
    #allocation4 [shape = 's32[1]{0}', space=sflag, size = 0x4, scoped, tag = 'scoped memory for tpu_custom_call.1']
    #allocation5 [shape = 'u8[98304]{0}', space=vmem, size = 0x18000, scoped, tag = 'output window, operand 0, single buffered']
    %6 = vsyncpa [#allocation3], 0
    %7 = vsyncpa [#allocation4], 0
    // Predicated region
    $region2: #{tpu_custom_call.1} parent=1 // pred_check
      _
    $region3: #{tpu_custom_call.1} parent=1 // pred_check_branch
      %9 = sbr.rel (0) target = $region5
    $region4: #{tpu_custom_call.1} parent=1 // pred_region
      %s11 = ssub.s32 7680, 7680
      %12 = vsyncadd [#allocation3], %s11
      %s13 = sshll.u32 [#allocation2], 4
      %s14 = int_to_ptr.vmem [resolvable:$true] %s13
      %19 = dma.hbm_to_vmem [thread:$0]  %s0, 7680, %s14, [#allocation3], 256, 256, 16
    $region5: #{tpu_custom_call.1} parent=1 // pred_fallthru
      _
    // Predicated region
    $region6: #{tpu_custom_call.1} parent=1 // pred_check
      _
    $region7: #{tpu_custom_call.1} parent=1 // pred_check_branch
      %21 = sbr.rel (0) target = $region9
    $region8: #{tpu_custom_call.1} parent=1 // pred_region
      %22 = dma.done [#allocation3], 7680
    $region9: #{tpu_custom_call.1} parent=1 // pred_fallthru
      _
    %v23 = vld [vmem:[#allocation2] sm:$0xfe]
    %v24 = vld [vmem:[#allocation2 + $0x8] sm:$0xfe]
    %v25 = vld [vmem:[#allocation2 + $0x10] sm:$0xff]
    %v26 = vld [vmem:[#allocation2 + $0x18] sm:$0xff]
    %v27 = vld [vmem:[#allocation2 + $0x20] sm:$0xff]
    %v28 = vld [vmem:[#allocation2 + $0x28] sm:$0xff]
    %v29 = vld [vmem:[#allocation2 + $0x30] sm:$0xff]
    %v30 = vld [vmem:[#allocation2 + $0x38] sm:$0xff]
    %v31 = vld [vmem:[#allocation2 + $0x40] sm:$0x1]
    %v32 = vld [vmem:[#allocation2 + $0x48] sm:$0x1]
    %v33 = vld [vmem:[#allocation2 + $0x50] sm:$0xfe]
    %v34 = vld [vmem:[#allocation2 + $0x58] sm:$0xfe]
    %v35 = vld [vmem:[#allocation2 + $0x60] sm:$0xff]
    %v36 = vld [vmem:[#allocation2 + $0x68] sm:$0xff]
    %v37 = vld [vmem:[#allocation2 + $0x70] sm:$0xff]
    %v38 = vld [vmem:[#allocation2 + $0x78] sm:$0xff]
    %v39 = vld [vmem:[#allocation2 + $0x80] sm:$0xff]
    %v40 = vld [vmem:[#allocation2 + $0x88] sm:$0xff]
    %v41 = vld [vmem:[#allocation2 + $0x90] sm:$0x1]
    %v42 = vld [vmem:[#allocation2 + $0x98] sm:$0x1]
    %v43 = vld [vmem:[#allocation2 + $0xa0] sm:$0xfe]
    %v44 = vld [vmem:[#allocation2 + $0xa8] sm:$0xfe]
    %v45 = vld [vmem:[#allocation2 + $0xb0] sm:$0xff]
    %v46 = vld [vmem:[#allocation2 + $0xb8] sm:$0xff]
    %v47 = vld [vmem:[#allocation2 + $0xc0] sm:$0xff]
    %v48 = vld [vmem:[#allocation2 + $0xc8] sm:$0xff]
    %v49 = vld [vmem:[#allocation2 + $0xd0] sm:$0xff]
    %v50 = vld [vmem:[#allocation2 + $0xd8] sm:$0xff]
    %v51 = vld [vmem:[#allocation2 + $0xe0] sm:$0x1]
    %v52 = vld [vmem:[#allocation2 + $0xe8] sm:$0x1]
    %v53 = vld [vmem:[#allocation2 + $0xf0] sm:$0xfe]
    %v54 = vld [vmem:[#allocation2 + $0xf8] sm:$0xfe]
    %v55 = vld [vmem:[#allocation2 + $0x100] sm:$0xff]
    %v56 = vld [vmem:[#allocation2 + $0x108] sm:$0xff]
    %v57 = vld [vmem:[#allocation2 + $0x110] sm:$0xff]
    %v58 = vld [vmem:[#allocation2 + $0x118] sm:$0xff]
    %v59 = vld [vmem:[#allocation2 + $0x120] sm:$0xff]
    %v60 = vld [vmem:[#allocation2 + $0x128] sm:$0xff]
    %v61 = vld [vmem:[#allocation2 + $0x130] sm:$0x1]
    %v62 = vld [vmem:[#allocation2 + $0x138] sm:$0x1]
    %v63 = vld [vmem:[#allocation2 + $0x140] sm:$0xfe]
    %v64 = vld [vmem:[#allocation2 + $0x148] sm:$0xfe]
    %v65 = vld [vmem:[#allocation2 + $0x150] sm:$0xff]
    %v66 = vld [vmem:[#allocation2 + $0x158] sm:$0xff]
    %v67 = vld [vmem:[#allocation2 + $0x160] sm:$0xff]
    %v68 = vld [vmem:[#allocation2 + $0x168] sm:$0xff]
    %v69 = vld [vmem:[#allocation2 + $0x170] sm:$0xff]
    %v70 = vld [vmem:[#allocation2 + $0x178] sm:$0xff]
    %v71 = vld [vmem:[#allocation2 + $0x180] sm:$0x1]
    %v72 = vld [vmem:[#allocation2 + $0x188] sm:$0x1]
    %v73 = vld [vmem:[#allocation2 + $0x190] sm:$0xfe]
    %v74 = vld [vmem:[#allocation2 + $0x198] sm:$0xfe]
    %v75 = vld [vmem:[#allocation2 + $0x1a0] sm:$0xff]
    %v76 = vld [vmem:[#allocation2 + $0x1a8] sm:$0xff]
    %v77 = vld [vmem:[#allocation2 + $0x1b0] sm:$0xff]
    %v78 = vld [vmem:[#allocation2 + $0x1b8] sm:$0xff]
    %v79 = vld [vmem:[#allocation2 + $0x1c0] sm:$0xff]
    %v80 = vld [vmem:[#allocation2 + $0x1c8] sm:$0xff]
    %v81 = vld [vmem:[#allocation2 + $0x1d0] sm:$0x1]
    %v82 = vld [vmem:[#allocation2 + $0x1d8] sm:$0x1]
    %v83 = vld [vmem:[#allocation2] sm:$0xff]
    %v84 = vld [vmem:[#allocation2 + $0x8] sm:$0xff]
    %v85 = vld [vmem:[#allocation2 + $0x50] sm:$0xff]
    %v86 = vld [vmem:[#allocation2 + $0x58] sm:$0xff]
    %v87 = vld [vmem:[#allocation2 + $0xa0] sm:$0xff]
    %v88 = vld [vmem:[#allocation2 + $0xa8] sm:$0xff]
    %v89 = vld [vmem:[#allocation2 + $0xf0] sm:$0xff]
    %v90 = vld [vmem:[#allocation2 + $0xf8] sm:$0xff]
    %v91 = vld [vmem:[#allocation2 + $0x140] sm:$0xff]
    %v92 = vld [vmem:[#allocation2 + $0x148] sm:$0xff]
    %v93 = vld [vmem:[#allocation2 + $0x190] sm:$0xff]
    %v94 = vld [vmem:[#allocation2 + $0x198] sm:$0xff]
    %vm155 = vcmask 1046528
    %v156 = vrot.slane %v23, 1
    %v157 = vrot.slane %v25, 1
    %v158 = vsel %vm155, %v156, %v157
    %v159 = vrot.slane %v24, 1
    %v160 = vrot.slane %v26, 1
    %v161 = vsel %vm155, %v159, %v160
    %v162 = vrot.slane %v27, 1
    %v163 = vsel %vm155, %v157, %v162
    %v164 = vrot.slane %v28, 1
    %v165 = vsel %vm155, %v160, %v164
    %v166 = vrot.slane %v29, 1
    %v167 = vsel %vm155, %v162, %v166
    %v168 = vrot.slane %v30, 1
    %v169 = vsel %vm155, %v164, %v168
    %v170 = vrot.slane %v31, 1
    %v171 = vsel %vm155, %v166, %v170
    %v172 = vrot.slane %v32, 1
    %v173 = vsel %vm155, %v168, %v172
    %v174 = vrot.slane %v33, 1
    %v175 = vrot.slane %v35, 1
    %v176 = vsel %vm155, %v174, %v175
    %v177 = vrot.slane %v34, 1
    %v178 = vrot.slane %v36, 1
    %v179 = vsel %vm155, %v177, %v178
    %v180 = vrot.slane %v37, 1
    %v181 = vsel %vm155, %v175, %v180
    %v182 = vrot.slane %v38, 1
    %v183 = vsel %vm155, %v178, %v182
    %v184 = vrot.slane %v39, 1
    %v185 = vsel %vm155, %v180, %v184
    %v186 = vrot.slane %v40, 1
    %v187 = vsel %vm155, %v182, %v186
    %v188 = vrot.slane %v41, 1
    %v189 = vsel %vm155, %v184, %v188
    %v190 = vrot.slane %v42, 1
    %v191 = vsel %vm155, %v186, %v190
    %v192 = vrot.slane %v43, 1
    %v193 = vrot.slane %v45, 1
    %v194 = vsel %vm155, %v192, %v193
    %v195 = vrot.slane %v44, 1
    %v196 = vrot.slane %v46, 1
    %v197 = vsel %vm155, %v195, %v196
    %v198 = vrot.slane %v47, 1
    %v199 = vsel %vm155, %v193, %v198
    %v200 = vrot.slane %v48, 1
    %v201 = vsel %vm155, %v196, %v200
    %v202 = vrot.slane %v49, 1
    %v203 = vsel %vm155, %v198, %v202
    %v204 = vrot.slane %v50, 1
    %v205 = vsel %vm155, %v200, %v204
    %v206 = vrot.slane %v51, 1
    %v207 = vsel %vm155, %v202, %v206
    %v208 = vrot.slane %v52, 1
    %v209 = vsel %vm155, %v204, %v208
    %v210 = vrot.slane %v53, 1
    %v211 = vrot.slane %v55, 1
    %v212 = vsel %vm155, %v210, %v211
    %v213 = vrot.slane %v54, 1
    %v214 = vrot.slane %v56, 1
    %v215 = vsel %vm155, %v213, %v214
    %v216 = vrot.slane %v57, 1
    %v217 = vsel %vm155, %v211, %v216
    %v218 = vrot.slane %v58, 1
    %v219 = vsel %vm155, %v214, %v218
    %v220 = vrot.slane %v59, 1
    %v221 = vsel %vm155, %v216, %v220
    %v222 = vrot.slane %v60, 1
    %v223 = vsel %vm155, %v218, %v222
    %v224 = vrot.slane %v61, 1
    %v225 = vsel %vm155, %v220, %v224
    %v226 = vrot.slane %v62, 1
    %v227 = vsel %vm155, %v222, %v226
    %v228 = vrot.slane %v63, 1
    %v229 = vrot.slane %v65, 1
    %v230 = vsel %vm155, %v228, %v229
    %v231 = vrot.slane %v64, 1
    %v232 = vrot.slane %v66, 1
    %v233 = vsel %vm155, %v231, %v232
    %v234 = vrot.slane %v67, 1
    %v235 = vsel %vm155, %v229, %v234
    %v236 = vrot.slane %v68, 1
    %v237 = vsel %vm155, %v232, %v236
    %v238 = vrot.slane %v69, 1
    %v239 = vsel %vm155, %v234, %v238
    %v240 = vrot.slane %v70, 1
    %v241 = vsel %vm155, %v236, %v240
    %v242 = vrot.slane %v71, 1
    %v243 = vsel %vm155, %v238, %v242
    %v244 = vrot.slane %v72, 1
    %v245 = vsel %vm155, %v240, %v244
    %v246 = vrot.slane %v73, 1
    %v247 = vrot.slane %v75, 1
    %v248 = vsel %vm155, %v246, %v247
    %v249 = vrot.slane %v74, 1
    %v250 = vrot.slane %v76, 1
    %v251 = vsel %vm155, %v249, %v250
    %v252 = vrot.slane %v77, 1
    %v253 = vsel %vm155, %v247, %v252
    %v254 = vrot.slane %v78, 1
    %v255 = vsel %vm155, %v250, %v254
    %v256 = vrot.slane %v79, 1
    %v257 = vsel %vm155, %v252, %v256
    %v258 = vrot.slane %v80, 1
    %v259 = vsel %vm155, %v254, %v258
    %v260 = vrot.slane %v81, 1
    %v261 = vsel %vm155, %v256, %v260
    %v262 = vrot.slane %v82, 1
    %v263 = vsel %vm155, %v258, %v262
    %vm312 = vcmp.ge.f32.partialorder %v83, %v158
    %vm313 = vcmp.ge.f32.partialorder %v84, %v161
    %vm314 = vcmp.ge.f32.partialorder %v25, %v163
    %vm315 = vcmp.ge.f32.partialorder %v26, %v165
    %vm316 = vcmp.ge.f32.partialorder %v27, %v167
    %vm317 = vcmp.ge.f32.partialorder %v28, %v169
    %vm318 = vcmp.ge.f32.partialorder %v29, %v171
    %vm319 = vcmp.ge.f32.partialorder %v30, %v173
    %vm320 = vcmp.ge.f32.partialorder %v85, %v176
    %vm321 = vcmp.ge.f32.partialorder %v86, %v179
    %vm322 = vcmp.ge.f32.partialorder %v35, %v181
    %vm323 = vcmp.ge.f32.partialorder %v36, %v183
    %vm324 = vcmp.ge.f32.partialorder %v37, %v185
    %vm325 = vcmp.ge.f32.partialorder %v38, %v187
    %vm326 = vcmp.ge.f32.partialorder %v39, %v189
    %vm327 = vcmp.ge.f32.partialorder %v40, %v191
    %vm328 = vcmp.ge.f32.partialorder %v87, %v194
    %vm329 = vcmp.ge.f32.partialorder %v88, %v197
    %vm330 = vcmp.ge.f32.partialorder %v45, %v199
    %vm331 = vcmp.ge.f32.partialorder %v46, %v201
    %vm332 = vcmp.ge.f32.partialorder %v47, %v203
    %vm333 = vcmp.ge.f32.partialorder %v48, %v205
    %vm334 = vcmp.ge.f32.partialorder %v49, %v207
    %vm335 = vcmp.ge.f32.partialorder %v50, %v209
    %vm336 = vcmp.ge.f32.partialorder %v89, %v212
    %vm337 = vcmp.ge.f32.partialorder %v90, %v215
    %vm338 = vcmp.ge.f32.partialorder %v55, %v217
    %vm339 = vcmp.ge.f32.partialorder %v56, %v219
    %vm340 = vcmp.ge.f32.partialorder %v57, %v221
    %vm341 = vcmp.ge.f32.partialorder %v58, %v223
    %vm342 = vcmp.ge.f32.partialorder %v59, %v225
    %vm343 = vcmp.ge.f32.partialorder %v60, %v227
    %vm344 = vcmp.ge.f32.partialorder %v91, %v230
    %vm345 = vcmp.ge.f32.partialorder %v92, %v233
    %vm346 = vcmp.ge.f32.partialorder %v65, %v235
    %vm347 = vcmp.ge.f32.partialorder %v66, %v237
    %vm348 = vcmp.ge.f32.partialorder %v67, %v239
    %vm349 = vcmp.ge.f32.partialorder %v68, %v241
    %vm350 = vcmp.ge.f32.partialorder %v69, %v243
    %vm351 = vcmp.ge.f32.partialorder %v70, %v245
    %vm352 = vcmp.ge.f32.partialorder %v93, %v248
    %vm353 = vcmp.ge.f32.partialorder %v94, %v251
    %vm354 = vcmp.ge.f32.partialorder %v75, %v253
    %vm355 = vcmp.ge.f32.partialorder %v76, %v255
    %vm356 = vcmp.ge.f32.partialorder %v77, %v257
    %vm357 = vcmp.ge.f32.partialorder %v78, %v259
    %vm358 = vcmp.ge.f32.partialorder %v79, %v261
    %vm359 = vcmp.ge.f32.partialorder %v80, %v263
    %v360 = vsel %vm312, 1, 0
    %v361 = vsel %vm313, 1, 0
    %v362 = vsel %vm314, 1, 0
    %v363 = vsel %vm315, 1, 0
    %v364 = vsel %vm316, 1, 0
    %v365 = vsel %vm317, 1, 0
    %v366 = vsel %vm318, 1, 0
    %v367 = vsel %vm319, 1, 0
    %v368 = vsel %vm320, 1, 0
    %v369 = vsel %vm321, 1, 0
    %v370 = vsel %vm322, 1, 0
    %v371 = vsel %vm323, 1, 0
    %v372 = vsel %vm324, 1, 0
    %v373 = vsel %vm325, 1, 0
    %v374 = vsel %vm326, 1, 0
    %v375 = vsel %vm327, 1, 0
    %v376 = vsel %vm328, 1, 0
    %v377 = vsel %vm329, 1, 0
    %v378 = vsel %vm330, 1, 0
    %v379 = vsel %vm331, 1, 0
    %v380 = vsel %vm332, 1, 0
    %v381 = vsel %vm333, 1, 0
    %v382 = vsel %vm334, 1, 0
    %v383 = vsel %vm335, 1, 0
    %v384 = vsel %vm336, 1, 0
    %v385 = vsel %vm337, 1, 0
    %v386 = vsel %vm338, 1, 0
    %v387 = vsel %vm339, 1, 0
    %v388 = vsel %vm340, 1, 0
    %v389 = vsel %vm341, 1, 0
    %v390 = vsel %vm342, 1, 0
    %v391 = vsel %vm343, 1, 0
    %v392 = vsel %vm344, 1, 0
    %v393 = vsel %vm345, 1, 0
    %v394 = vsel %vm346, 1, 0
    %v395 = vsel %vm347, 1, 0
    %v396 = vsel %vm348, 1, 0
    %v397 = vsel %vm349, 1, 0
    %v398 = vsel %vm350, 1, 0
    %v399 = vsel %vm351, 1, 0
    %v400 = vsel %vm352, 1, 0
    %v401 = vsel %vm353, 1, 0
    %v402 = vsel %vm354, 1, 0
    %v403 = vsel %vm355, 1, 0
    %v404 = vsel %vm356, 1, 0
    %v405 = vsel %vm357, 1, 0
    %v406 = vsel %vm358, 1, 0
    %v407 = vsel %vm359, 1, 0
    %v408 = vcvt.s32.f32 %v360
    %v409 = vcvt.s32.f32 %v361
    %v410 = vcvt.s32.f32 %v362
    %v411 = vcvt.s32.f32 %v363
    %v412 = vcvt.s32.f32 %v364
    %v413 = vcvt.s32.f32 %v365
    %v414 = vcvt.s32.f32 %v366
    %v415 = vcvt.s32.f32 %v367
    %v416 = vcvt.s32.f32 %v368
    %v417 = vcvt.s32.f32 %v369
    %v418 = vcvt.s32.f32 %v370
    %v419 = vcvt.s32.f32 %v371
    %v420 = vcvt.s32.f32 %v372
    %v421 = vcvt.s32.f32 %v373
    %v422 = vcvt.s32.f32 %v374
    %v423 = vcvt.s32.f32 %v375
    %v424 = vcvt.s32.f32 %v376
    %v425 = vcvt.s32.f32 %v377
    %v426 = vcvt.s32.f32 %v378
    %v427 = vcvt.s32.f32 %v379
    %v428 = vcvt.s32.f32 %v380
    %v429 = vcvt.s32.f32 %v381
    %v430 = vcvt.s32.f32 %v382
    %v431 = vcvt.s32.f32 %v383
    %v432 = vcvt.s32.f32 %v384
    %v433 = vcvt.s32.f32 %v385
    %v434 = vcvt.s32.f32 %v386
    %v435 = vcvt.s32.f32 %v387
    %v436 = vcvt.s32.f32 %v388
    %v437 = vcvt.s32.f32 %v389
    %v438 = vcvt.s32.f32 %v390
    %v439 = vcvt.s32.f32 %v391
    %v440 = vcvt.s32.f32 %v392
    %v441 = vcvt.s32.f32 %v393
    %v442 = vcvt.s32.f32 %v394
    %v443 = vcvt.s32.f32 %v395
    %v444 = vcvt.s32.f32 %v396
    %v445 = vcvt.s32.f32 %v397
    %v446 = vcvt.s32.f32 %v398
    %v447 = vcvt.s32.f32 %v399
    %v448 = vcvt.s32.f32 %v400
    %v449 = vcvt.s32.f32 %v401
    %v450 = vcvt.s32.f32 %v402
    %v451 = vcvt.s32.f32 %v403
    %v452 = vcvt.s32.f32 %v404
    %v453 = vcvt.s32.f32 %v405
    %v454 = vcvt.s32.f32 %v406
    %v455 = vcvt.s32.f32 %v407
    %456 = vrot.lane.b32.xlu0 %v158, 1
    %v457 = vpop.permute.xlu0 %456
    %458 = vrot.lane.b32.xlu0 %v161, 1
    %v459 = vpop.permute.xlu0 %458
    %460 = vrot.lane.b32.xlu0 %v163, 1
    %v461 = vpop.permute.xlu0 %460
    %462 = vrot.lane.b32.xlu0 %v165, 1
    %v463 = vpop.permute.xlu0 %462
    %464 = vrot.lane.b32.xlu0 %v167, 1
    %v465 = vpop.permute.xlu0 %464
    %466 = vrot.lane.b32.xlu0 %v169, 1
    %v467 = vpop.permute.xlu0 %466
    %468 = vrot.lane.b32.xlu0 %v171, 1
    %v469 = vpop.permute.xlu0 %468
    %470 = vrot.lane.b32.xlu0 %v173, 1
    %v471 = vpop.permute.xlu0 %470
    %472 = vrot.lane.b32.xlu0 %v176, 1
    %v473 = vpop.permute.xlu0 %472
    %474 = vrot.lane.b32.xlu0 %v179, 1
    %v475 = vpop.permute.xlu0 %474
    %476 = vrot.lane.b32.xlu0 %v181, 1
    %v477 = vpop.permute.xlu0 %476
    %478 = vrot.lane.b32.xlu0 %v183, 1
    %v479 = vpop.permute.xlu0 %478
    %480 = vrot.lane.b32.xlu0 %v185, 1
    %v481 = vpop.permute.xlu0 %480
    %482 = vrot.lane.b32.xlu0 %v187, 1
    %v483 = vpop.permute.xlu0 %482
    %484 = vrot.lane.b32.xlu0 %v189, 1
    %v485 = vpop.permute.xlu0 %484
    %486 = vrot.lane.b32.xlu0 %v191, 1
    %v487 = vpop.permute.xlu0 %486
    %488 = vrot.lane.b32.xlu0 %v194, 1
    %v489 = vpop.permute.xlu0 %488
    %490 = vrot.lane.b32.xlu0 %v197, 1
    %v491 = vpop.permute.xlu0 %490
    %492 = vrot.lane.b32.xlu0 %v199, 1
    %v493 = vpop.permute.xlu0 %492
    %494 = vrot.lane.b32.xlu0 %v201, 1
    %v495 = vpop.permute.xlu0 %494
    %496 = vrot.lane.b32.xlu0 %v203, 1
    %v497 = vpop.permute.xlu0 %496
    %498 = vrot.lane.b32.xlu0 %v205, 1
    %v499 = vpop.permute.xlu0 %498
    %500 = vrot.lane.b32.xlu0 %v207, 1
    %v501 = vpop.permute.xlu0 %500
    %502 = vrot.lane.b32.xlu0 %v209, 1
    %v503 = vpop.permute.xlu0 %502
    %504 = vrot.lane.b32.xlu0 %v212, 1
    %v505 = vpop.permute.xlu0 %504
    %506 = vrot.lane.b32.xlu0 %v215, 1
    %v507 = vpop.permute.xlu0 %506
    %508 = vrot.lane.b32.xlu0 %v217, 1
    %v509 = vpop.permute.xlu0 %508
    %510 = vrot.lane.b32.xlu0 %v219, 1
    %v511 = vpop.permute.xlu0 %510
    %512 = vrot.lane.b32.xlu0 %v221, 1
    %v513 = vpop.permute.xlu0 %512
    %514 = vrot.lane.b32.xlu0 %v223, 1
    %v515 = vpop.permute.xlu0 %514
    %516 = vrot.lane.b32.xlu0 %v225, 1
    %v517 = vpop.permute.xlu0 %516
    %518 = vrot.lane.b32.xlu0 %v227, 1
    %v519 = vpop.permute.xlu0 %518
    %520 = vrot.lane.b32.xlu0 %v230, 1
    %v521 = vpop.permute.xlu0 %520
    %522 = vrot.lane.b32.xlu0 %v233, 1
    %v523 = vpop.permute.xlu0 %522
    %524 = vrot.lane.b32.xlu0 %v235, 1
    %v525 = vpop.permute.xlu0 %524
    %526 = vrot.lane.b32.xlu0 %v237, 1
    %v527 = vpop.permute.xlu0 %526
    %528 = vrot.lane.b32.xlu0 %v239, 1
    %v529 = vpop.permute.xlu0 %528
    %530 = vrot.lane.b32.xlu0 %v241, 1
    %v531 = vpop.permute.xlu0 %530
    %532 = vrot.lane.b32.xlu0 %v243, 1
    %v533 = vpop.permute.xlu0 %532
    %534 = vrot.lane.b32.xlu0 %v245, 1
    %v535 = vpop.permute.xlu0 %534
    %536 = vrot.lane.b32.xlu0 %v248, 1
    %v537 = vpop.permute.xlu0 %536
    %538 = vrot.lane.b32.xlu0 %v251, 1
    %v539 = vpop.permute.xlu0 %538
    %540 = vrot.lane.b32.xlu0 %v253, 1
    %v541 = vpop.permute.xlu0 %540
    %542 = vrot.lane.b32.xlu0 %v255, 1
    %v543 = vpop.permute.xlu0 %542
    %544 = vrot.lane.b32.xlu0 %v257, 1
    %v545 = vpop.permute.xlu0 %544
    %546 = vrot.lane.b32.xlu0 %v259, 1
    %v547 = vpop.permute.xlu0 %546
    %548 = vrot.lane.b32.xlu0 %v261, 1
    %v549 = vpop.permute.xlu0 %548
    %550 = vrot.lane.b32.xlu0 %v263, 1
    %v551 = vpop.permute.xlu0 %550
    %vm552 = vcmask 7168
    %v553 = vsel %vm552, %v457, %v459
    %v554 = vsel %vm552, %v461, %v463
    %v555 = vsel %vm552, %v465, %v467
    %v556 = vsel %vm552, %v469, %v471
    %v557 = vsel %vm552, %v473, %v475
    %v558 = vsel %vm552, %v477, %v479
    %v559 = vsel %vm552, %v481, %v483
    %v560 = vsel %vm552, %v485, %v487
    %v561 = vsel %vm552, %v489, %v491
    %v562 = vsel %vm552, %v493, %v495
    %v563 = vsel %vm552, %v497, %v499
    %v564 = vsel %vm552, %v501, %v503
    %v565 = vsel %vm552, %v505, %v507
    %v566 = vsel %vm552, %v509, %v511
    %v567 = vsel %vm552, %v513, %v515
    %v568 = vsel %vm552, %v517, %v519
    %v569 = vsel %vm552, %v521, %v523
    %v570 = vsel %vm552, %v525, %v527
    %v571 = vsel %vm552, %v529, %v531
    %v572 = vsel %vm552, %v533, %v535
    %v573 = vsel %vm552, %v537, %v539
    %v574 = vsel %vm552, %v541, %v543
    %v575 = vsel %vm552, %v545, %v547
    %v576 = vsel %vm552, %v549, %v551
    %vm625 = vcmp.ge.f32.partialorder %v83, %v457
    %vm626 = vcmp.ge.f32.partialorder %v84, %v553
    %vm627 = vcmp.ge.f32.partialorder %v25, %v461
    %vm628 = vcmp.ge.f32.partialorder %v26, %v554
    %vm629 = vcmp.ge.f32.partialorder %v27, %v465
    %vm630 = vcmp.ge.f32.partialorder %v28, %v555
    %vm631 = vcmp.ge.f32.partialorder %v29, %v469
    %vm632 = vcmp.ge.f32.partialorder %v30, %v556
    %vm633 = vcmp.ge.f32.partialorder %v85, %v473
    %vm634 = vcmp.ge.f32.partialorder %v86, %v557
    %vm635 = vcmp.ge.f32.partialorder %v35, %v477
    %vm636 = vcmp.ge.f32.partialorder %v36, %v558
    %vm637 = vcmp.ge.f32.partialorder %v37, %v481
    %vm638 = vcmp.ge.f32.partialorder %v38, %v559
    %vm639 = vcmp.ge.f32.partialorder %v39, %v485
    %vm640 = vcmp.ge.f32.partialorder %v40, %v560
    %vm641 = vcmp.ge.f32.partialorder %v87, %v489
    %vm642 = vcmp.ge.f32.partialorder %v88, %v561
    %vm643 = vcmp.ge.f32.partialorder %v45, %v493
    %vm644 = vcmp.ge.f32.partialorder %v46, %v562
    %vm645 = vcmp.ge.f32.partialorder %v47, %v497
    %vm646 = vcmp.ge.f32.partialorder %v48, %v563
    %vm647 = vcmp.ge.f32.partialorder %v49, %v501
    %vm648 = vcmp.ge.f32.partialorder %v50, %v564
    %vm649 = vcmp.ge.f32.partialorder %v89, %v505
    %vm650 = vcmp.ge.f32.partialorder %v90, %v565
    %vm651 = vcmp.ge.f32.partialorder %v55, %v509
    %vm652 = vcmp.ge.f32.partialorder %v56, %v566
    %vm653 = vcmp.ge.f32.partialorder %v57, %v513
    %vm654 = vcmp.ge.f32.partialorder %v58, %v567
    %vm655 = vcmp.ge.f32.partialorder %v59, %v517
    %vm656 = vcmp.ge.f32.partialorder %v60, %v568
    %vm657 = vcmp.ge.f32.partialorder %v91, %v521
    %vm658 = vcmp.ge.f32.partialorder %v92, %v569
    %vm659 = vcmp.ge.f32.partialorder %v65, %v525
    %vm660 = vcmp.ge.f32.partialorder %v66, %v570
    %vm661 = vcmp.ge.f32.partialorder %v67, %v529
    %vm662 = vcmp.ge.f32.partialorder %v68, %v571
    %vm663 = vcmp.ge.f32.partialorder %v69, %v533
    %vm664 = vcmp.ge.f32.partialorder %v70, %v572
    %vm665 = vcmp.ge.f32.partialorder %v93, %v537
    %vm666 = vcmp.ge.f32.partialorder %v94, %v573
    %vm667 = vcmp.ge.f32.partialorder %v75, %v541
    %vm668 = vcmp.ge.f32.partialorder %v76, %v574
    %vm669 = vcmp.ge.f32.partialorder %v77, %v545
    %vm670 = vcmp.ge.f32.partialorder %v78, %v575
    %vm671 = vcmp.ge.f32.partialorder %v79, %v549
    %vm672 = vcmp.ge.f32.partialorder %v80, %v576
    %v673 = vsel %vm625, 1, 0
    %v674 = vsel %vm626, 1, 0
    %v675 = vsel %vm627, 1, 0
    %v676 = vsel %vm628, 1, 0
    %v677 = vsel %vm629, 1, 0
    %v678 = vsel %vm630, 1, 0
    %v679 = vsel %vm631, 1, 0
    %v680 = vsel %vm632, 1, 0
    %v681 = vsel %vm633, 1, 0
    %v682 = vsel %vm634, 1, 0
    %v683 = vsel %vm635, 1, 0
    %v684 = vsel %vm636, 1, 0
    %v685 = vsel %vm637, 1, 0
    %v686 = vsel %vm638, 1, 0
    %v687 = vsel %vm639, 1, 0
    %v688 = vsel %vm640, 1, 0
    %v689 = vsel %vm641, 1, 0
    %v690 = vsel %vm642, 1, 0
    %v691 = vsel %vm643, 1, 0
    %v692 = vsel %vm644, 1, 0
    %v693 = vsel %vm645, 1, 0
    %v694 = vsel %vm646, 1, 0
    %v695 = vsel %vm647, 1, 0
    %v696 = vsel %vm648, 1, 0
    %v697 = vsel %vm649, 1, 0
    %v698 = vsel %vm650, 1, 0
    %v699 = vsel %vm651, 1, 0
    %v700 = vsel %vm652, 1, 0
    %v701 = vsel %vm653, 1, 0
    %v702 = vsel %vm654, 1, 0
    %v703 = vsel %vm655, 1, 0
    %v704 = vsel %vm656, 1, 0
    %v705 = vsel %vm657, 1, 0
    %v706 = vsel %vm658, 1, 0
    %v707 = vsel %vm659, 1, 0
    %v708 = vsel %vm660, 1, 0
    %v709 = vsel %vm661, 1, 0
    %v710 = vsel %vm662, 1, 0
    %v711 = vsel %vm663, 1, 0
    %v712 = vsel %vm664, 1, 0
    %v713 = vsel %vm665, 1, 0
    %v714 = vsel %vm666, 1, 0
    %v715 = vsel %vm667, 1, 0
    %v716 = vsel %vm668, 1, 0
    %v717 = vsel %vm669, 1, 0
    %v718 = vsel %vm670, 1, 0
    %v719 = vsel %vm671, 1, 0
    %v720 = vsel %vm672, 1, 0
    %v721 = vcvt.s32.f32 %v673
    %v722 = vcvt.s32.f32 %v674
    %v723 = vcvt.s32.f32 %v675
    %v724 = vcvt.s32.f32 %v676
    %v725 = vcvt.s32.f32 %v677
    %v726 = vcvt.s32.f32 %v678
    %v727 = vcvt.s32.f32 %v679
    %v728 = vcvt.s32.f32 %v680
    %v729 = vcvt.s32.f32 %v681
    %v730 = vcvt.s32.f32 %v682
    %v731 = vcvt.s32.f32 %v683
    %v732 = vcvt.s32.f32 %v684
    %v733 = vcvt.s32.f32 %v685
    %v734 = vcvt.s32.f32 %v686
    %v735 = vcvt.s32.f32 %v687
    %v736 = vcvt.s32.f32 %v688
    %v737 = vcvt.s32.f32 %v689
    %v738 = vcvt.s32.f32 %v690
    %v739 = vcvt.s32.f32 %v691
    %v740 = vcvt.s32.f32 %v692
    %v741 = vcvt.s32.f32 %v693
    %v742 = vcvt.s32.f32 %v694
    %v743 = vcvt.s32.f32 %v695
    %v744 = vcvt.s32.f32 %v696
    %v745 = vcvt.s32.f32 %v697
    %v746 = vcvt.s32.f32 %v698
    %v747 = vcvt.s32.f32 %v699
    %v748 = vcvt.s32.f32 %v700
    %v749 = vcvt.s32.f32 %v701
    %v750 = vcvt.s32.f32 %v702
    %v751 = vcvt.s32.f32 %v703
    %v752 = vcvt.s32.f32 %v704
    %v753 = vcvt.s32.f32 %v705
    %v754 = vcvt.s32.f32 %v706
    %v755 = vcvt.s32.f32 %v707
    %v756 = vcvt.s32.f32 %v708
    %v757 = vcvt.s32.f32 %v709
    %v758 = vcvt.s32.f32 %v710
    %v759 = vcvt.s32.f32 %v711
    %v760 = vcvt.s32.f32 %v712
    %v761 = vcvt.s32.f32 %v713
    %v762 = vcvt.s32.f32 %v714
    %v763 = vcvt.s32.f32 %v715
    %v764 = vcvt.s32.f32 %v716
    %v765 = vcvt.s32.f32 %v717
    %v766 = vcvt.s32.f32 %v718
    %v767 = vcvt.s32.f32 %v719
    %v768 = vcvt.s32.f32 %v720
    %v769 = vmul.f32 %v721, 2.0
    %v770 = vmul.f32 %v722, 2.0
    %v771 = vmul.f32 %v723, 2.0
    %v772 = vmul.f32 %v724, 2.0
    %v773 = vmul.f32 %v725, 2.0
    %v774 = vmul.f32 %v726, 2.0
    %v775 = vmul.f32 %v727, 2.0
    %v776 = vmul.f32 %v728, 2.0
    %v777 = vmul.f32 %v729, 2.0
    %v778 = vmul.f32 %v730, 2.0
    %v779 = vmul.f32 %v731, 2.0
    %v780 = vmul.f32 %v732, 2.0
    %v781 = vmul.f32 %v733, 2.0
    %v782 = vmul.f32 %v734, 2.0
    %v783 = vmul.f32 %v735, 2.0
    %v784 = vmul.f32 %v736, 2.0
    %v785 = vmul.f32 %v737, 2.0
    %v786 = vmul.f32 %v738, 2.0
    %v787 = vmul.f32 %v739, 2.0
    %v788 = vmul.f32 %v740, 2.0
    %v789 = vmul.f32 %v741, 2.0
    %v790 = vmul.f32 %v742, 2.0
    %v791 = vmul.f32 %v743, 2.0
    %v792 = vmul.f32 %v744, 2.0
    %v793 = vmul.f32 %v745, 2.0
    %v794 = vmul.f32 %v746, 2.0
    %v795 = vmul.f32 %v747, 2.0
    %v796 = vmul.f32 %v748, 2.0
    %v797 = vmul.f32 %v749, 2.0
    %v798 = vmul.f32 %v750, 2.0
    %v799 = vmul.f32 %v751, 2.0
    %v800 = vmul.f32 %v752, 2.0
    %v801 = vmul.f32 %v753, 2.0
    %v802 = vmul.f32 %v754, 2.0
    %v803 = vmul.f32 %v755, 2.0
    %v804 = vmul.f32 %v756, 2.0
    %v805 = vmul.f32 %v757, 2.0
    %v806 = vmul.f32 %v758, 2.0
    %v807 = vmul.f32 %v759, 2.0
    %v808 = vmul.f32 %v760, 2.0
    %v809 = vmul.f32 %v761, 2.0
    %v810 = vmul.f32 %v762, 2.0
    %v811 = vmul.f32 %v763, 2.0
    %v812 = vmul.f32 %v764, 2.0
    %v813 = vmul.f32 %v765, 2.0
    %v814 = vmul.f32 %v766, 2.0
    %v815 = vmul.f32 %v767, 2.0
    %v816 = vmul.f32 %v768, 2.0
    %865 = vrot.lane.b32.xlu0 %v769, 127
    %v866 = vpop.permute.xlu0 %865
    %867 = vrot.lane.b32.xlu0 %v770, 127
    %v868 = vpop.permute.xlu0 %867
    %869 = vrot.lane.b32.xlu0 %v771, 127
    %v870 = vpop.permute.xlu0 %869
    %871 = vrot.lane.b32.xlu0 %v772, 127
    %v872 = vpop.permute.xlu0 %871
    %873 = vrot.lane.b32.xlu0 %v773, 127
    %v874 = vpop.permute.xlu0 %873
    %875 = vrot.lane.b32.xlu0 %v774, 127
    %v876 = vpop.permute.xlu0 %875
    %877 = vrot.lane.b32.xlu0 %v775, 127
    %v878 = vpop.permute.xlu0 %877
    %879 = vrot.lane.b32.xlu0 %v776, 127
    %v880 = vpop.permute.xlu0 %879
    %881 = vrot.lane.b32.xlu0 %v777, 127
    %v882 = vpop.permute.xlu0 %881
    %883 = vrot.lane.b32.xlu0 %v778, 127
    %v884 = vpop.permute.xlu0 %883
    %885 = vrot.lane.b32.xlu0 %v779, 127
    %v886 = vpop.permute.xlu0 %885
    %887 = vrot.lane.b32.xlu0 %v780, 127
    %v888 = vpop.permute.xlu0 %887
    %889 = vrot.lane.b32.xlu0 %v781, 127
    %v890 = vpop.permute.xlu0 %889
    %891 = vrot.lane.b32.xlu0 %v782, 127
    %v892 = vpop.permute.xlu0 %891
    %893 = vrot.lane.b32.xlu0 %v783, 127
    %v894 = vpop.permute.xlu0 %893
    %895 = vrot.lane.b32.xlu0 %v784, 127
    %v896 = vpop.permute.xlu0 %895
    %897 = vrot.lane.b32.xlu0 %v785, 127
    %v898 = vpop.permute.xlu0 %897
    %899 = vrot.lane.b32.xlu0 %v786, 127
    %v900 = vpop.permute.xlu0 %899
    %901 = vrot.lane.b32.xlu0 %v787, 127
    %v902 = vpop.permute.xlu0 %901
    %903 = vrot.lane.b32.xlu0 %v788, 127
    %v904 = vpop.permute.xlu0 %903
    %905 = vrot.lane.b32.xlu0 %v789, 127
    %v906 = vpop.permute.xlu0 %905
    %907 = vrot.lane.b32.xlu0 %v790, 127
    %v908 = vpop.permute.xlu0 %907
    %909 = vrot.lane.b32.xlu0 %v791, 127
    %v910 = vpop.permute.xlu0 %909
    %911 = vrot.lane.b32.xlu0 %v792, 127
    %v912 = vpop.permute.xlu0 %911
    %913 = vrot.lane.b32.xlu0 %v793, 127
    %v914 = vpop.permute.xlu0 %913
    %915 = vrot.lane.b32.xlu0 %v794, 127
    %v916 = vpop.permute.xlu0 %915
    %917 = vrot.lane.b32.xlu0 %v795, 127
    %v918 = vpop.permute.xlu0 %917
    %919 = vrot.lane.b32.xlu0 %v796, 127
    %v920 = vpop.permute.xlu0 %919
    %921 = vrot.lane.b32.xlu0 %v797, 127
    %v922 = vpop.permute.xlu0 %921
    %923 = vrot.lane.b32.xlu0 %v798, 127
    %v924 = vpop.permute.xlu0 %923
    %925 = vrot.lane.b32.xlu0 %v799, 127
    %v926 = vpop.permute.xlu0 %925
    %927 = vrot.lane.b32.xlu0 %v800, 127
    %v928 = vpop.permute.xlu0 %927
    %929 = vrot.lane.b32.xlu0 %v801, 127
    %v930 = vpop.permute.xlu0 %929
    %931 = vrot.lane.b32.xlu0 %v802, 127
    %v932 = vpop.permute.xlu0 %931
    %933 = vrot.lane.b32.xlu0 %v803, 127
    %v934 = vpop.permute.xlu0 %933
    %935 = vrot.lane.b32.xlu0 %v804, 127
    %v936 = vpop.permute.xlu0 %935
    %937 = vrot.lane.b32.xlu0 %v805, 127
    %v938 = vpop.permute.xlu0 %937
    %939 = vrot.lane.b32.xlu0 %v806, 127
    %v940 = vpop.permute.xlu0 %939
    %941 = vrot.lane.b32.xlu0 %v807, 127
    %v942 = vpop.permute.xlu0 %941
    %943 = vrot.lane.b32.xlu0 %v808, 127
    %v944 = vpop.permute.xlu0 %943
    %945 = vrot.lane.b32.xlu0 %v809, 127
    %v946 = vpop.permute.xlu0 %945
    %947 = vrot.lane.b32.xlu0 %v810, 127
    %v948 = vpop.permute.xlu0 %947
    %949 = vrot.lane.b32.xlu0 %v811, 127
    %v950 = vpop.permute.xlu0 %949
    %951 = vrot.lane.b32.xlu0 %v812, 127
    %v952 = vpop.permute.xlu0 %951
    %953 = vrot.lane.b32.xlu0 %v813, 127
    %v954 = vpop.permute.xlu0 %953
    %955 = vrot.lane.b32.xlu0 %v814, 127
    %v956 = vpop.permute.xlu0 %955
    %957 = vrot.lane.b32.xlu0 %v815, 127
    %v958 = vpop.permute.xlu0 %957
    %959 = vrot.lane.b32.xlu0 %v816, 127
    %v960 = vpop.permute.xlu0 %959
    %vm961 = vcmask 1039360
    %v962 = vsel %vm961, %v866, %v868
    %v963 = vsel %vm961, %v870, %v872
    %v964 = vsel %vm961, %v874, %v876
    %v965 = vsel %vm961, %v878, %v880
    %v966 = vsel %vm961, %v882, %v884
    %v967 = vsel %vm961, %v886, %v888
    %v968 = vsel %vm961, %v890, %v892
    %v969 = vsel %vm961, %v894, %v896
    %v970 = vsel %vm961, %v898, %v900
    %v971 = vsel %vm961, %v902, %v904
    %v972 = vsel %vm961, %v906, %v908
    %v973 = vsel %vm961, %v910, %v912
    %v974 = vsel %vm961, %v914, %v916
    %v975 = vsel %vm961, %v918, %v920
    %v976 = vsel %vm961, %v922, %v924
    %v977 = vsel %vm961, %v926, %v928
    %v978 = vsel %vm961, %v930, %v932
    %v979 = vsel %vm961, %v934, %v936
    %v980 = vsel %vm961, %v938, %v940
    %v981 = vsel %vm961, %v942, %v944
    %v982 = vsel %vm961, %v946, %v948
    %v983 = vsel %vm961, %v950, %v952
    %v984 = vsel %vm961, %v954, %v956
    %v985 = vsel %vm961, %v958, %v960
    %v1034 = vadd.f32 %v408, %v962
    %v1035 = vadd.f32 %v409, %v868
    %v1036 = vadd.f32 %v410, %v963
    %v1037 = vadd.f32 %v411, %v872
    %v1038 = vadd.f32 %v412, %v964
    %v1039 = vadd.f32 %v413, %v876
    %v1040 = vadd.f32 %v414, %v965
    %v1041 = vadd.f32 %v415, %v880
    %v1042 = vadd.f32 %v416, %v966
    %v1043 = vadd.f32 %v417, %v884
    %v1044 = vadd.f32 %v418, %v967
    %v1045 = vadd.f32 %v419, %v888
    %v1046 = vadd.f32 %v420, %v968
    %v1047 = vadd.f32 %v421, %v892
    %v1048 = vadd.f32 %v422, %v969
    %v1049 = vadd.f32 %v423, %v896
    %v1050 = vadd.f32 %v424, %v970
    %v1051 = vadd.f32 %v425, %v900
    %v1052 = vadd.f32 %v426, %v971
    %v1053 = vadd.f32 %v427, %v904
    %v1054 = vadd.f32 %v428, %v972
    %v1055 = vadd.f32 %v429, %v908
    %v1056 = vadd.f32 %v430, %v973
    %v1057 = vadd.f32 %v431, %v912
    %v1058 = vadd.f32 %v432, %v974
    %v1059 = vadd.f32 %v433, %v916
    %v1060 = vadd.f32 %v434, %v975
    %v1061 = vadd.f32 %v435, %v920
    %v1062 = vadd.f32 %v436, %v976
    %v1063 = vadd.f32 %v437, %v924
    %v1064 = vadd.f32 %v438, %v977
    %v1065 = vadd.f32 %v439, %v928
    %v1066 = vadd.f32 %v440, %v978
    %v1067 = vadd.f32 %v441, %v932
    %v1068 = vadd.f32 %v442, %v979
    %v1069 = vadd.f32 %v443, %v936
    %v1070 = vadd.f32 %v444, %v980
    %v1071 = vadd.f32 %v445, %v940
    %v1072 = vadd.f32 %v446, %v981
    %v1073 = vadd.f32 %v447, %v944
    %v1074 = vadd.f32 %v448, %v982
    %v1075 = vadd.f32 %v449, %v948
    %v1076 = vadd.f32 %v450, %v983
    %v1077 = vadd.f32 %v451, %v952
    %v1078 = vadd.f32 %v452, %v984
    %v1079 = vadd.f32 %v453, %v956
    %v1080 = vadd.f32 %v454, %v985
    %v1081 = vadd.f32 %v455, %v960
    %1082 = vrot.lane.b32.xlu0 %v23, 1
    %v1083 = vpop.permute.xlu0 %1082
    %1084 = vrot.lane.b32.xlu0 %v24, 1
    %v1085 = vpop.permute.xlu0 %1084
    %1086 = vrot.lane.b32.xlu0 %v25, 1
    %v1087 = vpop.permute.xlu0 %1086
    %1088 = vrot.lane.b32.xlu0 %v26, 1
    %v1089 = vpop.permute.xlu0 %1088
    %1090 = vrot.lane.b32.xlu0 %v27, 1
    %v1091 = vpop.permute.xlu0 %1090
    %1092 = vrot.lane.b32.xlu0 %v28, 1
    %v1093 = vpop.permute.xlu0 %1092
    %1094 = vrot.lane.b32.xlu0 %v29, 1
    %v1095 = vpop.permute.xlu0 %1094
    %1096 = vrot.lane.b32.xlu0 %v30, 1
    %v1097 = vpop.permute.xlu0 %1096
    %1098 = vrot.lane.b32.xlu0 %v31, 1
    %v1099 = vpop.permute.xlu0 %1098
    %1100 = vrot.lane.b32.xlu0 %v32, 1
    %v1101 = vpop.permute.xlu0 %1100
    %1102 = vrot.lane.b32.xlu0 %v33, 1
    %v1103 = vpop.permute.xlu0 %1102
    %1104 = vrot.lane.b32.xlu0 %v34, 1
    %v1105 = vpop.permute.xlu0 %1104
    %1106 = vrot.lane.b32.xlu0 %v35, 1
    %v1107 = vpop.permute.xlu0 %1106
    %1108 = vrot.lane.b32.xlu0 %v36, 1
    %v1109 = vpop.permute.xlu0 %1108
    %1110 = vrot.lane.b32.xlu0 %v37, 1
    %v1111 = vpop.permute.xlu0 %1110
    %1112 = vrot.lane.b32.xlu0 %v38, 1
    %v1113 = vpop.permute.xlu0 %1112
    %1114 = vrot.lane.b32.xlu0 %v39, 1
    %v1115 = vpop.permute.xlu0 %1114
    %1116 = vrot.lane.b32.xlu0 %v40, 1
    %v1117 = vpop.permute.xlu0 %1116
    %1118 = vrot.lane.b32.xlu0 %v41, 1
    %v1119 = vpop.permute.xlu0 %1118
    %1120 = vrot.lane.b32.xlu0 %v42, 1
    %v1121 = vpop.permute.xlu0 %1120
    %1122 = vrot.lane.b32.xlu0 %v43, 1
    %v1123 = vpop.permute.xlu0 %1122
    %1124 = vrot.lane.b32.xlu0 %v44, 1
    %v1125 = vpop.permute.xlu0 %1124
    %1126 = vrot.lane.b32.xlu0 %v45, 1
    %v1127 = vpop.permute.xlu0 %1126
    %1128 = vrot.lane.b32.xlu0 %v46, 1
    %v1129 = vpop.permute.xlu0 %1128
    %1130 = vrot.lane.b32.xlu0 %v47, 1
    %v1131 = vpop.permute.xlu0 %1130
    %1132 = vrot.lane.b32.xlu0 %v48, 1
    %v1133 = vpop.permute.xlu0 %1132
    %1134 = vrot.lane.b32.xlu0 %v49, 1
    %v1135 = vpop.permute.xlu0 %1134
    %1136 = vrot.lane.b32.xlu0 %v50, 1
    %v1137 = vpop.permute.xlu0 %1136
    %1138 = vrot.lane.b32.xlu0 %v51, 1
    %v1139 = vpop.permute.xlu0 %1138
    %1140 = vrot.lane.b32.xlu0 %v52, 1
    %v1141 = vpop.permute.xlu0 %1140
    %1142 = vrot.lane.b32.xlu0 %v53, 1
    %v1143 = vpop.permute.xlu0 %1142
    %1144 = vrot.lane.b32.xlu0 %v54, 1
    %v1145 = vpop.permute.xlu0 %1144
    %1146 = vrot.lane.b32.xlu0 %v55, 1
    %v1147 = vpop.permute.xlu0 %1146
    %1148 = vrot.lane.b32.xlu0 %v56, 1
    %v1149 = vpop.permute.xlu0 %1148
    %1150 = vrot.lane.b32.xlu0 %v57, 1
    %v1151 = vpop.permute.xlu0 %1150
    %1152 = vrot.lane.b32.xlu0 %v58, 1
    %v1153 = vpop.permute.xlu0 %1152
    %1154 = vrot.lane.b32.xlu0 %v59, 1
    %v1155 = vpop.permute.xlu0 %1154
    %1156 = vrot.lane.b32.xlu0 %v60, 1
    %v1157 = vpop.permute.xlu0 %1156
    %1158 = vrot.lane.b32.xlu0 %v61, 1
    %v1159 = vpop.permute.xlu0 %1158
    %1160 = vrot.lane.b32.xlu0 %v62, 1
    %v1161 = vpop.permute.xlu0 %1160
    %1162 = vrot.lane.b32.xlu0 %v63, 1
    %v1163 = vpop.permute.xlu0 %1162
    %1164 = vrot.lane.b32.xlu0 %v64, 1
    %v1165 = vpop.permute.xlu0 %1164
    %1166 = vrot.lane.b32.xlu0 %v65, 1
    %v1167 = vpop.permute.xlu0 %1166
    %1168 = vrot.lane.b32.xlu0 %v66, 1
    %v1169 = vpop.permute.xlu0 %1168
    %1170 = vrot.lane.b32.xlu0 %v67, 1
    %v1171 = vpop.permute.xlu0 %1170
    %1172 = vrot.lane.b32.xlu0 %v68, 1
    %v1173 = vpop.permute.xlu0 %1172
    %1174 = vrot.lane.b32.xlu0 %v69, 1
    %v1175 = vpop.permute.xlu0 %1174
    %1176 = vrot.lane.b32.xlu0 %v70, 1
    %v1177 = vpop.permute.xlu0 %1176
    %1178 = vrot.lane.b32.xlu0 %v71, 1
    %v1179 = vpop.permute.xlu0 %1178
    %1180 = vrot.lane.b32.xlu0 %v72, 1
    %v1181 = vpop.permute.xlu0 %1180
    %1182 = vrot.lane.b32.xlu0 %v73, 1
    %v1183 = vpop.permute.xlu0 %1182
    %1184 = vrot.lane.b32.xlu0 %v74, 1
    %v1185 = vpop.permute.xlu0 %1184
    %1186 = vrot.lane.b32.xlu0 %v75, 1
    %v1187 = vpop.permute.xlu0 %1186
    %1188 = vrot.lane.b32.xlu0 %v76, 1
    %v1189 = vpop.permute.xlu0 %1188
    %1190 = vrot.lane.b32.xlu0 %v77, 1
    %v1191 = vpop.permute.xlu0 %1190
    %1192 = vrot.lane.b32.xlu0 %v78, 1
    %v1193 = vpop.permute.xlu0 %1192
    %1194 = vrot.lane.b32.xlu0 %v79, 1
    %v1195 = vpop.permute.xlu0 %1194
    %1196 = vrot.lane.b32.xlu0 %v80, 1
    %v1197 = vpop.permute.xlu0 %1196
    %1198 = vrot.lane.b32.xlu0 %v81, 1
    %v1199 = vpop.permute.xlu0 %1198
    %1200 = vrot.lane.b32.xlu0 %v82, 1
    %v1201 = vpop.permute.xlu0 %1200
    %v1202 = vsel %vm552, %v1083, %v1085
    %v1203 = vsel %vm552, %v1087, %v1089
    %v1204 = vsel %vm552, %v1091, %v1093
    %v1205 = vsel %vm552, %v1095, %v1097
    %v1206 = vsel %vm552, %v1099, %v1101
    %v1207 = vsel %vm552, %v1103, %v1105
    %v1208 = vsel %vm552, %v1107, %v1109
    %v1209 = vsel %vm552, %v1111, %v1113
    %v1210 = vsel %vm552, %v1115, %v1117
    %v1211 = vsel %vm552, %v1119, %v1121
    %v1212 = vsel %vm552, %v1123, %v1125
    %v1213 = vsel %vm552, %v1127, %v1129
    %v1214 = vsel %vm552, %v1131, %v1133
    %v1215 = vsel %vm552, %v1135, %v1137
    %v1216 = vsel %vm552, %v1139, %v1141
    %v1217 = vsel %vm552, %v1143, %v1145
    %v1218 = vsel %vm552, %v1147, %v1149
    %v1219 = vsel %vm552, %v1151, %v1153
    %v1220 = vsel %vm552, %v1155, %v1157
    %v1221 = vsel %vm552, %v1159, %v1161
    %v1222 = vsel %vm552, %v1163, %v1165
    %v1223 = vsel %vm552, %v1167, %v1169
    %v1224 = vsel %vm552, %v1171, %v1173
    %v1225 = vsel %vm552, %v1175, %v1177
    %v1226 = vsel %vm552, %v1179, %v1181
    %v1227 = vsel %vm552, %v1183, %v1185
    %v1228 = vsel %vm552, %v1187, %v1189
    %v1229 = vsel %vm552, %v1191, %v1193
    %v1230 = vsel %vm552, %v1195, %v1197
    %v1231 = vsel %vm552, %v1199, %v1201
    %vm1292 = vcmp.ge.f32.partialorder %v23, %v1083
    %vm1293 = vcmp.ge.f32.partialorder %v24, %v1202
    %vm1294 = vcmp.ge.f32.partialorder %v25, %v1087
    %vm1295 = vcmp.ge.f32.partialorder %v26, %v1203
    %vm1296 = vcmp.ge.f32.partialorder %v27, %v1091
    %vm1297 = vcmp.ge.f32.partialorder %v28, %v1204
    %vm1298 = vcmp.ge.f32.partialorder %v29, %v1095
    %vm1299 = vcmp.ge.f32.partialorder %v30, %v1205
    %vm1300 = vcmp.ge.f32.partialorder %v31, %v1099
    %vm1301 = vcmp.ge.f32.partialorder %v32, %v1206
    %vm1302 = vcmp.ge.f32.partialorder %v33, %v1103
    %vm1303 = vcmp.ge.f32.partialorder %v34, %v1207
    %vm1304 = vcmp.ge.f32.partialorder %v35, %v1107
    %vm1305 = vcmp.ge.f32.partialorder %v36, %v1208
    %vm1306 = vcmp.ge.f32.partialorder %v37, %v1111
    %vm1307 = vcmp.ge.f32.partialorder %v38, %v1209
    %vm1308 = vcmp.ge.f32.partialorder %v39, %v1115
    %vm1309 = vcmp.ge.f32.partialorder %v40, %v1210
    %vm1310 = vcmp.ge.f32.partialorder %v41, %v1119
    %vm1311 = vcmp.ge.f32.partialorder %v42, %v1211
    %vm1312 = vcmp.ge.f32.partialorder %v43, %v1123
    %vm1313 = vcmp.ge.f32.partialorder %v44, %v1212
    %vm1314 = vcmp.ge.f32.partialorder %v45, %v1127
    %vm1315 = vcmp.ge.f32.partialorder %v46, %v1213
    %vm1316 = vcmp.ge.f32.partialorder %v47, %v1131
    %vm1317 = vcmp.ge.f32.partialorder %v48, %v1214
    %vm1318 = vcmp.ge.f32.partialorder %v49, %v1135
    %vm1319 = vcmp.ge.f32.partialorder %v50, %v1215
    %vm1320 = vcmp.ge.f32.partialorder %v51, %v1139
    %vm1321 = vcmp.ge.f32.partialorder %v52, %v1216
    %vm1322 = vcmp.ge.f32.partialorder %v53, %v1143
    %vm1323 = vcmp.ge.f32.partialorder %v54, %v1217
    %vm1324 = vcmp.ge.f32.partialorder %v55, %v1147
    %vm1325 = vcmp.ge.f32.partialorder %v56, %v1218
    %vm1326 = vcmp.ge.f32.partialorder %v57, %v1151
    %vm1327 = vcmp.ge.f32.partialorder %v58, %v1219
    %vm1328 = vcmp.ge.f32.partialorder %v59, %v1155
    %vm1329 = vcmp.ge.f32.partialorder %v60, %v1220
    %vm1330 = vcmp.ge.f32.partialorder %v61, %v1159
    %vm1331 = vcmp.ge.f32.partialorder %v62, %v1221
    %vm1332 = vcmp.ge.f32.partialorder %v63, %v1163
    %vm1333 = vcmp.ge.f32.partialorder %v64, %v1222
    %vm1334 = vcmp.ge.f32.partialorder %v65, %v1167
    %vm1335 = vcmp.ge.f32.partialorder %v66, %v1223
    %vm1336 = vcmp.ge.f32.partialorder %v67, %v1171
    %vm1337 = vcmp.ge.f32.partialorder %v68, %v1224
    %vm1338 = vcmp.ge.f32.partialorder %v69, %v1175
    %vm1339 = vcmp.ge.f32.partialorder %v70, %v1225
    %vm1340 = vcmp.ge.f32.partialorder %v71, %v1179
    %vm1341 = vcmp.ge.f32.partialorder %v72, %v1226
    %vm1342 = vcmp.ge.f32.partialorder %v73, %v1183
    %vm1343 = vcmp.ge.f32.partialorder %v74, %v1227
    %vm1344 = vcmp.ge.f32.partialorder %v75, %v1187
    %vm1345 = vcmp.ge.f32.partialorder %v76, %v1228
    %vm1346 = vcmp.ge.f32.partialorder %v77, %v1191
    %vm1347 = vcmp.ge.f32.partialorder %v78, %v1229
    %vm1348 = vcmp.ge.f32.partialorder %v79, %v1195
    %vm1349 = vcmp.ge.f32.partialorder %v80, %v1230
    %vm1350 = vcmp.ge.f32.partialorder %v81, %v1199
    %vm1351 = vcmp.ge.f32.partialorder %v82, %v1231
    %v1352 = vsel %vm1292, 1, 0
    %v1353 = vsel %vm1293, 1, 0
    %v1354 = vsel %vm1294, 1, 0
    %v1355 = vsel %vm1295, 1, 0
    %v1356 = vsel %vm1296, 1, 0
    %v1357 = vsel %vm1297, 1, 0
    %v1358 = vsel %vm1298, 1, 0
    %v1359 = vsel %vm1299, 1, 0
    %v1360 = vsel %vm1300, 1, 0
    %v1361 = vsel %vm1301, 1, 0
    %v1362 = vsel %vm1302, 1, 0
    %v1363 = vsel %vm1303, 1, 0
    %v1364 = vsel %vm1304, 1, 0
    %v1365 = vsel %vm1305, 1, 0
    %v1366 = vsel %vm1306, 1, 0
    %v1367 = vsel %vm1307, 1, 0
    %v1368 = vsel %vm1308, 1, 0
    %v1369 = vsel %vm1309, 1, 0
    %v1370 = vsel %vm1310, 1, 0
    %v1371 = vsel %vm1311, 1, 0
    %v1372 = vsel %vm1312, 1, 0
    %v1373 = vsel %vm1313, 1, 0
    %v1374 = vsel %vm1314, 1, 0
    %v1375 = vsel %vm1315, 1, 0
    %v1376 = vsel %vm1316, 1, 0
    %v1377 = vsel %vm1317, 1, 0
    %v1378 = vsel %vm1318, 1, 0
    %v1379 = vsel %vm1319, 1, 0
    %v1380 = vsel %vm1320, 1, 0
    %v1381 = vsel %vm1321, 1, 0
    %v1382 = vsel %vm1322, 1, 0
    %v1383 = vsel %vm1323, 1, 0
    %v1384 = vsel %vm1324, 1, 0
    %v1385 = vsel %vm1325, 1, 0
    %v1386 = vsel %vm1326, 1, 0
    %v1387 = vsel %vm1327, 1, 0
    %v1388 = vsel %vm1328, 1, 0
    %v1389 = vsel %vm1329, 1, 0
    %v1390 = vsel %vm1330, 1, 0
    %v1391 = vsel %vm1331, 1, 0
    %v1392 = vsel %vm1332, 1, 0
    %v1393 = vsel %vm1333, 1, 0
    %v1394 = vsel %vm1334, 1, 0
    %v1395 = vsel %vm1335, 1, 0
    %v1396 = vsel %vm1336, 1, 0
    %v1397 = vsel %vm1337, 1, 0
    %v1398 = vsel %vm1338, 1, 0
    %v1399 = vsel %vm1339, 1, 0
    %v1400 = vsel %vm1340, 1, 0
    %v1401 = vsel %vm1341, 1, 0
    %v1402 = vsel %vm1342, 1, 0
    %v1403 = vsel %vm1343, 1, 0
    %v1404 = vsel %vm1344, 1, 0
    %v1405 = vsel %vm1345, 1, 0
    %v1406 = vsel %vm1346, 1, 0
    %v1407 = vsel %vm1347, 1, 0
    %v1408 = vsel %vm1348, 1, 0
    %v1409 = vsel %vm1349, 1, 0
    %v1410 = vsel %vm1350, 1, 0
    %v1411 = vsel %vm1351, 1, 0
    %v1412 = vcvt.s32.f32 %v1352
    %v1413 = vcvt.s32.f32 %v1353
    %v1414 = vcvt.s32.f32 %v1354
    %v1415 = vcvt.s32.f32 %v1355
    %v1416 = vcvt.s32.f32 %v1356
    %v1417 = vcvt.s32.f32 %v1357
    %v1418 = vcvt.s32.f32 %v1358
    %v1419 = vcvt.s32.f32 %v1359
    %v1420 = vcvt.s32.f32 %v1360
    %v1421 = vcvt.s32.f32 %v1361
    %v1422 = vcvt.s32.f32 %v1362
    %v1423 = vcvt.s32.f32 %v1363
    %v1424 = vcvt.s32.f32 %v1364
    %v1425 = vcvt.s32.f32 %v1365
    %v1426 = vcvt.s32.f32 %v1366
    %v1427 = vcvt.s32.f32 %v1367
    %v1428 = vcvt.s32.f32 %v1368
    %v1429 = vcvt.s32.f32 %v1369
    %v1430 = vcvt.s32.f32 %v1370
    %v1431 = vcvt.s32.f32 %v1371
    %v1432 = vcvt.s32.f32 %v1372
    %v1433 = vcvt.s32.f32 %v1373
    %v1434 = vcvt.s32.f32 %v1374
    %v1435 = vcvt.s32.f32 %v1375
    %v1436 = vcvt.s32.f32 %v1376
    %v1437 = vcvt.s32.f32 %v1377
    %v1438 = vcvt.s32.f32 %v1378
    %v1439 = vcvt.s32.f32 %v1379
    %v1440 = vcvt.s32.f32 %v1380
    %v1441 = vcvt.s32.f32 %v1381
    %v1442 = vcvt.s32.f32 %v1382
    %v1443 = vcvt.s32.f32 %v1383
    %v1444 = vcvt.s32.f32 %v1384
    %v1445 = vcvt.s32.f32 %v1385
    %v1446 = vcvt.s32.f32 %v1386
    %v1447 = vcvt.s32.f32 %v1387
    %v1448 = vcvt.s32.f32 %v1388
    %v1449 = vcvt.s32.f32 %v1389
    %v1450 = vcvt.s32.f32 %v1390
    %v1451 = vcvt.s32.f32 %v1391
    %v1452 = vcvt.s32.f32 %v1392
    %v1453 = vcvt.s32.f32 %v1393
    %v1454 = vcvt.s32.f32 %v1394
    %v1455 = vcvt.s32.f32 %v1395
    %v1456 = vcvt.s32.f32 %v1396
    %v1457 = vcvt.s32.f32 %v1397
    %v1458 = vcvt.s32.f32 %v1398
    %v1459 = vcvt.s32.f32 %v1399
    %v1460 = vcvt.s32.f32 %v1400
    %v1461 = vcvt.s32.f32 %v1401
    %v1462 = vcvt.s32.f32 %v1402
    %v1463 = vcvt.s32.f32 %v1403
    %v1464 = vcvt.s32.f32 %v1404
    %v1465 = vcvt.s32.f32 %v1405
    %v1466 = vcvt.s32.f32 %v1406
    %v1467 = vcvt.s32.f32 %v1407
    %v1468 = vcvt.s32.f32 %v1408
    %v1469 = vcvt.s32.f32 %v1409
    %v1470 = vcvt.s32.f32 %v1410
    %v1471 = vcvt.s32.f32 %v1411
    %v1472 = vmul.f32 %v1412, 4.0
    %v1473 = vmul.f32 %v1413, 4.0
    %v1474 = vmul.f32 %v1414, 4.0
    %v1475 = vmul.f32 %v1415, 4.0
    %v1476 = vmul.f32 %v1416, 4.0
    %v1477 = vmul.f32 %v1417, 4.0
    %v1478 = vmul.f32 %v1418, 4.0
    %v1479 = vmul.f32 %v1419, 4.0
    %v1480 = vmul.f32 %v1420, 4.0
    %v1481 = vmul.f32 %v1421, 4.0
    %v1482 = vmul.f32 %v1422, 4.0
    %v1483 = vmul.f32 %v1423, 4.0
    %v1484 = vmul.f32 %v1424, 4.0
    %v1485 = vmul.f32 %v1425, 4.0
    %v1486 = vmul.f32 %v1426, 4.0
    %v1487 = vmul.f32 %v1427, 4.0
    %v1488 = vmul.f32 %v1428, 4.0
    %v1489 = vmul.f32 %v1429, 4.0
    %v1490 = vmul.f32 %v1430, 4.0
    %v1491 = vmul.f32 %v1431, 4.0
    %v1492 = vmul.f32 %v1432, 4.0
    %v1493 = vmul.f32 %v1433, 4.0
    %v1494 = vmul.f32 %v1434, 4.0
    %v1495 = vmul.f32 %v1435, 4.0
    %v1496 = vmul.f32 %v1436, 4.0
    %v1497 = vmul.f32 %v1437, 4.0
    %v1498 = vmul.f32 %v1438, 4.0
    %v1499 = vmul.f32 %v1439, 4.0
    %v1500 = vmul.f32 %v1440, 4.0
    %v1501 = vmul.f32 %v1441, 4.0
    %v1502 = vmul.f32 %v1442, 4.0
    %v1503 = vmul.f32 %v1443, 4.0
    %v1504 = vmul.f32 %v1444, 4.0
    %v1505 = vmul.f32 %v1445, 4.0
    %v1506 = vmul.f32 %v1446, 4.0
    %v1507 = vmul.f32 %v1447, 4.0
    %v1508 = vmul.f32 %v1448, 4.0
    %v1509 = vmul.f32 %v1449, 4.0
    %v1510 = vmul.f32 %v1450, 4.0
    %v1511 = vmul.f32 %v1451, 4.0
    %v1512 = vmul.f32 %v1452, 4.0
    %v1513 = vmul.f32 %v1453, 4.0
    %v1514 = vmul.f32 %v1454, 4.0
    %v1515 = vmul.f32 %v1455, 4.0
    %v1516 = vmul.f32 %v1456, 4.0
    %v1517 = vmul.f32 %v1457, 4.0
    %v1518 = vmul.f32 %v1458, 4.0
    %v1519 = vmul.f32 %v1459, 4.0
    %v1520 = vmul.f32 %v1460, 4.0
    %v1521 = vmul.f32 %v1461, 4.0
    %v1522 = vmul.f32 %v1462, 4.0
    %v1523 = vmul.f32 %v1463, 4.0
    %v1524 = vmul.f32 %v1464, 4.0
    %v1525 = vmul.f32 %v1465, 4.0
    %v1526 = vmul.f32 %v1466, 4.0
    %v1527 = vmul.f32 %v1467, 4.0
    %v1528 = vmul.f32 %v1468, 4.0
    %v1529 = vmul.f32 %v1469, 4.0
    %v1530 = vmul.f32 %v1470, 4.0
    %v1531 = vmul.f32 %v1471, 4.0
    %v1592 = vrot.slane %v1472, 1
    %v1593 = vrot.slane %v1474, 1
    %v1594 = vsel %vm155, %v1592, %v1593
    %v1595 = vrot.slane %v1473, 1
    %v1596 = vrot.slane %v1475, 1
    %v1597 = vsel %vm155, %v1595, %v1596
    %v1598 = vrot.slane %v1476, 1
    %v1599 = vsel %vm155, %v1593, %v1598
    %v1600 = vrot.slane %v1477, 1
    %v1601 = vsel %vm155, %v1596, %v1600
    %v1602 = vrot.slane %v1478, 1
    %v1603 = vsel %vm155, %v1598, %v1602
    %v1604 = vrot.slane %v1479, 1
    %v1605 = vsel %vm155, %v1600, %v1604
    %v1606 = vrot.slane %v1480, 1
    %v1607 = vsel %vm155, %v1602, %v1606
    %v1608 = vrot.slane %v1481, 1
    %v1609 = vsel %vm155, %v1604, %v1608
    %v1610 = vrot.slane %v1482, 1
    %v1611 = vrot.slane %v1484, 1
    %v1612 = vsel %vm155, %v1610, %v1611
    %v1613 = vrot.slane %v1483, 1
    %v1614 = vrot.slane %v1485, 1
    %v1615 = vsel %vm155, %v1613, %v1614
    %v1616 = vrot.slane %v1486, 1
    %v1617 = vsel %vm155, %v1611, %v1616
    %v1618 = vrot.slane %v1487, 1
    %v1619 = vsel %vm155, %v1614, %v1618
    %v1620 = vrot.slane %v1488, 1
    %v1621 = vsel %vm155, %v1616, %v1620
    %v1622 = vrot.slane %v1489, 1
    %v1623 = vsel %vm155, %v1618, %v1622
    %v1624 = vrot.slane %v1490, 1
    %v1625 = vsel %vm155, %v1620, %v1624
    %v1626 = vrot.slane %v1491, 1
    %v1627 = vsel %vm155, %v1622, %v1626
    %v1628 = vrot.slane %v1492, 1
    %v1629 = vrot.slane %v1494, 1
    %v1630 = vsel %vm155, %v1628, %v1629
    %v1631 = vrot.slane %v1493, 1
    %v1632 = vrot.slane %v1495, 1
    %v1633 = vsel %vm155, %v1631, %v1632
    %v1634 = vrot.slane %v1496, 1
    %v1635 = vsel %vm155, %v1629, %v1634
    %v1636 = vrot.slane %v1497, 1
    %v1637 = vsel %vm155, %v1632, %v1636
    %v1638 = vrot.slane %v1498, 1
    %v1639 = vsel %vm155, %v1634, %v1638
    %v1640 = vrot.slane %v1499, 1
    %v1641 = vsel %vm155, %v1636, %v1640
    %v1642 = vrot.slane %v1500, 1
    %v1643 = vsel %vm155, %v1638, %v1642
    %v1644 = vrot.slane %v1501, 1
    %v1645 = vsel %vm155, %v1640, %v1644
    %v1646 = vrot.slane %v1502, 1
    %v1647 = vrot.slane %v1504, 1
    %v1648 = vsel %vm155, %v1646, %v1647
    %v1649 = vrot.slane %v1503, 1
    %v1650 = vrot.slane %v1505, 1
    %v1651 = vsel %vm155, %v1649, %v1650
    %v1652 = vrot.slane %v1506, 1
    %v1653 = vsel %vm155, %v1647, %v1652
    %v1654 = vrot.slane %v1507, 1
    %v1655 = vsel %vm155, %v1650, %v1654
    %v1656 = vrot.slane %v1508, 1
    %v1657 = vsel %vm155, %v1652, %v1656
    %v1658 = vrot.slane %v1509, 1
    %v1659 = vsel %vm155, %v1654, %v1658
    %v1660 = vrot.slane %v1510, 1
    %v1661 = vsel %vm155, %v1656, %v1660
    %v1662 = vrot.slane %v1511, 1
    %v1663 = vsel %vm155, %v1658, %v1662
    %v1664 = vrot.slane %v1512, 1
    %v1665 = vrot.slane %v1514, 1
    %v1666 = vsel %vm155, %v1664, %v1665
    %v1667 = vrot.slane %v1513, 1
    %v1668 = vrot.slane %v1515, 1
    %v1669 = vsel %vm155, %v1667, %v1668
    %v1670 = vrot.slane %v1516, 1
    %v1671 = vsel %vm155, %v1665, %v1670
    %v1672 = vrot.slane %v1517, 1
    %v1673 = vsel %vm155, %v1668, %v1672
    %v1674 = vrot.slane %v1518, 1
    %v1675 = vsel %vm155, %v1670, %v1674
    %v1676 = vrot.slane %v1519, 1
    %v1677 = vsel %vm155, %v1672, %v1676
    %v1678 = vrot.slane %v1520, 1
    %v1679 = vsel %vm155, %v1674, %v1678
    %v1680 = vrot.slane %v1521, 1
    %v1681 = vsel %vm155, %v1676, %v1680
    %v1682 = vrot.slane %v1522, 1
    %v1683 = vrot.slane %v1524, 1
    %v1684 = vsel %vm155, %v1682, %v1683
    %v1685 = vrot.slane %v1523, 1
    %v1686 = vrot.slane %v1525, 1
    %v1687 = vsel %vm155, %v1685, %v1686
    %v1688 = vrot.slane %v1526, 1
    %v1689 = vsel %vm155, %v1683, %v1688
    %v1690 = vrot.slane %v1527, 1
    %v1691 = vsel %vm155, %v1686, %v1690
    %v1692 = vrot.slane %v1528, 1
    %v1693 = vsel %vm155, %v1688, %v1692
    %v1694 = vrot.slane %v1529, 1
    %v1695 = vsel %vm155, %v1690, %v1694
    %v1696 = vrot.slane %v1530, 1
    %v1697 = vsel %vm155, %v1692, %v1696
    %v1698 = vrot.slane %v1531, 1
    %v1699 = vsel %vm155, %v1694, %v1698
    %1700 = vrot.lane.b32.xlu0 %v1594, 127
    %v1701 = vpop.permute.xlu0 %1700
    %1702 = vrot.lane.b32.xlu0 %v1597, 127
    %v1703 = vpop.permute.xlu0 %1702
    %1704 = vrot.lane.b32.xlu0 %v1599, 127
    %v1705 = vpop.permute.xlu0 %1704
    %1706 = vrot.lane.b32.xlu0 %v1601, 127
    %v1707 = vpop.permute.xlu0 %1706
    %1708 = vrot.lane.b32.xlu0 %v1603, 127
    %v1709 = vpop.permute.xlu0 %1708
    %1710 = vrot.lane.b32.xlu0 %v1605, 127
    %v1711 = vpop.permute.xlu0 %1710
    %1712 = vrot.lane.b32.xlu0 %v1607, 127
    %v1713 = vpop.permute.xlu0 %1712
    %1714 = vrot.lane.b32.xlu0 %v1609, 127
    %v1715 = vpop.permute.xlu0 %1714
    %1716 = vrot.lane.b32.xlu0 %v1612, 127
    %v1717 = vpop.permute.xlu0 %1716
    %1718 = vrot.lane.b32.xlu0 %v1615, 127
    %v1719 = vpop.permute.xlu0 %1718
    %1720 = vrot.lane.b32.xlu0 %v1617, 127
    %v1721 = vpop.permute.xlu0 %1720
    %1722 = vrot.lane.b32.xlu0 %v1619, 127
    %v1723 = vpop.permute.xlu0 %1722
    %1724 = vrot.lane.b32.xlu0 %v1621, 127
    %v1725 = vpop.permute.xlu0 %1724
    %1726 = vrot.lane.b32.xlu0 %v1623, 127
    %v1727 = vpop.permute.xlu0 %1726
    %1728 = vrot.lane.b32.xlu0 %v1625, 127
    %v1729 = vpop.permute.xlu0 %1728
    %1730 = vrot.lane.b32.xlu0 %v1627, 127
    %v1731 = vpop.permute.xlu0 %1730
    %1732 = vrot.lane.b32.xlu0 %v1630, 127
    %v1733 = vpop.permute.xlu0 %1732
    %1734 = vrot.lane.b32.xlu0 %v1633, 127
    %v1735 = vpop.permute.xlu0 %1734
    %1736 = vrot.lane.b32.xlu0 %v1635, 127
    %v1737 = vpop.permute.xlu0 %1736
    %1738 = vrot.lane.b32.xlu0 %v1637, 127
    %v1739 = vpop.permute.xlu0 %1738
    %1740 = vrot.lane.b32.xlu0 %v1639, 127
    %v1741 = vpop.permute.xlu0 %1740
    %1742 = vrot.lane.b32.xlu0 %v1641, 127
    %v1743 = vpop.permute.xlu0 %1742
    %1744 = vrot.lane.b32.xlu0 %v1643, 127
    %v1745 = vpop.permute.xlu0 %1744
    %1746 = vrot.lane.b32.xlu0 %v1645, 127
    %v1747 = vpop.permute.xlu0 %1746
    %1748 = vrot.lane.b32.xlu0 %v1648, 127
    %v1749 = vpop.permute.xlu0 %1748
    %1750 = vrot.lane.b32.xlu0 %v1651, 127
    %v1751 = vpop.permute.xlu0 %1750
    %1752 = vrot.lane.b32.xlu0 %v1653, 127
    %v1753 = vpop.permute.xlu0 %1752
    %1754 = vrot.lane.b32.xlu0 %v1655, 127
    %v1755 = vpop.permute.xlu0 %1754
    %1756 = vrot.lane.b32.xlu0 %v1657, 127
    %v1757 = vpop.permute.xlu0 %1756
    %1758 = vrot.lane.b32.xlu0 %v1659, 127
    %v1759 = vpop.permute.xlu0 %1758
    %1760 = vrot.lane.b32.xlu0 %v1661, 127
    %v1761 = vpop.permute.xlu0 %1760
    %1762 = vrot.lane.b32.xlu0 %v1663, 127
    %v1763 = vpop.permute.xlu0 %1762
    %1764 = vrot.lane.b32.xlu0 %v1666, 127
    %v1765 = vpop.permute.xlu0 %1764
    %1766 = vrot.lane.b32.xlu0 %v1669, 127
    %v1767 = vpop.permute.xlu0 %1766
    %1768 = vrot.lane.b32.xlu0 %v1671, 127
    %v1769 = vpop.permute.xlu0 %1768
    %1770 = vrot.lane.b32.xlu0 %v1673, 127
    %v1771 = vpop.permute.xlu0 %1770
    %1772 = vrot.lane.b32.xlu0 %v1675, 127
    %v1773 = vpop.permute.xlu0 %1772
    %1774 = vrot.lane.b32.xlu0 %v1677, 127
    %v1775 = vpop.permute.xlu0 %1774
    %1776 = vrot.lane.b32.xlu0 %v1679, 127
    %v1777 = vpop.permute.xlu0 %1776
    %1778 = vrot.lane.b32.xlu0 %v1681, 127
    %v1779 = vpop.permute.xlu0 %1778
    %1780 = vrot.lane.b32.xlu0 %v1684, 127
    %v1781 = vpop.permute.xlu0 %1780
    %1782 = vrot.lane.b32.xlu0 %v1687, 127
    %v1783 = vpop.permute.xlu0 %1782
    %1784 = vrot.lane.b32.xlu0 %v1689, 127
    %v1785 = vpop.permute.xlu0 %1784
    %1786 = vrot.lane.b32.xlu0 %v1691, 127
    %v1787 = vpop.permute.xlu0 %1786
    %1788 = vrot.lane.b32.xlu0 %v1693, 127
    %v1789 = vpop.permute.xlu0 %1788
    %1790 = vrot.lane.b32.xlu0 %v1695, 127
    %v1791 = vpop.permute.xlu0 %1790
    %1792 = vrot.lane.b32.xlu0 %v1697, 127
    %v1793 = vpop.permute.xlu0 %1792
    %1794 = vrot.lane.b32.xlu0 %v1699, 127
    %v1795 = vpop.permute.xlu0 %1794
    %v1796 = vsel %vm961, %v1701, %v1703
    %v1797 = vsel %vm961, %v1705, %v1707
    %v1798 = vsel %vm961, %v1709, %v1711
    %v1799 = vsel %vm961, %v1713, %v1715
    %v1800 = vsel %vm961, %v1717, %v1719
    %v1801 = vsel %vm961, %v1721, %v1723
    %v1802 = vsel %vm961, %v1725, %v1727
    %v1803 = vsel %vm961, %v1729, %v1731
    %v1804 = vsel %vm961, %v1733, %v1735
    %v1805 = vsel %vm961, %v1737, %v1739
    %v1806 = vsel %vm961, %v1741, %v1743
    %v1807 = vsel %vm961, %v1745, %v1747
    %v1808 = vsel %vm961, %v1749, %v1751
    %v1809 = vsel %vm961, %v1753, %v1755
    %v1810 = vsel %vm961, %v1757, %v1759
    %v1811 = vsel %vm961, %v1761, %v1763
    %v1812 = vsel %vm961, %v1765, %v1767
    %v1813 = vsel %vm961, %v1769, %v1771
    %v1814 = vsel %vm961, %v1773, %v1775
    %v1815 = vsel %vm961, %v1777, %v1779
    %v1816 = vsel %vm961, %v1781, %v1783
    %v1817 = vsel %vm961, %v1785, %v1787
    %v1818 = vsel %vm961, %v1789, %v1791
    %v1819 = vsel %vm961, %v1793, %v1795
    %v1868 = vadd.f32 %v1034, %v1796
    %v1869 = vadd.f32 %v1035, %v1703
    %v1870 = vadd.f32 %v1036, %v1797
    %v1871 = vadd.f32 %v1037, %v1707
    %v1872 = vadd.f32 %v1038, %v1798
    %v1873 = vadd.f32 %v1039, %v1711
    %v1874 = vadd.f32 %v1040, %v1799
    %v1875 = vadd.f32 %v1041, %v1715
    %v1876 = vadd.f32 %v1042, %v1800
    %v1877 = vadd.f32 %v1043, %v1719
    %v1878 = vadd.f32 %v1044, %v1801
    %v1879 = vadd.f32 %v1045, %v1723
    %v1880 = vadd.f32 %v1046, %v1802
    %v1881 = vadd.f32 %v1047, %v1727
    %v1882 = vadd.f32 %v1048, %v1803
    %v1883 = vadd.f32 %v1049, %v1731
    %v1884 = vadd.f32 %v1050, %v1804
    %v1885 = vadd.f32 %v1051, %v1735
    %v1886 = vadd.f32 %v1052, %v1805
    %v1887 = vadd.f32 %v1053, %v1739
    %v1888 = vadd.f32 %v1054, %v1806
    %v1889 = vadd.f32 %v1055, %v1743
    %v1890 = vadd.f32 %v1056, %v1807
    %v1891 = vadd.f32 %v1057, %v1747
    %v1892 = vadd.f32 %v1058, %v1808
    %v1893 = vadd.f32 %v1059, %v1751
    %v1894 = vadd.f32 %v1060, %v1809
    %v1895 = vadd.f32 %v1061, %v1755
    %v1896 = vadd.f32 %v1062, %v1810
    %v1897 = vadd.f32 %v1063, %v1759
    %v1898 = vadd.f32 %v1064, %v1811
    %v1899 = vadd.f32 %v1065, %v1763
    %v1900 = vadd.f32 %v1066, %v1812
    %v1901 = vadd.f32 %v1067, %v1767
    %v1902 = vadd.f32 %v1068, %v1813
    %v1903 = vadd.f32 %v1069, %v1771
    %v1904 = vadd.f32 %v1070, %v1814
    %v1905 = vadd.f32 %v1071, %v1775
    %v1906 = vadd.f32 %v1072, %v1815
    %v1907 = vadd.f32 %v1073, %v1779
    %v1908 = vadd.f32 %v1074, %v1816
    %v1909 = vadd.f32 %v1075, %v1783
    %v1910 = vadd.f32 %v1076, %v1817
    %v1911 = vadd.f32 %v1077, %v1787
    %v1912 = vadd.f32 %v1078, %v1818
    %v1913 = vadd.f32 %v1079, %v1791
    %v1914 = vadd.f32 %v1080, %v1819
    %v1915 = vadd.f32 %v1081, %v1795
    %v1916 = vld [vmem:[#allocation2] sm:$0xfc]
    %v1917 = vld [vmem:[#allocation2 + $0x8] sm:$0xfc]
    %v1918 = vld [vmem:[#allocation2 + $0x40] sm:$0x3]
    %v1919 = vld [vmem:[#allocation2 + $0x48] sm:$0x3]
    %v1920 = vld [vmem:[#allocation2 + $0x50] sm:$0xfc]
    %v1921 = vld [vmem:[#allocation2 + $0x58] sm:$0xfc]
    %v1922 = vld [vmem:[#allocation2 + $0x90] sm:$0x3]
    %v1923 = vld [vmem:[#allocation2 + $0x98] sm:$0x3]
    %v1924 = vld [vmem:[#allocation2 + $0xa0] sm:$0xfc]
    %v1925 = vld [vmem:[#allocation2 + $0xa8] sm:$0xfc]
    %v1926 = vld [vmem:[#allocation2 + $0xe0] sm:$0x3]
    %v1927 = vld [vmem:[#allocation2 + $0xe8] sm:$0x3]
    %v1928 = vld [vmem:[#allocation2 + $0xf0] sm:$0xfc]
    %v1929 = vld [vmem:[#allocation2 + $0xf8] sm:$0xfc]
    %v1930 = vld [vmem:[#allocation2 + $0x130] sm:$0x3]
    %v1931 = vld [vmem:[#allocation2 + $0x138] sm:$0x3]
    %v1932 = vld [vmem:[#allocation2 + $0x140] sm:$0xfc]
    %v1933 = vld [vmem:[#allocation2 + $0x148] sm:$0xfc]
    %v1934 = vld [vmem:[#allocation2 + $0x180] sm:$0x3]
    %v1935 = vld [vmem:[#allocation2 + $0x188] sm:$0x3]
    %v1936 = vld [vmem:[#allocation2 + $0x190] sm:$0xfc]
    %v1937 = vld [vmem:[#allocation2 + $0x198] sm:$0xfc]
    %v1938 = vld [vmem:[#allocation2 + $0x1d0] sm:$0x3]
    %v1939 = vld [vmem:[#allocation2 + $0x1d8] sm:$0x3]
    %vm1940 = vcmask 1040384
    %v1941 = vrot.slane %v23, 7
    %v1942 = vrot.slane %v24, 7
    %v1943 = vrot.slane %v25, 7
    %v1944 = vsel %vm1940, %v1941, %v1943
    %v1945 = vrot.slane %v26, 7
    %v1946 = vsel %vm1940, %v1942, %v1945
    %v1947 = vrot.slane %v27, 7
    %v1948 = vsel %vm1940, %v1943, %v1947
    %v1949 = vrot.slane %v28, 7
    %v1950 = vsel %vm1940, %v1945, %v1949
    %v1951 = vrot.slane %v29, 7
    %v1952 = vsel %vm1940, %v1947, %v1951
    %v1953 = vrot.slane %v30, 7
    %v1954 = vsel %vm1940, %v1949, %v1953
    %v1955 = vrot.slane %v31, 7
    %v1956 = vsel %vm1940, %v1951, %v1955
    %v1957 = vrot.slane %v32, 7
    %v1958 = vsel %vm1940, %v1953, %v1957
    %v1959 = vrot.slane %v33, 7
    %v1960 = vrot.slane %v34, 7
    %v1961 = vrot.slane %v35, 7
    %v1962 = vsel %vm1940, %v1959, %v1961
    %v1963 = vrot.slane %v36, 7
    %v1964 = vsel %vm1940, %v1960, %v1963
    %v1965 = vrot.slane %v37, 7
    %v1966 = vsel %vm1940, %v1961, %v1965
    %v1967 = vrot.slane %v38, 7
    %v1968 = vsel %vm1940, %v1963, %v1967
    %v1969 = vrot.slane %v39, 7
    %v1970 = vsel %vm1940, %v1965, %v1969
    %v1971 = vrot.slane %v40, 7
    %v1972 = vsel %vm1940, %v1967, %v1971
    %v1973 = vrot.slane %v41, 7
    %v1974 = vsel %vm1940, %v1969, %v1973
    %v1975 = vrot.slane %v42, 7
    %v1976 = vsel %vm1940, %v1971, %v1975
    %v1977 = vrot.slane %v43, 7
    %v1978 = vrot.slane %v44, 7
    %v1979 = vrot.slane %v45, 7
    %v1980 = vsel %vm1940, %v1977, %v1979
    %v1981 = vrot.slane %v46, 7
    %v1982 = vsel %vm1940, %v1978, %v1981
    %v1983 = vrot.slane %v47, 7
    %v1984 = vsel %vm1940, %v1979, %v1983
    %v1985 = vrot.slane %v48, 7
    %v1986 = vsel %vm1940, %v1981, %v1985
    %v1987 = vrot.slane %v49, 7
    %v1988 = vsel %vm1940, %v1983, %v1987
    %v1989 = vrot.slane %v50, 7
    %v1990 = vsel %vm1940, %v1985, %v1989
    %v1991 = vrot.slane %v51, 7
    %v1992 = vsel %vm1940, %v1987, %v1991
    %v1993 = vrot.slane %v52, 7
    %v1994 = vsel %vm1940, %v1989, %v1993
    %v1995 = vrot.slane %v53, 7
    %v1996 = vrot.slane %v54, 7
    %v1997 = vrot.slane %v55, 7
    %v1998 = vsel %vm1940, %v1995, %v1997
    %v1999 = vrot.slane %v56, 7
    %v2000 = vsel %vm1940, %v1996, %v1999
    %v2001 = vrot.slane %v57, 7
    %v2002 = vsel %vm1940, %v1997, %v2001
    %v2003 = vrot.slane %v58, 7
    %v2004 = vsel %vm1940, %v1999, %v2003
    %v2005 = vrot.slane %v59, 7
    %v2006 = vsel %vm1940, %v2001, %v2005
    %v2007 = vrot.slane %v60, 7
    %v2008 = vsel %vm1940, %v2003, %v2007
    %v2009 = vrot.slane %v61, 7
    %v2010 = vsel %vm1940, %v2005, %v2009
    %v2011 = vrot.slane %v62, 7
    %v2012 = vsel %vm1940, %v2007, %v2011
    %v2013 = vrot.slane %v63, 7
    %v2014 = vrot.slane %v64, 7
    %v2015 = vrot.slane %v65, 7
    %v2016 = vsel %vm1940, %v2013, %v2015
    %v2017 = vrot.slane %v66, 7
    %v2018 = vsel %vm1940, %v2014, %v2017
    %v2019 = vrot.slane %v67, 7
    %v2020 = vsel %vm1940, %v2015, %v2019
    %v2021 = vrot.slane %v68, 7
    %v2022 = vsel %vm1940, %v2017, %v2021
    %v2023 = vrot.slane %v69, 7
    %v2024 = vsel %vm1940, %v2019, %v2023
    %v2025 = vrot.slane %v70, 7
    %v2026 = vsel %vm1940, %v2021, %v2025
    %v2027 = vrot.slane %v71, 7
    %v2028 = vsel %vm1940, %v2023, %v2027
    %v2029 = vrot.slane %v72, 7
    %v2030 = vsel %vm1940, %v2025, %v2029
    %v2031 = vrot.slane %v73, 7
    %v2032 = vrot.slane %v74, 7
    %v2033 = vrot.slane %v75, 7
    %v2034 = vsel %vm1940, %v2031, %v2033
    %v2035 = vrot.slane %v76, 7
    %v2036 = vsel %vm1940, %v2032, %v2035
    %v2037 = vrot.slane %v77, 7
    %v2038 = vsel %vm1940, %v2033, %v2037
    %v2039 = vrot.slane %v78, 7
    %v2040 = vsel %vm1940, %v2035, %v2039
    %v2041 = vrot.slane %v79, 7
    %v2042 = vsel %vm1940, %v2037, %v2041
    %v2043 = vrot.slane %v80, 7
    %v2044 = vsel %vm1940, %v2039, %v2043
    %v2045 = vrot.slane %v81, 7
    %v2046 = vsel %vm1940, %v2041, %v2045
    %v2047 = vrot.slane %v82, 7
    %v2048 = vsel %vm1940, %v2043, %v2047
    %2049 = vrot.lane.b32.xlu0 %v1941, 1
    %v2050 = vpop.permute.xlu0 %2049
    %2051 = vrot.lane.b32.xlu0 %v1942, 1
    %v2052 = vpop.permute.xlu0 %2051
    %2053 = vrot.lane.b32.xlu0 %v1944, 1
    %v2054 = vpop.permute.xlu0 %2053
    %2055 = vrot.lane.b32.xlu0 %v1946, 1
    %v2056 = vpop.permute.xlu0 %2055
    %2057 = vrot.lane.b32.xlu0 %v1948, 1
    %v2058 = vpop.permute.xlu0 %2057
    %2059 = vrot.lane.b32.xlu0 %v1950, 1
    %v2060 = vpop.permute.xlu0 %2059
    %2061 = vrot.lane.b32.xlu0 %v1952, 1
    %v2062 = vpop.permute.xlu0 %2061
    %2063 = vrot.lane.b32.xlu0 %v1954, 1
    %v2064 = vpop.permute.xlu0 %2063
    %2065 = vrot.lane.b32.xlu0 %v1956, 1
    %v2066 = vpop.permute.xlu0 %2065
    %2067 = vrot.lane.b32.xlu0 %v1958, 1
    %v2068 = vpop.permute.xlu0 %2067
    %2069 = vrot.lane.b32.xlu0 %v1959, 1
    %v2070 = vpop.permute.xlu0 %2069
    %2071 = vrot.lane.b32.xlu0 %v1960, 1
    %v2072 = vpop.permute.xlu0 %2071
    %2073 = vrot.lane.b32.xlu0 %v1962, 1
    %v2074 = vpop.permute.xlu0 %2073
    %2075 = vrot.lane.b32.xlu0 %v1964, 1
    %v2076 = vpop.permute.xlu0 %2075
    %2077 = vrot.lane.b32.xlu0 %v1966, 1
    %v2078 = vpop.permute.xlu0 %2077
    %2079 = vrot.lane.b32.xlu0 %v1968, 1
    %v2080 = vpop.permute.xlu0 %2079
    %2081 = vrot.lane.b32.xlu0 %v1970, 1
    %v2082 = vpop.permute.xlu0 %2081
    %2083 = vrot.lane.b32.xlu0 %v1972, 1
    %v2084 = vpop.permute.xlu0 %2083
    %2085 = vrot.lane.b32.xlu0 %v1974, 1
    %v2086 = vpop.permute.xlu0 %2085
    %2087 = vrot.lane.b32.xlu0 %v1976, 1
    %v2088 = vpop.permute.xlu0 %2087
    %2089 = vrot.lane.b32.xlu0 %v1977, 1
    %v2090 = vpop.permute.xlu0 %2089
    %2091 = vrot.lane.b32.xlu0 %v1978, 1
    %v2092 = vpop.permute.xlu0 %2091
    %2093 = vrot.lane.b32.xlu0 %v1980, 1
    %v2094 = vpop.permute.xlu0 %2093
    %2095 = vrot.lane.b32.xlu0 %v1982, 1
    %v2096 = vpop.permute.xlu0 %2095
    %2097 = vrot.lane.b32.xlu0 %v1984, 1
    %v2098 = vpop.permute.xlu0 %2097
    %2099 = vrot.lane.b32.xlu0 %v1986, 1
    %v2100 = vpop.permute.xlu0 %2099
    %2101 = vrot.lane.b32.xlu0 %v1988, 1
    %v2102 = vpop.permute.xlu0 %2101
    %2103 = vrot.lane.b32.xlu0 %v1990, 1
    %v2104 = vpop.permute.xlu0 %2103
    %2105 = vrot.lane.b32.xlu0 %v1992, 1
    %v2106 = vpop.permute.xlu0 %2105
    %2107 = vrot.lane.b32.xlu0 %v1994, 1
    %v2108 = vpop.permute.xlu0 %2107
    %2109 = vrot.lane.b32.xlu0 %v1995, 1
    %v2110 = vpop.permute.xlu0 %2109
    %2111 = vrot.lane.b32.xlu0 %v1996, 1
    %v2112 = vpop.permute.xlu0 %2111
    %2113 = vrot.lane.b32.xlu0 %v1998, 1
    %v2114 = vpop.permute.xlu0 %2113
    %2115 = vrot.lane.b32.xlu0 %v2000, 1
    %v2116 = vpop.permute.xlu0 %2115
    %2117 = vrot.lane.b32.xlu0 %v2002, 1
    %v2118 = vpop.permute.xlu0 %2117
    %2119 = vrot.lane.b32.xlu0 %v2004, 1
    %v2120 = vpop.permute.xlu0 %2119
    %2121 = vrot.lane.b32.xlu0 %v2006, 1
    %v2122 = vpop.permute.xlu0 %2121
    %2123 = vrot.lane.b32.xlu0 %v2008, 1
    %v2124 = vpop.permute.xlu0 %2123
    %2125 = vrot.lane.b32.xlu0 %v2010, 1
    %v2126 = vpop.permute.xlu0 %2125
    %2127 = vrot.lane.b32.xlu0 %v2012, 1
    %v2128 = vpop.permute.xlu0 %2127
    %2129 = vrot.lane.b32.xlu0 %v2013, 1
    %v2130 = vpop.permute.xlu0 %2129
    %2131 = vrot.lane.b32.xlu0 %v2014, 1
    %v2132 = vpop.permute.xlu0 %2131
    %2133 = vrot.lane.b32.xlu0 %v2016, 1
    %v2134 = vpop.permute.xlu0 %2133
    %2135 = vrot.lane.b32.xlu0 %v2018, 1
    %v2136 = vpop.permute.xlu0 %2135
    %2137 = vrot.lane.b32.xlu0 %v2020, 1
    %v2138 = vpop.permute.xlu0 %2137
    %2139 = vrot.lane.b32.xlu0 %v2022, 1
    %v2140 = vpop.permute.xlu0 %2139
    %2141 = vrot.lane.b32.xlu0 %v2024, 1
    %v2142 = vpop.permute.xlu0 %2141
    %2143 = vrot.lane.b32.xlu0 %v2026, 1
    %v2144 = vpop.permute.xlu0 %2143
    %2145 = vrot.lane.b32.xlu0 %v2028, 1
    %v2146 = vpop.permute.xlu0 %2145
    %2147 = vrot.lane.b32.xlu0 %v2030, 1
    %v2148 = vpop.permute.xlu0 %2147
    %2149 = vrot.lane.b32.xlu0 %v2031, 1
    %v2150 = vpop.permute.xlu0 %2149
    %2151 = vrot.lane.b32.xlu0 %v2032, 1
    %v2152 = vpop.permute.xlu0 %2151
    %2153 = vrot.lane.b32.xlu0 %v2034, 1
    %v2154 = vpop.permute.xlu0 %2153
    %2155 = vrot.lane.b32.xlu0 %v2036, 1
    %v2156 = vpop.permute.xlu0 %2155
    %2157 = vrot.lane.b32.xlu0 %v2038, 1
    %v2158 = vpop.permute.xlu0 %2157
    %2159 = vrot.lane.b32.xlu0 %v2040, 1
    %v2160 = vpop.permute.xlu0 %2159
    %2161 = vrot.lane.b32.xlu0 %v2042, 1
    %v2162 = vpop.permute.xlu0 %2161
    %2163 = vrot.lane.b32.xlu0 %v2044, 1
    %v2164 = vpop.permute.xlu0 %2163
    %2165 = vrot.lane.b32.xlu0 %v2046, 1
    %v2166 = vpop.permute.xlu0 %2165
    %2167 = vrot.lane.b32.xlu0 %v2048, 1
    %v2168 = vpop.permute.xlu0 %2167
    %v2169 = vsel %vm552, %v2050, %v2052
    %v2170 = vsel %vm552, %v2054, %v2056
    %v2171 = vsel %vm552, %v2058, %v2060
    %v2172 = vsel %vm552, %v2062, %v2064
    %v2173 = vsel %vm552, %v2066, %v2068
    %v2174 = vsel %vm552, %v2070, %v2072
    %v2175 = vsel %vm552, %v2074, %v2076
    %v2176 = vsel %vm552, %v2078, %v2080
    %v2177 = vsel %vm552, %v2082, %v2084
    %v2178 = vsel %vm552, %v2086, %v2088
    %v2179 = vsel %vm552, %v2090, %v2092
    %v2180 = vsel %vm552, %v2094, %v2096
    %v2181 = vsel %vm552, %v2098, %v2100
    %v2182 = vsel %vm552, %v2102, %v2104
    %v2183 = vsel %vm552, %v2106, %v2108
    %v2184 = vsel %vm552, %v2110, %v2112
    %v2185 = vsel %vm552, %v2114, %v2116
    %v2186 = vsel %vm552, %v2118, %v2120
    %v2187 = vsel %vm552, %v2122, %v2124
    %v2188 = vsel %vm552, %v2126, %v2128
    %v2189 = vsel %vm552, %v2130, %v2132
    %v2190 = vsel %vm552, %v2134, %v2136
    %v2191 = vsel %vm552, %v2138, %v2140
    %v2192 = vsel %vm552, %v2142, %v2144
    %v2193 = vsel %vm552, %v2146, %v2148
    %v2194 = vsel %vm552, %v2150, %v2152
    %v2195 = vsel %vm552, %v2154, %v2156
    %v2196 = vsel %vm552, %v2158, %v2160
    %v2197 = vsel %vm552, %v2162, %v2164
    %v2198 = vsel %vm552, %v2166, %v2168
    %vm2259 = vcmp.ge.f32.partialorder %v1916, %v2050
    %vm2260 = vcmp.ge.f32.partialorder %v1917, %v2169
    %vm2261 = vcmp.ge.f32.partialorder %v25, %v2054
    %vm2262 = vcmp.ge.f32.partialorder %v26, %v2170
    %vm2263 = vcmp.ge.f32.partialorder %v27, %v2058
    %vm2264 = vcmp.ge.f32.partialorder %v28, %v2171
    %vm2265 = vcmp.ge.f32.partialorder %v29, %v2062
    %vm2266 = vcmp.ge.f32.partialorder %v30, %v2172
    %vm2267 = vcmp.ge.f32.partialorder %v1918, %v2066
    %vm2268 = vcmp.ge.f32.partialorder %v1919, %v2173
    %vm2269 = vcmp.ge.f32.partialorder %v1920, %v2070
    %vm2270 = vcmp.ge.f32.partialorder %v1921, %v2174
    %vm2271 = vcmp.ge.f32.partialorder %v35, %v2074
    %vm2272 = vcmp.ge.f32.partialorder %v36, %v2175
    %vm2273 = vcmp.ge.f32.partialorder %v37, %v2078
    %vm2274 = vcmp.ge.f32.partialorder %v38, %v2176
    %vm2275 = vcmp.ge.f32.partialorder %v39, %v2082
    %vm2276 = vcmp.ge.f32.partialorder %v40, %v2177
    %vm2277 = vcmp.ge.f32.partialorder %v1922, %v2086
    %vm2278 = vcmp.ge.f32.partialorder %v1923, %v2178
    %vm2279 = vcmp.ge.f32.partialorder %v1924, %v2090
    %vm2280 = vcmp.ge.f32.partialorder %v1925, %v2179
    %vm2281 = vcmp.ge.f32.partialorder %v45, %v2094
    %vm2282 = vcmp.ge.f32.partialorder %v46, %v2180
    %vm2283 = vcmp.ge.f32.partialorder %v47, %v2098
    %vm2284 = vcmp.ge.f32.partialorder %v48, %v2181
    %vm2285 = vcmp.ge.f32.partialorder %v49, %v2102
    %vm2286 = vcmp.ge.f32.partialorder %v50, %v2182
    %vm2287 = vcmp.ge.f32.partialorder %v1926, %v2106
    %vm2288 = vcmp.ge.f32.partialorder %v1927, %v2183
    %vm2289 = vcmp.ge.f32.partialorder %v1928, %v2110
    %vm2290 = vcmp.ge.f32.partialorder %v1929, %v2184
    %vm2291 = vcmp.ge.f32.partialorder %v55, %v2114
    %vm2292 = vcmp.ge.f32.partialorder %v56, %v2185
    %vm2293 = vcmp.ge.f32.partialorder %v57, %v2118
    %vm2294 = vcmp.ge.f32.partialorder %v58, %v2186
    %vm2295 = vcmp.ge.f32.partialorder %v59, %v2122
    %vm2296 = vcmp.ge.f32.partialorder %v60, %v2187
    %vm2297 = vcmp.ge.f32.partialorder %v1930, %v2126
    %vm2298 = vcmp.ge.f32.partialorder %v1931, %v2188
    %vm2299 = vcmp.ge.f32.partialorder %v1932, %v2130
    %vm2300 = vcmp.ge.f32.partialorder %v1933, %v2189
    %vm2301 = vcmp.ge.f32.partialorder %v65, %v2134
    %vm2302 = vcmp.ge.f32.partialorder %v66, %v2190
    %vm2303 = vcmp.ge.f32.partialorder %v67, %v2138
    %vm2304 = vcmp.ge.f32.partialorder %v68, %v2191
    %vm2305 = vcmp.ge.f32.partialorder %v69, %v2142
    %vm2306 = vcmp.ge.f32.partialorder %v70, %v2192
    %vm2307 = vcmp.ge.f32.partialorder %v1934, %v2146
    %vm2308 = vcmp.ge.f32.partialorder %v1935, %v2193
    %vm2309 = vcmp.ge.f32.partialorder %v1936, %v2150
    %vm2310 = vcmp.ge.f32.partialorder %v1937, %v2194
    %vm2311 = vcmp.ge.f32.partialorder %v75, %v2154
    %vm2312 = vcmp.ge.f32.partialorder %v76, %v2195
    %vm2313 = vcmp.ge.f32.partialorder %v77, %v2158
    %vm2314 = vcmp.ge.f32.partialorder %v78, %v2196
    %vm2315 = vcmp.ge.f32.partialorder %v79, %v2162
    %vm2316 = vcmp.ge.f32.partialorder %v80, %v2197
    %vm2317 = vcmp.ge.f32.partialorder %v1938, %v2166
    %vm2318 = vcmp.ge.f32.partialorder %v1939, %v2198
    %v2319 = vsel %vm2259, 1, 0
    %v2320 = vsel %vm2260, 1, 0
    %v2321 = vsel %vm2261, 1, 0
    %v2322 = vsel %vm2262, 1, 0
    %v2323 = vsel %vm2263, 1, 0
    %v2324 = vsel %vm2264, 1, 0
    %v2325 = vsel %vm2265, 1, 0
    %v2326 = vsel %vm2266, 1, 0
    %v2327 = vsel %vm2267, 1, 0
    %v2328 = vsel %vm2268, 1, 0
    %v2329 = vsel %vm2269, 1, 0
    %v2330 = vsel %vm2270, 1, 0
    %v2331 = vsel %vm2271, 1, 0
    %v2332 = vsel %vm2272, 1, 0
    %v2333 = vsel %vm2273, 1, 0
    %v2334 = vsel %vm2274, 1, 0
    %v2335 = vsel %vm2275, 1, 0
    %v2336 = vsel %vm2276, 1, 0
    %v2337 = vsel %vm2277, 1, 0
    %v2338 = vsel %vm2278, 1, 0
    %v2339 = vsel %vm2279, 1, 0
    %v2340 = vsel %vm2280, 1, 0
    %v2341 = vsel %vm2281, 1, 0
    %v2342 = vsel %vm2282, 1, 0
    %v2343 = vsel %vm2283, 1, 0
    %v2344 = vsel %vm2284, 1, 0
    %v2345 = vsel %vm2285, 1, 0
    %v2346 = vsel %vm2286, 1, 0
    %v2347 = vsel %vm2287, 1, 0
    %v2348 = vsel %vm2288, 1, 0
    %v2349 = vsel %vm2289, 1, 0
    %v2350 = vsel %vm2290, 1, 0
    %v2351 = vsel %vm2291, 1, 0
    %v2352 = vsel %vm2292, 1, 0
    %v2353 = vsel %vm2293, 1, 0
    %v2354 = vsel %vm2294, 1, 0
    %v2355 = vsel %vm2295, 1, 0
    %v2356 = vsel %vm2296, 1, 0
    %v2357 = vsel %vm2297, 1, 0
    %v2358 = vsel %vm2298, 1, 0
    %v2359 = vsel %vm2299, 1, 0
    %v2360 = vsel %vm2300, 1, 0
    %v2361 = vsel %vm2301, 1, 0
    %v2362 = vsel %vm2302, 1, 0
    %v2363 = vsel %vm2303, 1, 0
    %v2364 = vsel %vm2304, 1, 0
    %v2365 = vsel %vm2305, 1, 0
    %v2366 = vsel %vm2306, 1, 0
    %v2367 = vsel %vm2307, 1, 0
    %v2368 = vsel %vm2308, 1, 0
    %v2369 = vsel %vm2309, 1, 0
    %v2370 = vsel %vm2310, 1, 0
    %v2371 = vsel %vm2311, 1, 0
    %v2372 = vsel %vm2312, 1, 0
    %v2373 = vsel %vm2313, 1, 0
    %v2374 = vsel %vm2314, 1, 0
    %v2375 = vsel %vm2315, 1, 0
    %v2376 = vsel %vm2316, 1, 0
    %v2377 = vsel %vm2317, 1, 0
    %v2378 = vsel %vm2318, 1, 0
    %v2379 = vcvt.s32.f32 %v2319
    %v2380 = vcvt.s32.f32 %v2320
    %v2381 = vcvt.s32.f32 %v2321
    %v2382 = vcvt.s32.f32 %v2322
    %v2383 = vcvt.s32.f32 %v2323
    %v2384 = vcvt.s32.f32 %v2324
    %v2385 = vcvt.s32.f32 %v2325
    %v2386 = vcvt.s32.f32 %v2326
    %v2387 = vcvt.s32.f32 %v2327
    %v2388 = vcvt.s32.f32 %v2328
    %v2389 = vcvt.s32.f32 %v2329
    %v2390 = vcvt.s32.f32 %v2330
    %v2391 = vcvt.s32.f32 %v2331
    %v2392 = vcvt.s32.f32 %v2332
    %v2393 = vcvt.s32.f32 %v2333
    %v2394 = vcvt.s32.f32 %v2334
    %v2395 = vcvt.s32.f32 %v2335
    %v2396 = vcvt.s32.f32 %v2336
    %v2397 = vcvt.s32.f32 %v2337
    %v2398 = vcvt.s32.f32 %v2338
    %v2399 = vcvt.s32.f32 %v2339
    %v2400 = vcvt.s32.f32 %v2340
    %v2401 = vcvt.s32.f32 %v2341
    %v2402 = vcvt.s32.f32 %v2342
    %v2403 = vcvt.s32.f32 %v2343
    %v2404 = vcvt.s32.f32 %v2344
    %v2405 = vcvt.s32.f32 %v2345
    %v2406 = vcvt.s32.f32 %v2346
    %v2407 = vcvt.s32.f32 %v2347
    %v2408 = vcvt.s32.f32 %v2348
    %v2409 = vcvt.s32.f32 %v2349
    %v2410 = vcvt.s32.f32 %v2350
    %v2411 = vcvt.s32.f32 %v2351
    %v2412 = vcvt.s32.f32 %v2352
    %v2413 = vcvt.s32.f32 %v2353
    %v2414 = vcvt.s32.f32 %v2354
    %v2415 = vcvt.s32.f32 %v2355
    %v2416 = vcvt.s32.f32 %v2356
    %v2417 = vcvt.s32.f32 %v2357
    %v2418 = vcvt.s32.f32 %v2358
    %v2419 = vcvt.s32.f32 %v2359
    %v2420 = vcvt.s32.f32 %v2360
    %v2421 = vcvt.s32.f32 %v2361
    %v2422 = vcvt.s32.f32 %v2362
    %v2423 = vcvt.s32.f32 %v2363
    %v2424 = vcvt.s32.f32 %v2364
    %v2425 = vcvt.s32.f32 %v2365
    %v2426 = vcvt.s32.f32 %v2366
    %v2427 = vcvt.s32.f32 %v2367
    %v2428 = vcvt.s32.f32 %v2368
    %v2429 = vcvt.s32.f32 %v2369
    %v2430 = vcvt.s32.f32 %v2370
    %v2431 = vcvt.s32.f32 %v2371
    %v2432 = vcvt.s32.f32 %v2372
    %v2433 = vcvt.s32.f32 %v2373
    %v2434 = vcvt.s32.f32 %v2374
    %v2435 = vcvt.s32.f32 %v2375
    %v2436 = vcvt.s32.f32 %v2376
    %v2437 = vcvt.s32.f32 %v2377
    %v2438 = vcvt.s32.f32 %v2378
    %v2439 = vmul.f32 %v2379, 8.0
    %v2440 = vmul.f32 %v2380, 8.0
    %v2441 = vmul.f32 %v2381, 8.0
    %v2442 = vmul.f32 %v2382, 8.0
    %v2443 = vmul.f32 %v2383, 8.0
    %v2444 = vmul.f32 %v2384, 8.0
    %v2445 = vmul.f32 %v2385, 8.0
    %v2446 = vmul.f32 %v2386, 8.0
    %v2447 = vmul.f32 %v2387, 8.0
    %v2448 = vmul.f32 %v2388, 8.0
    %v2449 = vmul.f32 %v2389, 8.0
    %v2450 = vmul.f32 %v2390, 8.0
    %v2451 = vmul.f32 %v2391, 8.0
    %v2452 = vmul.f32 %v2392, 8.0
    %v2453 = vmul.f32 %v2393, 8.0
    %v2454 = vmul.f32 %v2394, 8.0
    %v2455 = vmul.f32 %v2395, 8.0
    %v2456 = vmul.f32 %v2396, 8.0
    %v2457 = vmul.f32 %v2397, 8.0
    %v2458 = vmul.f32 %v2398, 8.0
    %v2459 = vmul.f32 %v2399, 8.0
    %v2460 = vmul.f32 %v2400, 8.0
    %v2461 = vmul.f32 %v2401, 8.0
    %v2462 = vmul.f32 %v2402, 8.0
    %v2463 = vmul.f32 %v2403, 8.0
    %v2464 = vmul.f32 %v2404, 8.0
    %v2465 = vmul.f32 %v2405, 8.0
    %v2466 = vmul.f32 %v2406, 8.0
    %v2467 = vmul.f32 %v2407, 8.0
    %v2468 = vmul.f32 %v2408, 8.0
    %v2469 = vmul.f32 %v2409, 8.0
    %v2470 = vmul.f32 %v2410, 8.0
    %v2471 = vmul.f32 %v2411, 8.0
    %v2472 = vmul.f32 %v2412, 8.0
    %v2473 = vmul.f32 %v2413, 8.0
    %v2474 = vmul.f32 %v2414, 8.0
    %v2475 = vmul.f32 %v2415, 8.0
    %v2476 = vmul.f32 %v2416, 8.0
    %v2477 = vmul.f32 %v2417, 8.0
    %v2478 = vmul.f32 %v2418, 8.0
    %v2479 = vmul.f32 %v2419, 8.0
    %v2480 = vmul.f32 %v2420, 8.0
    %v2481 = vmul.f32 %v2421, 8.0
    %v2482 = vmul.f32 %v2422, 8.0
    %v2483 = vmul.f32 %v2423, 8.0
    %v2484 = vmul.f32 %v2424, 8.0
    %v2485 = vmul.f32 %v2425, 8.0
    %v2486 = vmul.f32 %v2426, 8.0
    %v2487 = vmul.f32 %v2427, 8.0
    %v2488 = vmul.f32 %v2428, 8.0
    %v2489 = vmul.f32 %v2429, 8.0
    %v2490 = vmul.f32 %v2430, 8.0
    %v2491 = vmul.f32 %v2431, 8.0
    %v2492 = vmul.f32 %v2432, 8.0
    %v2493 = vmul.f32 %v2433, 8.0
    %v2494 = vmul.f32 %v2434, 8.0
    %v2495 = vmul.f32 %v2435, 8.0
    %v2496 = vmul.f32 %v2436, 8.0
    %v2497 = vmul.f32 %v2437, 8.0
    %v2498 = vmul.f32 %v2438, 8.0
    %vm2559 = vcmask 1045504
    %v2560 = vrot.slane %v2439, 2
    %v2561 = vrot.slane %v2441, 2
    %v2562 = vsel %vm2559, %v2560, %v2561
    %v2563 = vrot.slane %v2440, 2
    %v2564 = vrot.slane %v2442, 2
    %v2565 = vsel %vm2559, %v2563, %v2564
    %v2566 = vrot.slane %v2443, 2
    %v2567 = vsel %vm2559, %v2561, %v2566
    %v2568 = vrot.slane %v2444, 2
    %v2569 = vsel %vm2559, %v2564, %v2568
    %v2570 = vrot.slane %v2445, 2
    %v2571 = vsel %vm2559, %v2566, %v2570
    %v2572 = vrot.slane %v2446, 2
    %v2573 = vsel %vm2559, %v2568, %v2572
    %v2574 = vrot.slane %v2447, 2
    %v2575 = vsel %vm2559, %v2570, %v2574
    %v2576 = vrot.slane %v2448, 2
    %v2577 = vsel %vm2559, %v2572, %v2576
    %v2578 = vrot.slane %v2449, 2
    %v2579 = vrot.slane %v2451, 2
    %v2580 = vsel %vm2559, %v2578, %v2579
    %v2581 = vrot.slane %v2450, 2
    %v2582 = vrot.slane %v2452, 2
    %v2583 = vsel %vm2559, %v2581, %v2582
    %v2584 = vrot.slane %v2453, 2
    %v2585 = vsel %vm2559, %v2579, %v2584
    %v2586 = vrot.slane %v2454, 2
    %v2587 = vsel %vm2559, %v2582, %v2586
    %v2588 = vrot.slane %v2455, 2
    %v2589 = vsel %vm2559, %v2584, %v2588
    %v2590 = vrot.slane %v2456, 2
    %v2591 = vsel %vm2559, %v2586, %v2590
    %v2592 = vrot.slane %v2457, 2
    %v2593 = vsel %vm2559, %v2588, %v2592
    %v2594 = vrot.slane %v2458, 2
    %v2595 = vsel %vm2559, %v2590, %v2594
    %v2596 = vrot.slane %v2459, 2
    %v2597 = vrot.slane %v2461, 2
    %v2598 = vsel %vm2559, %v2596, %v2597
    %v2599 = vrot.slane %v2460, 2
    %v2600 = vrot.slane %v2462, 2
    %v2601 = vsel %vm2559, %v2599, %v2600
    %v2602 = vrot.slane %v2463, 2
    %v2603 = vsel %vm2559, %v2597, %v2602
    %v2604 = vrot.slane %v2464, 2
    %v2605 = vsel %vm2559, %v2600, %v2604
    %v2606 = vrot.slane %v2465, 2
    %v2607 = vsel %vm2559, %v2602, %v2606
    %v2608 = vrot.slane %v2466, 2
    %v2609 = vsel %vm2559, %v2604, %v2608
    %v2610 = vrot.slane %v2467, 2
    %v2611 = vsel %vm2559, %v2606, %v2610
    %v2612 = vrot.slane %v2468, 2
    %v2613 = vsel %vm2559, %v2608, %v2612
    %v2614 = vrot.slane %v2469, 2
    %v2615 = vrot.slane %v2471, 2
    %v2616 = vsel %vm2559, %v2614, %v2615
    %v2617 = vrot.slane %v2470, 2
    %v2618 = vrot.slane %v2472, 2
    %v2619 = vsel %vm2559, %v2617, %v2618
    %v2620 = vrot.slane %v2473, 2
    %v2621 = vsel %vm2559, %v2615, %v2620
    %v2622 = vrot.slane %v2474, 2
    %v2623 = vsel %vm2559, %v2618, %v2622
    %v2624 = vrot.slane %v2475, 2
    %v2625 = vsel %vm2559, %v2620, %v2624
    %v2626 = vrot.slane %v2476, 2
    %v2627 = vsel %vm2559, %v2622, %v2626
    %v2628 = vrot.slane %v2477, 2
    %v2629 = vsel %vm2559, %v2624, %v2628
    %v2630 = vrot.slane %v2478, 2
    %v2631 = vsel %vm2559, %v2626, %v2630
    %v2632 = vrot.slane %v2479, 2
    %v2633 = vrot.slane %v2481, 2
    %v2634 = vsel %vm2559, %v2632, %v2633
    %v2635 = vrot.slane %v2480, 2
    %v2636 = vrot.slane %v2482, 2
    %v2637 = vsel %vm2559, %v2635, %v2636
    %v2638 = vrot.slane %v2483, 2
    %v2639 = vsel %vm2559, %v2633, %v2638
    %v2640 = vrot.slane %v2484, 2
    %v2641 = vsel %vm2559, %v2636, %v2640
    %v2642 = vrot.slane %v2485, 2
    %v2643 = vsel %vm2559, %v2638, %v2642
    %v2644 = vrot.slane %v2486, 2
    %v2645 = vsel %vm2559, %v2640, %v2644
    %v2646 = vrot.slane %v2487, 2
    %v2647 = vsel %vm2559, %v2642, %v2646
    %v2648 = vrot.slane %v2488, 2
    %v2649 = vsel %vm2559, %v2644, %v2648
    %v2650 = vrot.slane %v2489, 2
    %v2651 = vrot.slane %v2491, 2
    %v2652 = vsel %vm2559, %v2650, %v2651
    %v2653 = vrot.slane %v2490, 2
    %v2654 = vrot.slane %v2492, 2
    %v2655 = vsel %vm2559, %v2653, %v2654
    %v2656 = vrot.slane %v2493, 2
    %v2657 = vsel %vm2559, %v2651, %v2656
    %v2658 = vrot.slane %v2494, 2
    %v2659 = vsel %vm2559, %v2654, %v2658
    %v2660 = vrot.slane %v2495, 2
    %v2661 = vsel %vm2559, %v2656, %v2660
    %v2662 = vrot.slane %v2496, 2
    %v2663 = vsel %vm2559, %v2658, %v2662
    %v2664 = vrot.slane %v2497, 2
    %v2665 = vsel %vm2559, %v2660, %v2664
    %v2666 = vrot.slane %v2498, 2
    %v2667 = vsel %vm2559, %v2662, %v2666
    %2668 = vrot.lane.b32.xlu0 %v2562, 127
    %v2669 = vpop.permute.xlu0 %2668
    %2670 = vrot.lane.b32.xlu0 %v2565, 127
    %v2671 = vpop.permute.xlu0 %2670
    %2672 = vrot.lane.b32.xlu0 %v2567, 127
    %v2673 = vpop.permute.xlu0 %2672
    %2674 = vrot.lane.b32.xlu0 %v2569, 127
    %v2675 = vpop.permute.xlu0 %2674
    %2676 = vrot.lane.b32.xlu0 %v2571, 127
    %v2677 = vpop.permute.xlu0 %2676
    %2678 = vrot.lane.b32.xlu0 %v2573, 127
    %v2679 = vpop.permute.xlu0 %2678
    %2680 = vrot.lane.b32.xlu0 %v2575, 127
    %v2681 = vpop.permute.xlu0 %2680
    %2682 = vrot.lane.b32.xlu0 %v2577, 127
    %v2683 = vpop.permute.xlu0 %2682
    %2684 = vrot.lane.b32.xlu0 %v2580, 127
    %v2685 = vpop.permute.xlu0 %2684
    %2686 = vrot.lane.b32.xlu0 %v2583, 127
    %v2687 = vpop.permute.xlu0 %2686
    %2688 = vrot.lane.b32.xlu0 %v2585, 127
    %v2689 = vpop.permute.xlu0 %2688
    %2690 = vrot.lane.b32.xlu0 %v2587, 127
    %v2691 = vpop.permute.xlu0 %2690
    %2692 = vrot.lane.b32.xlu0 %v2589, 127
    %v2693 = vpop.permute.xlu0 %2692
    %2694 = vrot.lane.b32.xlu0 %v2591, 127
    %v2695 = vpop.permute.xlu0 %2694
    %2696 = vrot.lane.b32.xlu0 %v2593, 127
    %v2697 = vpop.permute.xlu0 %2696
    %2698 = vrot.lane.b32.xlu0 %v2595, 127
    %v2699 = vpop.permute.xlu0 %2698
    %2700 = vrot.lane.b32.xlu0 %v2598, 127
    %v2701 = vpop.permute.xlu0 %2700
    %2702 = vrot.lane.b32.xlu0 %v2601, 127
    %v2703 = vpop.permute.xlu0 %2702
    %2704 = vrot.lane.b32.xlu0 %v2603, 127
    %v2705 = vpop.permute.xlu0 %2704
    %2706 = vrot.lane.b32.xlu0 %v2605, 127
    %v2707 = vpop.permute.xlu0 %2706
    %2708 = vrot.lane.b32.xlu0 %v2607, 127
    %v2709 = vpop.permute.xlu0 %2708
    %2710 = vrot.lane.b32.xlu0 %v2609, 127
    %v2711 = vpop.permute.xlu0 %2710
    %2712 = vrot.lane.b32.xlu0 %v2611, 127
    %v2713 = vpop.permute.xlu0 %2712
    %2714 = vrot.lane.b32.xlu0 %v2613, 127
    %v2715 = vpop.permute.xlu0 %2714
    %2716 = vrot.lane.b32.xlu0 %v2616, 127
    %v2717 = vpop.permute.xlu0 %2716
    %2718 = vrot.lane.b32.xlu0 %v2619, 127
    %v2719 = vpop.permute.xlu0 %2718
    %2720 = vrot.lane.b32.xlu0 %v2621, 127
    %v2721 = vpop.permute.xlu0 %2720
    %2722 = vrot.lane.b32.xlu0 %v2623, 127
    %v2723 = vpop.permute.xlu0 %2722
    %2724 = vrot.lane.b32.xlu0 %v2625, 127
    %v2725 = vpop.permute.xlu0 %2724
    %2726 = vrot.lane.b32.xlu0 %v2627, 127
    %v2727 = vpop.permute.xlu0 %2726
    %2728 = vrot.lane.b32.xlu0 %v2629, 127
    %v2729 = vpop.permute.xlu0 %2728
    %2730 = vrot.lane.b32.xlu0 %v2631, 127
    %v2731 = vpop.permute.xlu0 %2730
    %2732 = vrot.lane.b32.xlu0 %v2634, 127
    %v2733 = vpop.permute.xlu0 %2732
    %2734 = vrot.lane.b32.xlu0 %v2637, 127
    %v2735 = vpop.permute.xlu0 %2734
    %2736 = vrot.lane.b32.xlu0 %v2639, 127
    %v2737 = vpop.permute.xlu0 %2736
    %2738 = vrot.lane.b32.xlu0 %v2641, 127
    %v2739 = vpop.permute.xlu0 %2738
    %2740 = vrot.lane.b32.xlu0 %v2643, 127
    %v2741 = vpop.permute.xlu0 %2740
    %2742 = vrot.lane.b32.xlu0 %v2645, 127
    %v2743 = vpop.permute.xlu0 %2742
    %2744 = vrot.lane.b32.xlu0 %v2647, 127
    %v2745 = vpop.permute.xlu0 %2744
    %2746 = vrot.lane.b32.xlu0 %v2649, 127
    %v2747 = vpop.permute.xlu0 %2746
    %2748 = vrot.lane.b32.xlu0 %v2652, 127
    %v2749 = vpop.permute.xlu0 %2748
    %2750 = vrot.lane.b32.xlu0 %v2655, 127
    %v2751 = vpop.permute.xlu0 %2750
    %2752 = vrot.lane.b32.xlu0 %v2657, 127
    %v2753 = vpop.permute.xlu0 %2752
    %2754 = vrot.lane.b32.xlu0 %v2659, 127
    %v2755 = vpop.permute.xlu0 %2754
    %2756 = vrot.lane.b32.xlu0 %v2661, 127
    %v2757 = vpop.permute.xlu0 %2756
    %2758 = vrot.lane.b32.xlu0 %v2663, 127
    %v2759 = vpop.permute.xlu0 %2758
    %2760 = vrot.lane.b32.xlu0 %v2665, 127
    %v2761 = vpop.permute.xlu0 %2760
    %2762 = vrot.lane.b32.xlu0 %v2667, 127
    %v2763 = vpop.permute.xlu0 %2762
    %v2764 = vsel %vm961, %v2669, %v2671
    %v2765 = vsel %vm961, %v2673, %v2675
    %v2766 = vsel %vm961, %v2677, %v2679
    %v2767 = vsel %vm961, %v2681, %v2683
    %v2768 = vsel %vm961, %v2685, %v2687
    %v2769 = vsel %vm961, %v2689, %v2691
    %v2770 = vsel %vm961, %v2693, %v2695
    %v2771 = vsel %vm961, %v2697, %v2699
    %v2772 = vsel %vm961, %v2701, %v2703
    %v2773 = vsel %vm961, %v2705, %v2707
    %v2774 = vsel %vm961, %v2709, %v2711
    %v2775 = vsel %vm961, %v2713, %v2715
    %v2776 = vsel %vm961, %v2717, %v2719
    %v2777 = vsel %vm961, %v2721, %v2723
    %v2778 = vsel %vm961, %v2725, %v2727
    %v2779 = vsel %vm961, %v2729, %v2731
    %v2780 = vsel %vm961, %v2733, %v2735
    %v2781 = vsel %vm961, %v2737, %v2739
    %v2782 = vsel %vm961, %v2741, %v2743
    %v2783 = vsel %vm961, %v2745, %v2747
    %v2784 = vsel %vm961, %v2749, %v2751
    %v2785 = vsel %vm961, %v2753, %v2755
    %v2786 = vsel %vm961, %v2757, %v2759
    %v2787 = vsel %vm961, %v2761, %v2763
    %v2836 = vadd.f32 %v1868, %v2764
    %v2837 = vadd.f32 %v1869, %v2671
    %v2838 = vadd.f32 %v1870, %v2765
    %v2839 = vadd.f32 %v1871, %v2675
    %v2840 = vadd.f32 %v1872, %v2766
    %v2841 = vadd.f32 %v1873, %v2679
    %v2842 = vadd.f32 %v1874, %v2767
    %v2843 = vadd.f32 %v1875, %v2683
    %v2844 = vadd.f32 %v1876, %v2768
    %v2845 = vadd.f32 %v1877, %v2687
    %v2846 = vadd.f32 %v1878, %v2769
    %v2847 = vadd.f32 %v1879, %v2691
    %v2848 = vadd.f32 %v1880, %v2770
    %v2849 = vadd.f32 %v1881, %v2695
    %v2850 = vadd.f32 %v1882, %v2771
    %v2851 = vadd.f32 %v1883, %v2699
    %v2852 = vadd.f32 %v1884, %v2772
    %v2853 = vadd.f32 %v1885, %v2703
    %v2854 = vadd.f32 %v1886, %v2773
    %v2855 = vadd.f32 %v1887, %v2707
    %v2856 = vadd.f32 %v1888, %v2774
    %v2857 = vadd.f32 %v1889, %v2711
    %v2858 = vadd.f32 %v1890, %v2775
    %v2859 = vadd.f32 %v1891, %v2715
    %v2860 = vadd.f32 %v1892, %v2776
    %v2861 = vadd.f32 %v1893, %v2719
    %v2862 = vadd.f32 %v1894, %v2777
    %v2863 = vadd.f32 %v1895, %v2723
    %v2864 = vadd.f32 %v1896, %v2778
    %v2865 = vadd.f32 %v1897, %v2727
    %v2866 = vadd.f32 %v1898, %v2779
    %v2867 = vadd.f32 %v1899, %v2731
    %v2868 = vadd.f32 %v1900, %v2780
    %v2869 = vadd.f32 %v1901, %v2735
    %v2870 = vadd.f32 %v1902, %v2781
    %v2871 = vadd.f32 %v1903, %v2739
    %v2872 = vadd.f32 %v1904, %v2782
    %v2873 = vadd.f32 %v1905, %v2743
    %v2874 = vadd.f32 %v1906, %v2783
    %v2875 = vadd.f32 %v1907, %v2747
    %v2876 = vadd.f32 %v1908, %v2784
    %v2877 = vadd.f32 %v1909, %v2751
    %v2878 = vadd.f32 %v1910, %v2785
    %v2879 = vadd.f32 %v1911, %v2755
    %v2880 = vadd.f32 %v1912, %v2786
    %v2881 = vadd.f32 %v1913, %v2759
    %v2882 = vadd.f32 %v1914, %v2787
    %v2883 = vadd.f32 %v1915, %v2763
    %vm2944 = vcmp.ge.f32.partialorder %v1916, %v1941
    %vm2945 = vcmp.ge.f32.partialorder %v1917, %v1942
    %vm2946 = vcmp.ge.f32.partialorder %v25, %v1944
    %vm2947 = vcmp.ge.f32.partialorder %v26, %v1946
    %vm2948 = vcmp.ge.f32.partialorder %v27, %v1948
    %vm2949 = vcmp.ge.f32.partialorder %v28, %v1950
    %vm2950 = vcmp.ge.f32.partialorder %v29, %v1952
    %vm2951 = vcmp.ge.f32.partialorder %v30, %v1954
    %vm2952 = vcmp.ge.f32.partialorder %v1918, %v1956
    %vm2953 = vcmp.ge.f32.partialorder %v1919, %v1958
    %vm2954 = vcmp.ge.f32.partialorder %v1920, %v1959
    %vm2955 = vcmp.ge.f32.partialorder %v1921, %v1960
    %vm2956 = vcmp.ge.f32.partialorder %v35, %v1962
    %vm2957 = vcmp.ge.f32.partialorder %v36, %v1964
    %vm2958 = vcmp.ge.f32.partialorder %v37, %v1966
    %vm2959 = vcmp.ge.f32.partialorder %v38, %v1968
    %vm2960 = vcmp.ge.f32.partialorder %v39, %v1970
    %vm2961 = vcmp.ge.f32.partialorder %v40, %v1972
    %vm2962 = vcmp.ge.f32.partialorder %v1922, %v1974
    %vm2963 = vcmp.ge.f32.partialorder %v1923, %v1976
    %vm2964 = vcmp.ge.f32.partialorder %v1924, %v1977
    %vm2965 = vcmp.ge.f32.partialorder %v1925, %v1978
    %vm2966 = vcmp.ge.f32.partialorder %v45, %v1980
    %vm2967 = vcmp.ge.f32.partialorder %v46, %v1982
    %vm2968 = vcmp.ge.f32.partialorder %v47, %v1984
    %vm2969 = vcmp.ge.f32.partialorder %v48, %v1986
    %vm2970 = vcmp.ge.f32.partialorder %v49, %v1988
    %vm2971 = vcmp.ge.f32.partialorder %v50, %v1990
    %vm2972 = vcmp.ge.f32.partialorder %v1926, %v1992
    %vm2973 = vcmp.ge.f32.partialorder %v1927, %v1994
    %vm2974 = vcmp.ge.f32.partialorder %v1928, %v1995
    %vm2975 = vcmp.ge.f32.partialorder %v1929, %v1996
    %vm2976 = vcmp.ge.f32.partialorder %v55, %v1998
    %vm2977 = vcmp.ge.f32.partialorder %v56, %v2000
    %vm2978 = vcmp.ge.f32.partialorder %v57, %v2002
    %vm2979 = vcmp.ge.f32.partialorder %v58, %v2004
    %vm2980 = vcmp.ge.f32.partialorder %v59, %v2006
    %vm2981 = vcmp.ge.f32.partialorder %v60, %v2008
    %vm2982 = vcmp.ge.f32.partialorder %v1930, %v2010
    %vm2983 = vcmp.ge.f32.partialorder %v1931, %v2012
    %vm2984 = vcmp.ge.f32.partialorder %v1932, %v2013
    %vm2985 = vcmp.ge.f32.partialorder %v1933, %v2014
    %vm2986 = vcmp.ge.f32.partialorder %v65, %v2016
    %vm2987 = vcmp.ge.f32.partialorder %v66, %v2018
    %vm2988 = vcmp.ge.f32.partialorder %v67, %v2020
    %vm2989 = vcmp.ge.f32.partialorder %v68, %v2022
    %vm2990 = vcmp.ge.f32.partialorder %v69, %v2024
    %vm2991 = vcmp.ge.f32.partialorder %v70, %v2026
    %vm2992 = vcmp.ge.f32.partialorder %v1934, %v2028
    %vm2993 = vcmp.ge.f32.partialorder %v1935, %v2030
    %vm2994 = vcmp.ge.f32.partialorder %v1936, %v2031
    %vm2995 = vcmp.ge.f32.partialorder %v1937, %v2032
    %vm2996 = vcmp.ge.f32.partialorder %v75, %v2034
    %vm2997 = vcmp.ge.f32.partialorder %v76, %v2036
    %vm2998 = vcmp.ge.f32.partialorder %v77, %v2038
    %vm2999 = vcmp.ge.f32.partialorder %v78, %v2040
    %vm3000 = vcmp.ge.f32.partialorder %v79, %v2042
    %vm3001 = vcmp.ge.f32.partialorder %v80, %v2044
    %vm3002 = vcmp.ge.f32.partialorder %v1938, %v2046
    %vm3003 = vcmp.ge.f32.partialorder %v1939, %v2048
    %v3004 = vsel %vm2944, 1, 0
    %v3005 = vsel %vm2945, 1, 0
    %v3006 = vsel %vm2946, 1, 0
    %v3007 = vsel %vm2947, 1, 0
    %v3008 = vsel %vm2948, 1, 0
    %v3009 = vsel %vm2949, 1, 0
    %v3010 = vsel %vm2950, 1, 0
    %v3011 = vsel %vm2951, 1, 0
    %v3012 = vsel %vm2952, 1, 0
    %v3013 = vsel %vm2953, 1, 0
    %v3014 = vsel %vm2954, 1, 0
    %v3015 = vsel %vm2955, 1, 0
    %v3016 = vsel %vm2956, 1, 0
    %v3017 = vsel %vm2957, 1, 0
    %v3018 = vsel %vm2958, 1, 0
    %v3019 = vsel %vm2959, 1, 0
    %v3020 = vsel %vm2960, 1, 0
    %v3021 = vsel %vm2961, 1, 0
    %v3022 = vsel %vm2962, 1, 0
    %v3023 = vsel %vm2963, 1, 0
    %v3024 = vsel %vm2964, 1, 0
    %v3025 = vsel %vm2965, 1, 0
    %v3026 = vsel %vm2966, 1, 0
    %v3027 = vsel %vm2967, 1, 0
    %v3028 = vsel %vm2968, 1, 0
    %v3029 = vsel %vm2969, 1, 0
    %v3030 = vsel %vm2970, 1, 0
    %v3031 = vsel %vm2971, 1, 0
    %v3032 = vsel %vm2972, 1, 0
    %v3033 = vsel %vm2973, 1, 0
    %v3034 = vsel %vm2974, 1, 0
    %v3035 = vsel %vm2975, 1, 0
    %v3036 = vsel %vm2976, 1, 0
    %v3037 = vsel %vm2977, 1, 0
    %v3038 = vsel %vm2978, 1, 0
    %v3039 = vsel %vm2979, 1, 0
    %v3040 = vsel %vm2980, 1, 0
    %v3041 = vsel %vm2981, 1, 0
    %v3042 = vsel %vm2982, 1, 0
    %v3043 = vsel %vm2983, 1, 0
    %v3044 = vsel %vm2984, 1, 0
    %v3045 = vsel %vm2985, 1, 0
    %v3046 = vsel %vm2986, 1, 0
    %v3047 = vsel %vm2987, 1, 0
    %v3048 = vsel %vm2988, 1, 0
    %v3049 = vsel %vm2989, 1, 0
    %v3050 = vsel %vm2990, 1, 0
    %v3051 = vsel %vm2991, 1, 0
    %v3052 = vsel %vm2992, 1, 0
    %v3053 = vsel %vm2993, 1, 0
    %v3054 = vsel %vm2994, 1, 0
    %v3055 = vsel %vm2995, 1, 0
    %v3056 = vsel %vm2996, 1, 0
    %v3057 = vsel %vm2997, 1, 0
    %v3058 = vsel %vm2998, 1, 0
    %v3059 = vsel %vm2999, 1, 0
    %v3060 = vsel %vm3000, 1, 0
    %v3061 = vsel %vm3001, 1, 0
    %v3062 = vsel %vm3002, 1, 0
    %v3063 = vsel %vm3003, 1, 0
    %v3064 = vcvt.s32.f32 %v3004
    %v3065 = vcvt.s32.f32 %v3005
    %v3066 = vcvt.s32.f32 %v3006
    %v3067 = vcvt.s32.f32 %v3007
    %v3068 = vcvt.s32.f32 %v3008
    %v3069 = vcvt.s32.f32 %v3009
    %v3070 = vcvt.s32.f32 %v3010
    %v3071 = vcvt.s32.f32 %v3011
    %v3072 = vcvt.s32.f32 %v3012
    %v3073 = vcvt.s32.f32 %v3013
    %v3074 = vcvt.s32.f32 %v3014
    %v3075 = vcvt.s32.f32 %v3015
    %v3076 = vcvt.s32.f32 %v3016
    %v3077 = vcvt.s32.f32 %v3017
    %v3078 = vcvt.s32.f32 %v3018
    %v3079 = vcvt.s32.f32 %v3019
    %v3080 = vcvt.s32.f32 %v3020
    %v3081 = vcvt.s32.f32 %v3021
    %v3082 = vcvt.s32.f32 %v3022
    %v3083 = vcvt.s32.f32 %v3023
    %v3084 = vcvt.s32.f32 %v3024
    %v3085 = vcvt.s32.f32 %v3025
    %v3086 = vcvt.s32.f32 %v3026
    %v3087 = vcvt.s32.f32 %v3027
    %v3088 = vcvt.s32.f32 %v3028
    %v3089 = vcvt.s32.f32 %v3029
    %v3090 = vcvt.s32.f32 %v3030
    %v3091 = vcvt.s32.f32 %v3031
    %v3092 = vcvt.s32.f32 %v3032
    %v3093 = vcvt.s32.f32 %v3033
    %v3094 = vcvt.s32.f32 %v3034
    %v3095 = vcvt.s32.f32 %v3035
    %v3096 = vcvt.s32.f32 %v3036
    %v3097 = vcvt.s32.f32 %v3037
    %v3098 = vcvt.s32.f32 %v3038
    %v3099 = vcvt.s32.f32 %v3039
    %v3100 = vcvt.s32.f32 %v3040
    %v3101 = vcvt.s32.f32 %v3041
    %v3102 = vcvt.s32.f32 %v3042
    %v3103 = vcvt.s32.f32 %v3043
    %v3104 = vcvt.s32.f32 %v3044
    %v3105 = vcvt.s32.f32 %v3045
    %v3106 = vcvt.s32.f32 %v3046
    %v3107 = vcvt.s32.f32 %v3047
    %v3108 = vcvt.s32.f32 %v3048
    %v3109 = vcvt.s32.f32 %v3049
    %v3110 = vcvt.s32.f32 %v3050
    %v3111 = vcvt.s32.f32 %v3051
    %v3112 = vcvt.s32.f32 %v3052
    %v3113 = vcvt.s32.f32 %v3053
    %v3114 = vcvt.s32.f32 %v3054
    %v3115 = vcvt.s32.f32 %v3055
    %v3116 = vcvt.s32.f32 %v3056
    %v3117 = vcvt.s32.f32 %v3057
    %v3118 = vcvt.s32.f32 %v3058
    %v3119 = vcvt.s32.f32 %v3059
    %v3120 = vcvt.s32.f32 %v3060
    %v3121 = vcvt.s32.f32 %v3061
    %v3122 = vcvt.s32.f32 %v3062
    %v3123 = vcvt.s32.f32 %v3063
    %v3124 = vmul.f32 %v3064, 16.0
    %v3125 = vmul.f32 %v3065, 16.0
    %v3126 = vmul.f32 %v3066, 16.0
    %v3127 = vmul.f32 %v3067, 16.0
    %v3128 = vmul.f32 %v3068, 16.0
    %v3129 = vmul.f32 %v3069, 16.0
    %v3130 = vmul.f32 %v3070, 16.0
    %v3131 = vmul.f32 %v3071, 16.0
    %v3132 = vmul.f32 %v3072, 16.0
    %v3133 = vmul.f32 %v3073, 16.0
    %v3134 = vmul.f32 %v3074, 16.0
    %v3135 = vmul.f32 %v3075, 16.0
    %v3136 = vmul.f32 %v3076, 16.0
    %v3137 = vmul.f32 %v3077, 16.0
    %v3138 = vmul.f32 %v3078, 16.0
    %v3139 = vmul.f32 %v3079, 16.0
    %v3140 = vmul.f32 %v3080, 16.0
    %v3141 = vmul.f32 %v3081, 16.0
    %v3142 = vmul.f32 %v3082, 16.0
    %v3143 = vmul.f32 %v3083, 16.0
    %v3144 = vmul.f32 %v3084, 16.0
    %v3145 = vmul.f32 %v3085, 16.0
    %v3146 = vmul.f32 %v3086, 16.0
    %v3147 = vmul.f32 %v3087, 16.0
    %v3148 = vmul.f32 %v3088, 16.0
    %v3149 = vmul.f32 %v3089, 16.0
    %v3150 = vmul.f32 %v3090, 16.0
    %v3151 = vmul.f32 %v3091, 16.0
    %v3152 = vmul.f32 %v3092, 16.0
    %v3153 = vmul.f32 %v3093, 16.0
    %v3154 = vmul.f32 %v3094, 16.0
    %v3155 = vmul.f32 %v3095, 16.0
    %v3156 = vmul.f32 %v3096, 16.0
    %v3157 = vmul.f32 %v3097, 16.0
    %v3158 = vmul.f32 %v3098, 16.0
    %v3159 = vmul.f32 %v3099, 16.0
    %v3160 = vmul.f32 %v3100, 16.0
    %v3161 = vmul.f32 %v3101, 16.0
    %v3162 = vmul.f32 %v3102, 16.0
    %v3163 = vmul.f32 %v3103, 16.0
    %v3164 = vmul.f32 %v3104, 16.0
    %v3165 = vmul.f32 %v3105, 16.0
    %v3166 = vmul.f32 %v3106, 16.0
    %v3167 = vmul.f32 %v3107, 16.0
    %v3168 = vmul.f32 %v3108, 16.0
    %v3169 = vmul.f32 %v3109, 16.0
    %v3170 = vmul.f32 %v3110, 16.0
    %v3171 = vmul.f32 %v3111, 16.0
    %v3172 = vmul.f32 %v3112, 16.0
    %v3173 = vmul.f32 %v3113, 16.0
    %v3174 = vmul.f32 %v3114, 16.0
    %v3175 = vmul.f32 %v3115, 16.0
    %v3176 = vmul.f32 %v3116, 16.0
    %v3177 = vmul.f32 %v3117, 16.0
    %v3178 = vmul.f32 %v3118, 16.0
    %v3179 = vmul.f32 %v3119, 16.0
    %v3180 = vmul.f32 %v3120, 16.0
    %v3181 = vmul.f32 %v3121, 16.0
    %v3182 = vmul.f32 %v3122, 16.0
    %v3183 = vmul.f32 %v3123, 16.0
    %v3244 = vrot.slane %v3124, 2
    %v3245 = vrot.slane %v3126, 2
    %v3246 = vsel %vm2559, %v3244, %v3245
    %v3247 = vrot.slane %v3125, 2
    %v3248 = vrot.slane %v3127, 2
    %v3249 = vsel %vm2559, %v3247, %v3248
    %v3250 = vrot.slane %v3128, 2
    %v3251 = vsel %vm2559, %v3245, %v3250
    %v3252 = vrot.slane %v3129, 2
    %v3253 = vsel %vm2559, %v3248, %v3252
    %v3254 = vrot.slane %v3130, 2
    %v3255 = vsel %vm2559, %v3250, %v3254
    %v3256 = vrot.slane %v3131, 2
    %v3257 = vsel %vm2559, %v3252, %v3256
    %v3258 = vrot.slane %v3132, 2
    %v3259 = vsel %vm2559, %v3254, %v3258
    %v3260 = vrot.slane %v3133, 2
    %v3261 = vsel %vm2559, %v3256, %v3260
    %v3262 = vrot.slane %v3134, 2
    %v3263 = vrot.slane %v3136, 2
    %v3264 = vsel %vm2559, %v3262, %v3263
    %v3265 = vrot.slane %v3135, 2
    %v3266 = vrot.slane %v3137, 2
    %v3267 = vsel %vm2559, %v3265, %v3266
    %v3268 = vrot.slane %v3138, 2
    %v3269 = vsel %vm2559, %v3263, %v3268
    %v3270 = vrot.slane %v3139, 2
    %v3271 = vsel %vm2559, %v3266, %v3270
    %v3272 = vrot.slane %v3140, 2
    %v3273 = vsel %vm2559, %v3268, %v3272
    %v3274 = vrot.slane %v3141, 2
    %v3275 = vsel %vm2559, %v3270, %v3274
    %v3276 = vrot.slane %v3142, 2
    %v3277 = vsel %vm2559, %v3272, %v3276
    %v3278 = vrot.slane %v3143, 2
    %v3279 = vsel %vm2559, %v3274, %v3278
    %v3280 = vrot.slane %v3144, 2
    %v3281 = vrot.slane %v3146, 2
    %v3282 = vsel %vm2559, %v3280, %v3281
    %v3283 = vrot.slane %v3145, 2
    %v3284 = vrot.slane %v3147, 2
    %v3285 = vsel %vm2559, %v3283, %v3284
    %v3286 = vrot.slane %v3148, 2
    %v3287 = vsel %vm2559, %v3281, %v3286
    %v3288 = vrot.slane %v3149, 2
    %v3289 = vsel %vm2559, %v3284, %v3288
    %v3290 = vrot.slane %v3150, 2
    %v3291 = vsel %vm2559, %v3286, %v3290
    %v3292 = vrot.slane %v3151, 2
    %v3293 = vsel %vm2559, %v3288, %v3292
    %v3294 = vrot.slane %v3152, 2
    %v3295 = vsel %vm2559, %v3290, %v3294
    %v3296 = vrot.slane %v3153, 2
    %v3297 = vsel %vm2559, %v3292, %v3296
    %v3298 = vrot.slane %v3154, 2
    %v3299 = vrot.slane %v3156, 2
    %v3300 = vsel %vm2559, %v3298, %v3299
    %v3301 = vrot.slane %v3155, 2
    %v3302 = vrot.slane %v3157, 2
    %v3303 = vsel %vm2559, %v3301, %v3302
    %v3304 = vrot.slane %v3158, 2
    %v3305 = vsel %vm2559, %v3299, %v3304
    %v3306 = vrot.slane %v3159, 2
    %v3307 = vsel %vm2559, %v3302, %v3306
    %v3308 = vrot.slane %v3160, 2
    %v3309 = vsel %vm2559, %v3304, %v3308
    %v3310 = vrot.slane %v3161, 2
    %v3311 = vsel %vm2559, %v3306, %v3310
    %v3312 = vrot.slane %v3162, 2
    %v3313 = vsel %vm2559, %v3308, %v3312
    %v3314 = vrot.slane %v3163, 2
    %v3315 = vsel %vm2559, %v3310, %v3314
    %v3316 = vrot.slane %v3164, 2
    %v3317 = vrot.slane %v3166, 2
    %v3318 = vsel %vm2559, %v3316, %v3317
    %v3319 = vrot.slane %v3165, 2
    %v3320 = vrot.slane %v3167, 2
    %v3321 = vsel %vm2559, %v3319, %v3320
    %v3322 = vrot.slane %v3168, 2
    %v3323 = vsel %vm2559, %v3317, %v3322
    %v3324 = vrot.slane %v3169, 2
    %v3325 = vsel %vm2559, %v3320, %v3324
    %v3326 = vrot.slane %v3170, 2
    %v3327 = vsel %vm2559, %v3322, %v3326
    %v3328 = vrot.slane %v3171, 2
    %v3329 = vsel %vm2559, %v3324, %v3328
    %v3330 = vrot.slane %v3172, 2
    %v3331 = vsel %vm2559, %v3326, %v3330
    %v3332 = vrot.slane %v3173, 2
    %v3333 = vsel %vm2559, %v3328, %v3332
    %v3334 = vrot.slane %v3174, 2
    %v3335 = vrot.slane %v3176, 2
    %v3336 = vsel %vm2559, %v3334, %v3335
    %v3337 = vrot.slane %v3175, 2
    %v3338 = vrot.slane %v3177, 2
    %v3339 = vsel %vm2559, %v3337, %v3338
    %v3340 = vrot.slane %v3178, 2
    %v3341 = vsel %vm2559, %v3335, %v3340
    %v3342 = vrot.slane %v3179, 2
    %v3343 = vsel %vm2559, %v3338, %v3342
    %v3344 = vrot.slane %v3180, 2
    %v3345 = vsel %vm2559, %v3340, %v3344
    %v3346 = vrot.slane %v3181, 2
    %v3347 = vsel %vm2559, %v3342, %v3346
    %v3348 = vrot.slane %v3182, 2
    %v3349 = vsel %vm2559, %v3344, %v3348
    %v3350 = vrot.slane %v3183, 2
    %v3351 = vsel %vm2559, %v3346, %v3350
    %v3400 = vadd.f32 %v2836, %v3246
    %v3401 = vadd.f32 %v2837, %v3249
    %v3402 = vadd.f32 %v2838, %v3251
    %v3403 = vadd.f32 %v2839, %v3253
    %v3404 = vadd.f32 %v2840, %v3255
    %v3405 = vadd.f32 %v2841, %v3257
    %v3406 = vadd.f32 %v2842, %v3259
    %v3407 = vadd.f32 %v2843, %v3261
    %v3408 = vadd.f32 %v2844, %v3264
    %v3409 = vadd.f32 %v2845, %v3267
    %v3410 = vadd.f32 %v2846, %v3269
    %v3411 = vadd.f32 %v2847, %v3271
    %v3412 = vadd.f32 %v2848, %v3273
    %v3413 = vadd.f32 %v2849, %v3275
    %v3414 = vadd.f32 %v2850, %v3277
    %v3415 = vadd.f32 %v2851, %v3279
    %v3416 = vadd.f32 %v2852, %v3282
    %v3417 = vadd.f32 %v2853, %v3285
    %v3418 = vadd.f32 %v2854, %v3287
    %v3419 = vadd.f32 %v2855, %v3289
    %v3420 = vadd.f32 %v2856, %v3291
    %v3421 = vadd.f32 %v2857, %v3293
    %v3422 = vadd.f32 %v2858, %v3295
    %v3423 = vadd.f32 %v2859, %v3297
    %v3424 = vadd.f32 %v2860, %v3300
    %v3425 = vadd.f32 %v2861, %v3303
    %v3426 = vadd.f32 %v2862, %v3305
    %v3427 = vadd.f32 %v2863, %v3307
    %v3428 = vadd.f32 %v2864, %v3309
    %v3429 = vadd.f32 %v2865, %v3311
    %v3430 = vadd.f32 %v2866, %v3313
    %v3431 = vadd.f32 %v2867, %v3315
    %v3432 = vadd.f32 %v2868, %v3318
    %v3433 = vadd.f32 %v2869, %v3321
    %v3434 = vadd.f32 %v2870, %v3323
    %v3435 = vadd.f32 %v2871, %v3325
    %v3436 = vadd.f32 %v2872, %v3327
    %v3437 = vadd.f32 %v2873, %v3329
    %v3438 = vadd.f32 %v2874, %v3331
    %v3439 = vadd.f32 %v2875, %v3333
    %v3440 = vadd.f32 %v2876, %v3336
    %v3441 = vadd.f32 %v2877, %v3339
    %v3442 = vadd.f32 %v2878, %v3341
    %v3443 = vadd.f32 %v2879, %v3343
    %v3444 = vadd.f32 %v2880, %v3345
    %v3445 = vadd.f32 %v2881, %v3347
    %v3446 = vadd.f32 %v2882, %v3349
    %v3447 = vadd.f32 %v2883, %v3351
    %3448 = vrot.lane.b32.xlu0 %v1941, 127
    %v3449 = vpop.permute.xlu0 %3448
    %3450 = vrot.lane.b32.xlu0 %v1942, 127
    %v3451 = vpop.permute.xlu0 %3450
    %3452 = vrot.lane.b32.xlu0 %v1944, 127
    %v3453 = vpop.permute.xlu0 %3452
    %3454 = vrot.lane.b32.xlu0 %v1946, 127
    %v3455 = vpop.permute.xlu0 %3454
    %3456 = vrot.lane.b32.xlu0 %v1948, 127
    %v3457 = vpop.permute.xlu0 %3456
    %3458 = vrot.lane.b32.xlu0 %v1950, 127
    %v3459 = vpop.permute.xlu0 %3458
    %3460 = vrot.lane.b32.xlu0 %v1952, 127
    %v3461 = vpop.permute.xlu0 %3460
    %3462 = vrot.lane.b32.xlu0 %v1954, 127
    %v3463 = vpop.permute.xlu0 %3462
    %3464 = vrot.lane.b32.xlu0 %v1956, 127
    %v3465 = vpop.permute.xlu0 %3464
    %3466 = vrot.lane.b32.xlu0 %v1958, 127
    %v3467 = vpop.permute.xlu0 %3466
    %3468 = vrot.lane.b32.xlu0 %v1959, 127
    %v3469 = vpop.permute.xlu0 %3468
    %3470 = vrot.lane.b32.xlu0 %v1960, 127
    %v3471 = vpop.permute.xlu0 %3470
    %3472 = vrot.lane.b32.xlu0 %v1962, 127
    %v3473 = vpop.permute.xlu0 %3472
    %3474 = vrot.lane.b32.xlu0 %v1964, 127
    %v3475 = vpop.permute.xlu0 %3474
    %3476 = vrot.lane.b32.xlu0 %v1966, 127
    %v3477 = vpop.permute.xlu0 %3476
    %3478 = vrot.lane.b32.xlu0 %v1968, 127
    %v3479 = vpop.permute.xlu0 %3478
    %3480 = vrot.lane.b32.xlu0 %v1970, 127
    %v3481 = vpop.permute.xlu0 %3480
    %3482 = vrot.lane.b32.xlu0 %v1972, 127
    %v3483 = vpop.permute.xlu0 %3482
    %3484 = vrot.lane.b32.xlu0 %v1974, 127
    %v3485 = vpop.permute.xlu0 %3484
    %3486 = vrot.lane.b32.xlu0 %v1976, 127
    %v3487 = vpop.permute.xlu0 %3486
    %3488 = vrot.lane.b32.xlu0 %v1977, 127
    %v3489 = vpop.permute.xlu0 %3488
    %3490 = vrot.lane.b32.xlu0 %v1978, 127
    %v3491 = vpop.permute.xlu0 %3490
    %3492 = vrot.lane.b32.xlu0 %v1980, 127
    %v3493 = vpop.permute.xlu0 %3492
    %3494 = vrot.lane.b32.xlu0 %v1982, 127
    %v3495 = vpop.permute.xlu0 %3494
    %3496 = vrot.lane.b32.xlu0 %v1984, 127
    %v3497 = vpop.permute.xlu0 %3496
    %3498 = vrot.lane.b32.xlu0 %v1986, 127
    %v3499 = vpop.permute.xlu0 %3498
    %3500 = vrot.lane.b32.xlu0 %v1988, 127
    %v3501 = vpop.permute.xlu0 %3500
    %3502 = vrot.lane.b32.xlu0 %v1990, 127
    %v3503 = vpop.permute.xlu0 %3502
    %3504 = vrot.lane.b32.xlu0 %v1992, 127
    %v3505 = vpop.permute.xlu0 %3504
    %3506 = vrot.lane.b32.xlu0 %v1994, 127
    %v3507 = vpop.permute.xlu0 %3506
    %3508 = vrot.lane.b32.xlu0 %v1995, 127
    %v3509 = vpop.permute.xlu0 %3508
    %3510 = vrot.lane.b32.xlu0 %v1996, 127
    %v3511 = vpop.permute.xlu0 %3510
    %3512 = vrot.lane.b32.xlu0 %v1998, 127
    %v3513 = vpop.permute.xlu0 %3512
    %3514 = vrot.lane.b32.xlu0 %v2000, 127
    %v3515 = vpop.permute.xlu0 %3514
    %3516 = vrot.lane.b32.xlu0 %v2002, 127
    %v3517 = vpop.permute.xlu0 %3516
    %3518 = vrot.lane.b32.xlu0 %v2004, 127
    %v3519 = vpop.permute.xlu0 %3518
    %3520 = vrot.lane.b32.xlu0 %v2006, 127
    %v3521 = vpop.permute.xlu0 %3520
    %3522 = vrot.lane.b32.xlu0 %v2008, 127
    %v3523 = vpop.permute.xlu0 %3522
    %3524 = vrot.lane.b32.xlu0 %v2010, 127
    %v3525 = vpop.permute.xlu0 %3524
    %3526 = vrot.lane.b32.xlu0 %v2012, 127
    %v3527 = vpop.permute.xlu0 %3526
    %3528 = vrot.lane.b32.xlu0 %v2013, 127
    %v3529 = vpop.permute.xlu0 %3528
    %3530 = vrot.lane.b32.xlu0 %v2014, 127
    %v3531 = vpop.permute.xlu0 %3530
    %3532 = vrot.lane.b32.xlu0 %v2016, 127
    %v3533 = vpop.permute.xlu0 %3532
    %3534 = vrot.lane.b32.xlu0 %v2018, 127
    %v3535 = vpop.permute.xlu0 %3534
    %3536 = vrot.lane.b32.xlu0 %v2020, 127
    %v3537 = vpop.permute.xlu0 %3536
    %3538 = vrot.lane.b32.xlu0 %v2022, 127
    %v3539 = vpop.permute.xlu0 %3538
    %3540 = vrot.lane.b32.xlu0 %v2024, 127
    %v3541 = vpop.permute.xlu0 %3540
    %3542 = vrot.lane.b32.xlu0 %v2026, 127
    %v3543 = vpop.permute.xlu0 %3542
    %3544 = vrot.lane.b32.xlu0 %v2028, 127
    %v3545 = vpop.permute.xlu0 %3544
    %3546 = vrot.lane.b32.xlu0 %v2030, 127
    %v3547 = vpop.permute.xlu0 %3546
    %3548 = vrot.lane.b32.xlu0 %v2031, 127
    %v3549 = vpop.permute.xlu0 %3548
    %3550 = vrot.lane.b32.xlu0 %v2032, 127
    %v3551 = vpop.permute.xlu0 %3550
    %3552 = vrot.lane.b32.xlu0 %v2034, 127
    %v3553 = vpop.permute.xlu0 %3552
    %3554 = vrot.lane.b32.xlu0 %v2036, 127
    %v3555 = vpop.permute.xlu0 %3554
    %3556 = vrot.lane.b32.xlu0 %v2038, 127
    %v3557 = vpop.permute.xlu0 %3556
    %3558 = vrot.lane.b32.xlu0 %v2040, 127
    %v3559 = vpop.permute.xlu0 %3558
    %3560 = vrot.lane.b32.xlu0 %v2042, 127
    %v3561 = vpop.permute.xlu0 %3560
    %3562 = vrot.lane.b32.xlu0 %v2044, 127
    %v3563 = vpop.permute.xlu0 %3562
    %3564 = vrot.lane.b32.xlu0 %v2046, 127
    %v3565 = vpop.permute.xlu0 %3564
    %3566 = vrot.lane.b32.xlu0 %v2048, 127
    %v3567 = vpop.permute.xlu0 %3566
    %v3568 = vsel %vm961, %v3449, %v3451
    %v3569 = vsel %vm961, %v3453, %v3455
    %v3570 = vsel %vm961, %v3457, %v3459
    %v3571 = vsel %vm961, %v3461, %v3463
    %v3572 = vsel %vm961, %v3465, %v3467
    %v3573 = vsel %vm961, %v3469, %v3471
    %v3574 = vsel %vm961, %v3473, %v3475
    %v3575 = vsel %vm961, %v3477, %v3479
    %v3576 = vsel %vm961, %v3481, %v3483
    %v3577 = vsel %vm961, %v3485, %v3487
    %v3578 = vsel %vm961, %v3489, %v3491
    %v3579 = vsel %vm961, %v3493, %v3495
    %v3580 = vsel %vm961, %v3497, %v3499
    %v3581 = vsel %vm961, %v3501, %v3503
    %v3582 = vsel %vm961, %v3505, %v3507
    %v3583 = vsel %vm961, %v3509, %v3511
    %v3584 = vsel %vm961, %v3513, %v3515
    %v3585 = vsel %vm961, %v3517, %v3519
    %v3586 = vsel %vm961, %v3521, %v3523
    %v3587 = vsel %vm961, %v3525, %v3527
    %v3588 = vsel %vm961, %v3529, %v3531
    %v3589 = vsel %vm961, %v3533, %v3535
    %v3590 = vsel %vm961, %v3537, %v3539
    %v3591 = vsel %vm961, %v3541, %v3543
    %v3592 = vsel %vm961, %v3545, %v3547
    %v3593 = vsel %vm961, %v3549, %v3551
    %v3594 = vsel %vm961, %v3553, %v3555
    %v3595 = vsel %vm961, %v3557, %v3559
    %v3596 = vsel %vm961, %v3561, %v3563
    %v3597 = vsel %vm961, %v3565, %v3567
    %vm3628 = vcmp.ge.f32.partialorder %v1916, %v3568
    %vm3629 = vcmp.ge.f32.partialorder %v25, %v3569
    %vm3630 = vcmp.ge.f32.partialorder %v27, %v3570
    %vm3631 = vcmp.ge.f32.partialorder %v29, %v3571
    %vm3632 = vcmp.ge.f32.partialorder %v1918, %v3572
    %vm3633 = vcmp.ge.f32.partialorder %v1920, %v3573
    %vm3634 = vcmp.ge.f32.partialorder %v35, %v3574
    %vm3635 = vcmp.ge.f32.partialorder %v37, %v3575
    %vm3636 = vcmp.ge.f32.partialorder %v39, %v3576
    %vm3637 = vcmp.ge.f32.partialorder %v1922, %v3577
    %vm3638 = vcmp.ge.f32.partialorder %v1924, %v3578
    %vm3639 = vcmp.ge.f32.partialorder %v45, %v3579
    %vm3640 = vcmp.ge.f32.partialorder %v47, %v3580
    %vm3641 = vcmp.ge.f32.partialorder %v49, %v3581
    %vm3642 = vcmp.ge.f32.partialorder %v1926, %v3582
    %vm3643 = vcmp.ge.f32.partialorder %v1928, %v3583
    %vm3644 = vcmp.ge.f32.partialorder %v55, %v3584
    %vm3645 = vcmp.ge.f32.partialorder %v57, %v3585
    %vm3646 = vcmp.ge.f32.partialorder %v59, %v3586
    %vm3647 = vcmp.ge.f32.partialorder %v1930, %v3587
    %vm3648 = vcmp.ge.f32.partialorder %v1932, %v3588
    %vm3649 = vcmp.ge.f32.partialorder %v65, %v3589
    %vm3650 = vcmp.ge.f32.partialorder %v67, %v3590
    %vm3651 = vcmp.ge.f32.partialorder %v69, %v3591
    %vm3652 = vcmp.ge.f32.partialorder %v1934, %v3592
    %vm3653 = vcmp.ge.f32.partialorder %v1936, %v3593
    %vm3654 = vcmp.ge.f32.partialorder %v75, %v3594
    %vm3655 = vcmp.ge.f32.partialorder %v77, %v3595
    %vm3656 = vcmp.ge.f32.partialorder %v79, %v3596
    %vm3657 = vcmp.ge.f32.partialorder %v1938, %v3597
    %v3658 = vsel %vm3628, 1, 0
    %v3659 = vsel %vm3629, 1, 0
    %v3660 = vsel %vm3630, 1, 0
    %v3661 = vsel %vm3631, 1, 0
    %v3662 = vsel %vm3632, 1, 0
    %v3663 = vsel %vm3633, 1, 0
    %v3664 = vsel %vm3634, 1, 0
    %v3665 = vsel %vm3635, 1, 0
    %v3666 = vsel %vm3636, 1, 0
    %v3667 = vsel %vm3637, 1, 0
    %v3668 = vsel %vm3638, 1, 0
    %v3669 = vsel %vm3639, 1, 0
    %v3670 = vsel %vm3640, 1, 0
    %v3671 = vsel %vm3641, 1, 0
    %v3672 = vsel %vm3642, 1, 0
    %v3673 = vsel %vm3643, 1, 0
    %v3674 = vsel %vm3644, 1, 0
    %v3675 = vsel %vm3645, 1, 0
    %v3676 = vsel %vm3646, 1, 0
    %v3677 = vsel %vm3647, 1, 0
    %v3678 = vsel %vm3648, 1, 0
    %v3679 = vsel %vm3649, 1, 0
    %v3680 = vsel %vm3650, 1, 0
    %v3681 = vsel %vm3651, 1, 0
    %v3682 = vsel %vm3652, 1, 0
    %v3683 = vsel %vm3653, 1, 0
    %v3684 = vsel %vm3654, 1, 0
    %v3685 = vsel %vm3655, 1, 0
    %v3686 = vsel %vm3656, 1, 0
    %v3687 = vsel %vm3657, 1, 0
    %v3688 = vcvt.s32.f32 %v3658
    %v3689 = vcvt.s32.f32 %v3659
    %v3690 = vcvt.s32.f32 %v3660
    %v3691 = vcvt.s32.f32 %v3661
    %v3692 = vcvt.s32.f32 %v3662
    %v3693 = vcvt.s32.f32 %v3663
    %v3694 = vcvt.s32.f32 %v3664
    %v3695 = vcvt.s32.f32 %v3665
    %v3696 = vcvt.s32.f32 %v3666
    %v3697 = vcvt.s32.f32 %v3667
    %v3698 = vcvt.s32.f32 %v3668
    %v3699 = vcvt.s32.f32 %v3669
    %v3700 = vcvt.s32.f32 %v3670
    %v3701 = vcvt.s32.f32 %v3671
    %v3702 = vcvt.s32.f32 %v3672
    %v3703 = vcvt.s32.f32 %v3673
    %v3704 = vcvt.s32.f32 %v3674
    %v3705 = vcvt.s32.f32 %v3675
    %v3706 = vcvt.s32.f32 %v3676
    %v3707 = vcvt.s32.f32 %v3677
    %v3708 = vcvt.s32.f32 %v3678
    %v3709 = vcvt.s32.f32 %v3679
    %v3710 = vcvt.s32.f32 %v3680
    %v3711 = vcvt.s32.f32 %v3681
    %v3712 = vcvt.s32.f32 %v3682
    %v3713 = vcvt.s32.f32 %v3683
    %v3714 = vcvt.s32.f32 %v3684
    %v3715 = vcvt.s32.f32 %v3685
    %v3716 = vcvt.s32.f32 %v3686
    %v3717 = vcvt.s32.f32 %v3687
    %v3718 = vmul.f32 %v3688, 32.0
    %v3719 = vmul.f32 %v3689, 32.0
    %v3720 = vmul.f32 %v3690, 32.0
    %v3721 = vmul.f32 %v3691, 32.0
    %v3722 = vmul.f32 %v3692, 32.0
    %v3723 = vmul.f32 %v3693, 32.0
    %v3724 = vmul.f32 %v3694, 32.0
    %v3725 = vmul.f32 %v3695, 32.0
    %v3726 = vmul.f32 %v3696, 32.0
    %v3727 = vmul.f32 %v3697, 32.0
    %v3728 = vmul.f32 %v3698, 32.0
    %v3729 = vmul.f32 %v3699, 32.0
    %v3730 = vmul.f32 %v3700, 32.0
    %v3731 = vmul.f32 %v3701, 32.0
    %v3732 = vmul.f32 %v3702, 32.0
    %v3733 = vmul.f32 %v3703, 32.0
    %v3734 = vmul.f32 %v3704, 32.0
    %v3735 = vmul.f32 %v3705, 32.0
    %v3736 = vmul.f32 %v3706, 32.0
    %v3737 = vmul.f32 %v3707, 32.0
    %v3738 = vmul.f32 %v3708, 32.0
    %v3739 = vmul.f32 %v3709, 32.0
    %v3740 = vmul.f32 %v3710, 32.0
    %v3741 = vmul.f32 %v3711, 32.0
    %v3742 = vmul.f32 %v3712, 32.0
    %v3743 = vmul.f32 %v3713, 32.0
    %v3744 = vmul.f32 %v3714, 32.0
    %v3745 = vmul.f32 %v3715, 32.0
    %v3746 = vmul.f32 %v3716, 32.0
    %v3747 = vmul.f32 %v3717, 32.0
    %v3778 = vrot.slane %v3718, 2
    %v3779 = vrot.slane %v3719, 2
    %v3780 = vsel %vm2559, %v3778, %v3779
    %v3781 = vrot.slane %v3720, 2
    %v3782 = vsel %vm2559, %v3779, %v3781
    %v3783 = vrot.slane %v3721, 2
    %v3784 = vsel %vm2559, %v3781, %v3783
    %v3785 = vrot.slane %v3722, 2
    %v3786 = vsel %vm2559, %v3783, %v3785
    %v3787 = vrot.slane %v3723, 2
    %v3788 = vrot.slane %v3724, 2
    %v3789 = vsel %vm2559, %v3787, %v3788
    %v3790 = vrot.slane %v3725, 2
    %v3791 = vsel %vm2559, %v3788, %v3790
    %v3792 = vrot.slane %v3726, 2
    %v3793 = vsel %vm2559, %v3790, %v3792
    %v3794 = vrot.slane %v3727, 2
    %v3795 = vsel %vm2559, %v3792, %v3794
    %v3796 = vrot.slane %v3728, 2
    %v3797 = vrot.slane %v3729, 2
    %v3798 = vsel %vm2559, %v3796, %v3797
    %v3799 = vrot.slane %v3730, 2
    %v3800 = vsel %vm2559, %v3797, %v3799
    %v3801 = vrot.slane %v3731, 2
    %v3802 = vsel %vm2559, %v3799, %v3801
    %v3803 = vrot.slane %v3732, 2
    %v3804 = vsel %vm2559, %v3801, %v3803
    %v3805 = vrot.slane %v3733, 2
    %v3806 = vrot.slane %v3734, 2
    %v3807 = vsel %vm2559, %v3805, %v3806
    %v3808 = vrot.slane %v3735, 2
    %v3809 = vsel %vm2559, %v3806, %v3808
    %v3810 = vrot.slane %v3736, 2
    %v3811 = vsel %vm2559, %v3808, %v3810
    %v3812 = vrot.slane %v3737, 2
    %v3813 = vsel %vm2559, %v3810, %v3812
    %v3814 = vrot.slane %v3738, 2
    %v3815 = vrot.slane %v3739, 2
    %v3816 = vsel %vm2559, %v3814, %v3815
    %v3817 = vrot.slane %v3740, 2
    %v3818 = vsel %vm2559, %v3815, %v3817
    %v3819 = vrot.slane %v3741, 2
    %v3820 = vsel %vm2559, %v3817, %v3819
    %v3821 = vrot.slane %v3742, 2
    %v3822 = vsel %vm2559, %v3819, %v3821
    %v3823 = vrot.slane %v3743, 2
    %v3824 = vrot.slane %v3744, 2
    %v3825 = vsel %vm2559, %v3823, %v3824
    %v3826 = vrot.slane %v3745, 2
    %v3827 = vsel %vm2559, %v3824, %v3826
    %v3828 = vrot.slane %v3746, 2
    %v3829 = vsel %vm2559, %v3826, %v3828
    %v3830 = vrot.slane %v3747, 2
    %v3831 = vsel %vm2559, %v3828, %v3830
    %3832 = vrot.lane.b32.xlu0 %v3780, 1
    %v3833 = vpop.permute.xlu0 %3832
    %3834 = vrot.lane.b32.xlu0 %v3782, 1
    %v3835 = vpop.permute.xlu0 %3834
    %3836 = vrot.lane.b32.xlu0 %v3784, 1
    %v3837 = vpop.permute.xlu0 %3836
    %3838 = vrot.lane.b32.xlu0 %v3786, 1
    %v3839 = vpop.permute.xlu0 %3838
    %3840 = vrot.lane.b32.xlu0 %v3789, 1
    %v3841 = vpop.permute.xlu0 %3840
    %3842 = vrot.lane.b32.xlu0 %v3791, 1
    %v3843 = vpop.permute.xlu0 %3842
    %3844 = vrot.lane.b32.xlu0 %v3793, 1
    %v3845 = vpop.permute.xlu0 %3844
    %3846 = vrot.lane.b32.xlu0 %v3795, 1
    %v3847 = vpop.permute.xlu0 %3846
    %3848 = vrot.lane.b32.xlu0 %v3798, 1
    %v3849 = vpop.permute.xlu0 %3848
    %3850 = vrot.lane.b32.xlu0 %v3800, 1
    %v3851 = vpop.permute.xlu0 %3850
    %3852 = vrot.lane.b32.xlu0 %v3802, 1
    %v3853 = vpop.permute.xlu0 %3852
    %3854 = vrot.lane.b32.xlu0 %v3804, 1
    %v3855 = vpop.permute.xlu0 %3854
    %3856 = vrot.lane.b32.xlu0 %v3807, 1
    %v3857 = vpop.permute.xlu0 %3856
    %3858 = vrot.lane.b32.xlu0 %v3809, 1
    %v3859 = vpop.permute.xlu0 %3858
    %3860 = vrot.lane.b32.xlu0 %v3811, 1
    %v3861 = vpop.permute.xlu0 %3860
    %3862 = vrot.lane.b32.xlu0 %v3813, 1
    %v3863 = vpop.permute.xlu0 %3862
    %3864 = vrot.lane.b32.xlu0 %v3816, 1
    %v3865 = vpop.permute.xlu0 %3864
    %3866 = vrot.lane.b32.xlu0 %v3818, 1
    %v3867 = vpop.permute.xlu0 %3866
    %3868 = vrot.lane.b32.xlu0 %v3820, 1
    %v3869 = vpop.permute.xlu0 %3868
    %3870 = vrot.lane.b32.xlu0 %v3822, 1
    %v3871 = vpop.permute.xlu0 %3870
    %3872 = vrot.lane.b32.xlu0 %v3825, 1
    %v3873 = vpop.permute.xlu0 %3872
    %3874 = vrot.lane.b32.xlu0 %v3827, 1
    %v3875 = vpop.permute.xlu0 %3874
    %3876 = vrot.lane.b32.xlu0 %v3829, 1
    %v3877 = vpop.permute.xlu0 %3876
    %3878 = vrot.lane.b32.xlu0 %v3831, 1
    %v3879 = vpop.permute.xlu0 %3878
    %v3904 = vadd.f32 %v3400, %v3833
    %v3905 = vadd.f32 %v3401, %v3833
    %v3906 = vadd.f32 %v3402, %v3835
    %v3907 = vadd.f32 %v3403, %v3835
    %v3908 = vadd.f32 %v3404, %v3837
    %v3909 = vadd.f32 %v3405, %v3837
    %v3910 = vadd.f32 %v3406, %v3839
    %v3911 = vadd.f32 %v3407, %v3839
    %v3912 = vadd.f32 %v3408, %v3841
    %v3913 = vadd.f32 %v3409, %v3841
    %v3914 = vadd.f32 %v3410, %v3843
    %v3915 = vadd.f32 %v3411, %v3843
    %v3916 = vadd.f32 %v3412, %v3845
    %v3917 = vadd.f32 %v3413, %v3845
    %v3918 = vadd.f32 %v3414, %v3847
    %v3919 = vadd.f32 %v3415, %v3847
    %v3920 = vadd.f32 %v3416, %v3849
    %v3921 = vadd.f32 %v3417, %v3849
    %v3922 = vadd.f32 %v3418, %v3851
    %v3923 = vadd.f32 %v3419, %v3851
    %v3924 = vadd.f32 %v3420, %v3853
    %v3925 = vadd.f32 %v3421, %v3853
    %v3926 = vadd.f32 %v3422, %v3855
    %v3927 = vadd.f32 %v3423, %v3855
    %v3928 = vadd.f32 %v3424, %v3857
    %v3929 = vadd.f32 %v3425, %v3857
    %v3930 = vadd.f32 %v3426, %v3859
    %v3931 = vadd.f32 %v3427, %v3859
    %v3932 = vadd.f32 %v3428, %v3861
    %v3933 = vadd.f32 %v3429, %v3861
    %v3934 = vadd.f32 %v3430, %v3863
    %v3935 = vadd.f32 %v3431, %v3863
    %v3936 = vadd.f32 %v3432, %v3865
    %v3937 = vadd.f32 %v3433, %v3865
    %v3938 = vadd.f32 %v3434, %v3867
    %v3939 = vadd.f32 %v3435, %v3867
    %v3940 = vadd.f32 %v3436, %v3869
    %v3941 = vadd.f32 %v3437, %v3869
    %v3942 = vadd.f32 %v3438, %v3871
    %v3943 = vadd.f32 %v3439, %v3871
    %v3944 = vadd.f32 %v3440, %v3873
    %v3945 = vadd.f32 %v3441, %v3873
    %v3946 = vadd.f32 %v3442, %v3875
    %v3947 = vadd.f32 %v3443, %v3875
    %v3948 = vadd.f32 %v3444, %v3877
    %v3949 = vadd.f32 %v3445, %v3877
    %v3950 = vadd.f32 %v3446, %v3879
    %v3951 = vadd.f32 %v3447, %v3879
    %3952 = vrot.lane.b32.xlu0 %v23, 127
    %v3953 = vpop.permute.xlu0 %3952
    %3954 = vrot.lane.b32.xlu0 %v24, 127
    %v3955 = vpop.permute.xlu0 %3954
    %3956 = vrot.lane.b32.xlu0 %v25, 127
    %v3957 = vpop.permute.xlu0 %3956
    %3958 = vrot.lane.b32.xlu0 %v26, 127
    %v3959 = vpop.permute.xlu0 %3958
    %3960 = vrot.lane.b32.xlu0 %v27, 127
    %v3961 = vpop.permute.xlu0 %3960
    %3962 = vrot.lane.b32.xlu0 %v28, 127
    %v3963 = vpop.permute.xlu0 %3962
    %3964 = vrot.lane.b32.xlu0 %v29, 127
    %v3965 = vpop.permute.xlu0 %3964
    %3966 = vrot.lane.b32.xlu0 %v30, 127
    %v3967 = vpop.permute.xlu0 %3966
    %3968 = vrot.lane.b32.xlu0 %v31, 127
    %v3969 = vpop.permute.xlu0 %3968
    %3970 = vrot.lane.b32.xlu0 %v32, 127
    %v3971 = vpop.permute.xlu0 %3970
    %3972 = vrot.lane.b32.xlu0 %v33, 127
    %v3973 = vpop.permute.xlu0 %3972
    %3974 = vrot.lane.b32.xlu0 %v34, 127
    %v3975 = vpop.permute.xlu0 %3974
    %3976 = vrot.lane.b32.xlu0 %v35, 127
    %v3977 = vpop.permute.xlu0 %3976
    %3978 = vrot.lane.b32.xlu0 %v36, 127
    %v3979 = vpop.permute.xlu0 %3978
    %3980 = vrot.lane.b32.xlu0 %v37, 127
    %v3981 = vpop.permute.xlu0 %3980
    %3982 = vrot.lane.b32.xlu0 %v38, 127
    %v3983 = vpop.permute.xlu0 %3982
    %3984 = vrot.lane.b32.xlu0 %v39, 127
    %v3985 = vpop.permute.xlu0 %3984
    %3986 = vrot.lane.b32.xlu0 %v40, 127
    %v3987 = vpop.permute.xlu0 %3986
    %3988 = vrot.lane.b32.xlu0 %v41, 127
    %v3989 = vpop.permute.xlu0 %3988
    %3990 = vrot.lane.b32.xlu0 %v42, 127
    %v3991 = vpop.permute.xlu0 %3990
    %3992 = vrot.lane.b32.xlu0 %v43, 127
    %v3993 = vpop.permute.xlu0 %3992
    %3994 = vrot.lane.b32.xlu0 %v44, 127
    %v3995 = vpop.permute.xlu0 %3994
    %3996 = vrot.lane.b32.xlu0 %v45, 127
    %v3997 = vpop.permute.xlu0 %3996
    %3998 = vrot.lane.b32.xlu0 %v46, 127
    %v3999 = vpop.permute.xlu0 %3998
    %4000 = vrot.lane.b32.xlu0 %v47, 127
    %v4001 = vpop.permute.xlu0 %4000
    %4002 = vrot.lane.b32.xlu0 %v48, 127
    %v4003 = vpop.permute.xlu0 %4002
    %4004 = vrot.lane.b32.xlu0 %v49, 127
    %v4005 = vpop.permute.xlu0 %4004
    %4006 = vrot.lane.b32.xlu0 %v50, 127
    %v4007 = vpop.permute.xlu0 %4006
    %4008 = vrot.lane.b32.xlu0 %v51, 127
    %v4009 = vpop.permute.xlu0 %4008
    %4010 = vrot.lane.b32.xlu0 %v52, 127
    %v4011 = vpop.permute.xlu0 %4010
    %4012 = vrot.lane.b32.xlu0 %v53, 127
    %v4013 = vpop.permute.xlu0 %4012
    %4014 = vrot.lane.b32.xlu0 %v54, 127
    %v4015 = vpop.permute.xlu0 %4014
    %4016 = vrot.lane.b32.xlu0 %v55, 127
    %v4017 = vpop.permute.xlu0 %4016
    %4018 = vrot.lane.b32.xlu0 %v56, 127
    %v4019 = vpop.permute.xlu0 %4018
    %4020 = vrot.lane.b32.xlu0 %v57, 127
    %v4021 = vpop.permute.xlu0 %4020
    %4022 = vrot.lane.b32.xlu0 %v58, 127
    %v4023 = vpop.permute.xlu0 %4022
    %4024 = vrot.lane.b32.xlu0 %v59, 127
    %v4025 = vpop.permute.xlu0 %4024
    %4026 = vrot.lane.b32.xlu0 %v60, 127
    %v4027 = vpop.permute.xlu0 %4026
    %4028 = vrot.lane.b32.xlu0 %v61, 127
    %v4029 = vpop.permute.xlu0 %4028
    %4030 = vrot.lane.b32.xlu0 %v62, 127
    %v4031 = vpop.permute.xlu0 %4030
    %4032 = vrot.lane.b32.xlu0 %v63, 127
    %v4033 = vpop.permute.xlu0 %4032
    %4034 = vrot.lane.b32.xlu0 %v64, 127
    %v4035 = vpop.permute.xlu0 %4034
    %4036 = vrot.lane.b32.xlu0 %v65, 127
    %v4037 = vpop.permute.xlu0 %4036
    %4038 = vrot.lane.b32.xlu0 %v66, 127
    %v4039 = vpop.permute.xlu0 %4038
    %4040 = vrot.lane.b32.xlu0 %v67, 127
    %v4041 = vpop.permute.xlu0 %4040
    %4042 = vrot.lane.b32.xlu0 %v68, 127
    %v4043 = vpop.permute.xlu0 %4042
    %4044 = vrot.lane.b32.xlu0 %v69, 127
    %v4045 = vpop.permute.xlu0 %4044
    %4046 = vrot.lane.b32.xlu0 %v70, 127
    %v4047 = vpop.permute.xlu0 %4046
    %4048 = vrot.lane.b32.xlu0 %v71, 127
    %v4049 = vpop.permute.xlu0 %4048
    %4050 = vrot.lane.b32.xlu0 %v72, 127
    %v4051 = vpop.permute.xlu0 %4050
    %4052 = vrot.lane.b32.xlu0 %v73, 127
    %v4053 = vpop.permute.xlu0 %4052
    %4054 = vrot.lane.b32.xlu0 %v74, 127
    %v4055 = vpop.permute.xlu0 %4054
    %4056 = vrot.lane.b32.xlu0 %v75, 127
    %v4057 = vpop.permute.xlu0 %4056
    %4058 = vrot.lane.b32.xlu0 %v76, 127
    %v4059 = vpop.permute.xlu0 %4058
    %4060 = vrot.lane.b32.xlu0 %v77, 127
    %v4061 = vpop.permute.xlu0 %4060
    %4062 = vrot.lane.b32.xlu0 %v78, 127
    %v4063 = vpop.permute.xlu0 %4062
    %4064 = vrot.lane.b32.xlu0 %v79, 127
    %v4065 = vpop.permute.xlu0 %4064
    %4066 = vrot.lane.b32.xlu0 %v80, 127
    %v4067 = vpop.permute.xlu0 %4066
    %4068 = vrot.lane.b32.xlu0 %v81, 127
    %v4069 = vpop.permute.xlu0 %4068
    %4070 = vrot.lane.b32.xlu0 %v82, 127
    %v4071 = vpop.permute.xlu0 %4070
    %v4072 = vsel %vm961, %v3953, %v3955
    %v4073 = vsel %vm961, %v3957, %v3959
    %v4074 = vsel %vm961, %v3961, %v3963
    %v4075 = vsel %vm961, %v3965, %v3967
    %v4076 = vsel %vm961, %v3969, %v3971
    %v4077 = vsel %vm961, %v3973, %v3975
    %v4078 = vsel %vm961, %v3977, %v3979
    %v4079 = vsel %vm961, %v3981, %v3983
    %v4080 = vsel %vm961, %v3985, %v3987
    %v4081 = vsel %vm961, %v3989, %v3991
    %v4082 = vsel %vm961, %v3993, %v3995
    %v4083 = vsel %vm961, %v3997, %v3999
    %v4084 = vsel %vm961, %v4001, %v4003
    %v4085 = vsel %vm961, %v4005, %v4007
    %v4086 = vsel %vm961, %v4009, %v4011
    %v4087 = vsel %vm961, %v4013, %v4015
    %v4088 = vsel %vm961, %v4017, %v4019
    %v4089 = vsel %vm961, %v4021, %v4023
    %v4090 = vsel %vm961, %v4025, %v4027
    %v4091 = vsel %vm961, %v4029, %v4031
    %v4092 = vsel %vm961, %v4033, %v4035
    %v4093 = vsel %vm961, %v4037, %v4039
    %v4094 = vsel %vm961, %v4041, %v4043
    %v4095 = vsel %vm961, %v4045, %v4047
    %v4096 = vsel %vm961, %v4049, %v4051
    %v4097 = vsel %vm961, %v4053, %v4055
    %v4098 = vsel %vm961, %v4057, %v4059
    %v4099 = vsel %vm961, %v4061, %v4063
    %v4100 = vsel %vm961, %v4065, %v4067
    %v4101 = vsel %vm961, %v4069, %v4071
    %vm4132 = vcmp.ge.f32.partialorder %v23, %v4072
    %vm4133 = vcmp.ge.f32.partialorder %v25, %v4073
    %vm4134 = vcmp.ge.f32.partialorder %v27, %v4074
    %vm4135 = vcmp.ge.f32.partialorder %v29, %v4075
    %vm4136 = vcmp.ge.f32.partialorder %v31, %v4076
    %vm4137 = vcmp.ge.f32.partialorder %v33, %v4077
    %vm4138 = vcmp.ge.f32.partialorder %v35, %v4078
    %vm4139 = vcmp.ge.f32.partialorder %v37, %v4079
    %vm4140 = vcmp.ge.f32.partialorder %v39, %v4080
    %vm4141 = vcmp.ge.f32.partialorder %v41, %v4081
    %vm4142 = vcmp.ge.f32.partialorder %v43, %v4082
    %vm4143 = vcmp.ge.f32.partialorder %v45, %v4083
    %vm4144 = vcmp.ge.f32.partialorder %v47, %v4084
    %vm4145 = vcmp.ge.f32.partialorder %v49, %v4085
    %vm4146 = vcmp.ge.f32.partialorder %v51, %v4086
    %vm4147 = vcmp.ge.f32.partialorder %v53, %v4087
    %vm4148 = vcmp.ge.f32.partialorder %v55, %v4088
    %vm4149 = vcmp.ge.f32.partialorder %v57, %v4089
    %vm4150 = vcmp.ge.f32.partialorder %v59, %v4090
    %vm4151 = vcmp.ge.f32.partialorder %v61, %v4091
    %vm4152 = vcmp.ge.f32.partialorder %v63, %v4092
    %vm4153 = vcmp.ge.f32.partialorder %v65, %v4093
    %vm4154 = vcmp.ge.f32.partialorder %v67, %v4094
    %vm4155 = vcmp.ge.f32.partialorder %v69, %v4095
    %vm4156 = vcmp.ge.f32.partialorder %v71, %v4096
    %vm4157 = vcmp.ge.f32.partialorder %v73, %v4097
    %vm4158 = vcmp.ge.f32.partialorder %v75, %v4098
    %vm4159 = vcmp.ge.f32.partialorder %v77, %v4099
    %vm4160 = vcmp.ge.f32.partialorder %v79, %v4100
    %vm4161 = vcmp.ge.f32.partialorder %v81, %v4101
    %v4162 = vsel %vm4132, 1, 0
    %v4163 = vsel %vm4133, 1, 0
    %v4164 = vsel %vm4134, 1, 0
    %v4165 = vsel %vm4135, 1, 0
    %v4166 = vsel %vm4136, 1, 0
    %v4167 = vsel %vm4137, 1, 0
    %v4168 = vsel %vm4138, 1, 0
    %v4169 = vsel %vm4139, 1, 0
    %v4170 = vsel %vm4140, 1, 0
    %v4171 = vsel %vm4141, 1, 0
    %v4172 = vsel %vm4142, 1, 0
    %v4173 = vsel %vm4143, 1, 0
    %v4174 = vsel %vm4144, 1, 0
    %v4175 = vsel %vm4145, 1, 0
    %v4176 = vsel %vm4146, 1, 0
    %v4177 = vsel %vm4147, 1, 0
    %v4178 = vsel %vm4148, 1, 0
    %v4179 = vsel %vm4149, 1, 0
    %v4180 = vsel %vm4150, 1, 0
    %v4181 = vsel %vm4151, 1, 0
    %v4182 = vsel %vm4152, 1, 0
    %v4183 = vsel %vm4153, 1, 0
    %v4184 = vsel %vm4154, 1, 0
    %v4185 = vsel %vm4155, 1, 0
    %v4186 = vsel %vm4156, 1, 0
    %v4187 = vsel %vm4157, 1, 0
    %v4188 = vsel %vm4158, 1, 0
    %v4189 = vsel %vm4159, 1, 0
    %v4190 = vsel %vm4160, 1, 0
    %v4191 = vsel %vm4161, 1, 0
    %v4192 = vcvt.s32.f32 %v4162
    %v4193 = vcvt.s32.f32 %v4163
    %v4194 = vcvt.s32.f32 %v4164
    %v4195 = vcvt.s32.f32 %v4165
    %v4196 = vcvt.s32.f32 %v4166
    %v4197 = vcvt.s32.f32 %v4167
    %v4198 = vcvt.s32.f32 %v4168
    %v4199 = vcvt.s32.f32 %v4169
    %v4200 = vcvt.s32.f32 %v4170
    %v4201 = vcvt.s32.f32 %v4171
    %v4202 = vcvt.s32.f32 %v4172
    %v4203 = vcvt.s32.f32 %v4173
    %v4204 = vcvt.s32.f32 %v4174
    %v4205 = vcvt.s32.f32 %v4175
    %v4206 = vcvt.s32.f32 %v4176
    %v4207 = vcvt.s32.f32 %v4177
    %v4208 = vcvt.s32.f32 %v4178
    %v4209 = vcvt.s32.f32 %v4179
    %v4210 = vcvt.s32.f32 %v4180
    %v4211 = vcvt.s32.f32 %v4181
    %v4212 = vcvt.s32.f32 %v4182
    %v4213 = vcvt.s32.f32 %v4183
    %v4214 = vcvt.s32.f32 %v4184
    %v4215 = vcvt.s32.f32 %v4185
    %v4216 = vcvt.s32.f32 %v4186
    %v4217 = vcvt.s32.f32 %v4187
    %v4218 = vcvt.s32.f32 %v4188
    %v4219 = vcvt.s32.f32 %v4189
    %v4220 = vcvt.s32.f32 %v4190
    %v4221 = vcvt.s32.f32 %v4191
    %v4222 = vmul.f32 %v4192, 64.0
    %v4223 = vmul.f32 %v4193, 64.0
    %v4224 = vmul.f32 %v4194, 64.0
    %v4225 = vmul.f32 %v4195, 64.0
    %v4226 = vmul.f32 %v4196, 64.0
    %v4227 = vmul.f32 %v4197, 64.0
    %v4228 = vmul.f32 %v4198, 64.0
    %v4229 = vmul.f32 %v4199, 64.0
    %v4230 = vmul.f32 %v4200, 64.0
    %v4231 = vmul.f32 %v4201, 64.0
    %v4232 = vmul.f32 %v4202, 64.0
    %v4233 = vmul.f32 %v4203, 64.0
    %v4234 = vmul.f32 %v4204, 64.0
    %v4235 = vmul.f32 %v4205, 64.0
    %v4236 = vmul.f32 %v4206, 64.0
    %v4237 = vmul.f32 %v4207, 64.0
    %v4238 = vmul.f32 %v4208, 64.0
    %v4239 = vmul.f32 %v4209, 64.0
    %v4240 = vmul.f32 %v4210, 64.0
    %v4241 = vmul.f32 %v4211, 64.0
    %v4242 = vmul.f32 %v4212, 64.0
    %v4243 = vmul.f32 %v4213, 64.0
    %v4244 = vmul.f32 %v4214, 64.0
    %v4245 = vmul.f32 %v4215, 64.0
    %v4246 = vmul.f32 %v4216, 64.0
    %v4247 = vmul.f32 %v4217, 64.0
    %v4248 = vmul.f32 %v4218, 64.0
    %v4249 = vmul.f32 %v4219, 64.0
    %v4250 = vmul.f32 %v4220, 64.0
    %v4251 = vmul.f32 %v4221, 64.0
    %v4282 = vrot.slane %v4222, 1
    %v4283 = vrot.slane %v4223, 1
    %v4284 = vsel %vm155, %v4282, %v4283
    %v4285 = vrot.slane %v4224, 1
    %v4286 = vsel %vm155, %v4283, %v4285
    %v4287 = vrot.slane %v4225, 1
    %v4288 = vsel %vm155, %v4285, %v4287
    %v4289 = vrot.slane %v4226, 1
    %v4290 = vsel %vm155, %v4287, %v4289
    %v4291 = vrot.slane %v4227, 1
    %v4292 = vrot.slane %v4228, 1
    %v4293 = vsel %vm155, %v4291, %v4292
    %v4294 = vrot.slane %v4229, 1
    %v4295 = vsel %vm155, %v4292, %v4294
    %v4296 = vrot.slane %v4230, 1
    %v4297 = vsel %vm155, %v4294, %v4296
    %v4298 = vrot.slane %v4231, 1
    %v4299 = vsel %vm155, %v4296, %v4298
    %v4300 = vrot.slane %v4232, 1
    %v4301 = vrot.slane %v4233, 1
    %v4302 = vsel %vm155, %v4300, %v4301
    %v4303 = vrot.slane %v4234, 1
    %v4304 = vsel %vm155, %v4301, %v4303
    %v4305 = vrot.slane %v4235, 1
    %v4306 = vsel %vm155, %v4303, %v4305
    %v4307 = vrot.slane %v4236, 1
    %v4308 = vsel %vm155, %v4305, %v4307
    %v4309 = vrot.slane %v4237, 1
    %v4310 = vrot.slane %v4238, 1
    %v4311 = vsel %vm155, %v4309, %v4310
    %v4312 = vrot.slane %v4239, 1
    %v4313 = vsel %vm155, %v4310, %v4312
    %v4314 = vrot.slane %v4240, 1
    %v4315 = vsel %vm155, %v4312, %v4314
    %v4316 = vrot.slane %v4241, 1
    %v4317 = vsel %vm155, %v4314, %v4316
    %v4318 = vrot.slane %v4242, 1
    %v4319 = vrot.slane %v4243, 1
    %v4320 = vsel %vm155, %v4318, %v4319
    %v4321 = vrot.slane %v4244, 1
    %v4322 = vsel %vm155, %v4319, %v4321
    %v4323 = vrot.slane %v4245, 1
    %v4324 = vsel %vm155, %v4321, %v4323
    %v4325 = vrot.slane %v4246, 1
    %v4326 = vsel %vm155, %v4323, %v4325
    %v4327 = vrot.slane %v4247, 1
    %v4328 = vrot.slane %v4248, 1
    %v4329 = vsel %vm155, %v4327, %v4328
    %v4330 = vrot.slane %v4249, 1
    %v4331 = vsel %vm155, %v4328, %v4330
    %v4332 = vrot.slane %v4250, 1
    %v4333 = vsel %vm155, %v4330, %v4332
    %v4334 = vrot.slane %v4251, 1
    %v4335 = vsel %vm155, %v4332, %v4334
    %4336 = vrot.lane.b32.xlu0 %v4284, 1
    %v4337 = vpop.permute.xlu0 %4336
    %4338 = vrot.lane.b32.xlu0 %v4286, 1
    %v4339 = vpop.permute.xlu0 %4338
    %4340 = vrot.lane.b32.xlu0 %v4288, 1
    %v4341 = vpop.permute.xlu0 %4340
    %4342 = vrot.lane.b32.xlu0 %v4290, 1
    %v4343 = vpop.permute.xlu0 %4342
    %4344 = vrot.lane.b32.xlu0 %v4293, 1
    %v4345 = vpop.permute.xlu0 %4344
    %4346 = vrot.lane.b32.xlu0 %v4295, 1
    %v4347 = vpop.permute.xlu0 %4346
    %4348 = vrot.lane.b32.xlu0 %v4297, 1
    %v4349 = vpop.permute.xlu0 %4348
    %4350 = vrot.lane.b32.xlu0 %v4299, 1
    %v4351 = vpop.permute.xlu0 %4350
    %4352 = vrot.lane.b32.xlu0 %v4302, 1
    %v4353 = vpop.permute.xlu0 %4352
    %4354 = vrot.lane.b32.xlu0 %v4304, 1
    %v4355 = vpop.permute.xlu0 %4354
    %4356 = vrot.lane.b32.xlu0 %v4306, 1
    %v4357 = vpop.permute.xlu0 %4356
    %4358 = vrot.lane.b32.xlu0 %v4308, 1
    %v4359 = vpop.permute.xlu0 %4358
    %4360 = vrot.lane.b32.xlu0 %v4311, 1
    %v4361 = vpop.permute.xlu0 %4360
    %4362 = vrot.lane.b32.xlu0 %v4313, 1
    %v4363 = vpop.permute.xlu0 %4362
    %4364 = vrot.lane.b32.xlu0 %v4315, 1
    %v4365 = vpop.permute.xlu0 %4364
    %4366 = vrot.lane.b32.xlu0 %v4317, 1
    %v4367 = vpop.permute.xlu0 %4366
    %4368 = vrot.lane.b32.xlu0 %v4320, 1
    %v4369 = vpop.permute.xlu0 %4368
    %4370 = vrot.lane.b32.xlu0 %v4322, 1
    %v4371 = vpop.permute.xlu0 %4370
    %4372 = vrot.lane.b32.xlu0 %v4324, 1
    %v4373 = vpop.permute.xlu0 %4372
    %4374 = vrot.lane.b32.xlu0 %v4326, 1
    %v4375 = vpop.permute.xlu0 %4374
    %4376 = vrot.lane.b32.xlu0 %v4329, 1
    %v4377 = vpop.permute.xlu0 %4376
    %4378 = vrot.lane.b32.xlu0 %v4331, 1
    %v4379 = vpop.permute.xlu0 %4378
    %4380 = vrot.lane.b32.xlu0 %v4333, 1
    %v4381 = vpop.permute.xlu0 %4380
    %4382 = vrot.lane.b32.xlu0 %v4335, 1
    %v4383 = vpop.permute.xlu0 %4382
    %v4408 = vadd.f32 %v3904, %v4337
    %v4409 = vadd.f32 %v3905, %v4337
    %v4410 = vadd.f32 %v3906, %v4339
    %v4411 = vadd.f32 %v3907, %v4339
    %v4412 = vadd.f32 %v3908, %v4341
    %v4413 = vadd.f32 %v3909, %v4341
    %v4414 = vadd.f32 %v3910, %v4343
    %v4415 = vadd.f32 %v3911, %v4343
    %v4416 = vadd.f32 %v3912, %v4345
    %v4417 = vadd.f32 %v3913, %v4345
    %v4418 = vadd.f32 %v3914, %v4347
    %v4419 = vadd.f32 %v3915, %v4347
    %v4420 = vadd.f32 %v3916, %v4349
    %v4421 = vadd.f32 %v3917, %v4349
    %v4422 = vadd.f32 %v3918, %v4351
    %v4423 = vadd.f32 %v3919, %v4351
    %v4424 = vadd.f32 %v3920, %v4353
    %v4425 = vadd.f32 %v3921, %v4353
    %v4426 = vadd.f32 %v3922, %v4355
    %v4427 = vadd.f32 %v3923, %v4355
    %v4428 = vadd.f32 %v3924, %v4357
    %v4429 = vadd.f32 %v3925, %v4357
    %v4430 = vadd.f32 %v3926, %v4359
    %v4431 = vadd.f32 %v3927, %v4359
    %v4432 = vadd.f32 %v3928, %v4361
    %v4433 = vadd.f32 %v3929, %v4361
    %v4434 = vadd.f32 %v3930, %v4363
    %v4435 = vadd.f32 %v3931, %v4363
    %v4436 = vadd.f32 %v3932, %v4365
    %v4437 = vadd.f32 %v3933, %v4365
    %v4438 = vadd.f32 %v3934, %v4367
    %v4439 = vadd.f32 %v3935, %v4367
    %v4440 = vadd.f32 %v3936, %v4369
    %v4441 = vadd.f32 %v3937, %v4369
    %v4442 = vadd.f32 %v3938, %v4371
    %v4443 = vadd.f32 %v3939, %v4371
    %v4444 = vadd.f32 %v3940, %v4373
    %v4445 = vadd.f32 %v3941, %v4373
    %v4446 = vadd.f32 %v3942, %v4375
    %v4447 = vadd.f32 %v3943, %v4375
    %v4448 = vadd.f32 %v3944, %v4377
    %v4449 = vadd.f32 %v3945, %v4377
    %v4450 = vadd.f32 %v3946, %v4379
    %v4451 = vadd.f32 %v3947, %v4379
    %v4452 = vadd.f32 %v3948, %v4381
    %v4453 = vadd.f32 %v3949, %v4381
    %v4454 = vadd.f32 %v3950, %v4383
    %v4455 = vadd.f32 %v3951, %v4383
    %4456 = vrot.lane.b32.xlu0 %v158, 127
    %v4457 = vpop.permute.xlu0 %4456
    %4458 = vrot.lane.b32.xlu0 %v161, 127
    %v4459 = vpop.permute.xlu0 %4458
    %4460 = vrot.lane.b32.xlu0 %v163, 127
    %v4461 = vpop.permute.xlu0 %4460
    %4462 = vrot.lane.b32.xlu0 %v165, 127
    %v4463 = vpop.permute.xlu0 %4462
    %4464 = vrot.lane.b32.xlu0 %v167, 127
    %v4465 = vpop.permute.xlu0 %4464
    %4466 = vrot.lane.b32.xlu0 %v169, 127
    %v4467 = vpop.permute.xlu0 %4466
    %4468 = vrot.lane.b32.xlu0 %v171, 127
    %v4469 = vpop.permute.xlu0 %4468
    %4470 = vrot.lane.b32.xlu0 %v173, 127
    %v4471 = vpop.permute.xlu0 %4470
    %4472 = vrot.lane.b32.xlu0 %v176, 127
    %v4473 = vpop.permute.xlu0 %4472
    %4474 = vrot.lane.b32.xlu0 %v179, 127
    %v4475 = vpop.permute.xlu0 %4474
    %4476 = vrot.lane.b32.xlu0 %v181, 127
    %v4477 = vpop.permute.xlu0 %4476
    %4478 = vrot.lane.b32.xlu0 %v183, 127
    %v4479 = vpop.permute.xlu0 %4478
    %4480 = vrot.lane.b32.xlu0 %v185, 127
    %v4481 = vpop.permute.xlu0 %4480
    %4482 = vrot.lane.b32.xlu0 %v187, 127
    %v4483 = vpop.permute.xlu0 %4482
    %4484 = vrot.lane.b32.xlu0 %v189, 127
    %v4485 = vpop.permute.xlu0 %4484
    %4486 = vrot.lane.b32.xlu0 %v191, 127
    %v4487 = vpop.permute.xlu0 %4486
    %4488 = vrot.lane.b32.xlu0 %v194, 127
    %v4489 = vpop.permute.xlu0 %4488
    %4490 = vrot.lane.b32.xlu0 %v197, 127
    %v4491 = vpop.permute.xlu0 %4490
    %4492 = vrot.lane.b32.xlu0 %v199, 127
    %v4493 = vpop.permute.xlu0 %4492
    %4494 = vrot.lane.b32.xlu0 %v201, 127
    %v4495 = vpop.permute.xlu0 %4494
    %4496 = vrot.lane.b32.xlu0 %v203, 127
    %v4497 = vpop.permute.xlu0 %4496
    %4498 = vrot.lane.b32.xlu0 %v205, 127
    %v4499 = vpop.permute.xlu0 %4498
    %4500 = vrot.lane.b32.xlu0 %v207, 127
    %v4501 = vpop.permute.xlu0 %4500
    %4502 = vrot.lane.b32.xlu0 %v209, 127
    %v4503 = vpop.permute.xlu0 %4502
    %4504 = vrot.lane.b32.xlu0 %v212, 127
    %v4505 = vpop.permute.xlu0 %4504
    %4506 = vrot.lane.b32.xlu0 %v215, 127
    %v4507 = vpop.permute.xlu0 %4506
    %4508 = vrot.lane.b32.xlu0 %v217, 127
    %v4509 = vpop.permute.xlu0 %4508
    %4510 = vrot.lane.b32.xlu0 %v219, 127
    %v4511 = vpop.permute.xlu0 %4510
    %4512 = vrot.lane.b32.xlu0 %v221, 127
    %v4513 = vpop.permute.xlu0 %4512
    %4514 = vrot.lane.b32.xlu0 %v223, 127
    %v4515 = vpop.permute.xlu0 %4514
    %4516 = vrot.lane.b32.xlu0 %v225, 127
    %v4517 = vpop.permute.xlu0 %4516
    %4518 = vrot.lane.b32.xlu0 %v227, 127
    %v4519 = vpop.permute.xlu0 %4518
    %4520 = vrot.lane.b32.xlu0 %v230, 127
    %v4521 = vpop.permute.xlu0 %4520
    %4522 = vrot.lane.b32.xlu0 %v233, 127
    %v4523 = vpop.permute.xlu0 %4522
    %4524 = vrot.lane.b32.xlu0 %v235, 127
    %v4525 = vpop.permute.xlu0 %4524
    %4526 = vrot.lane.b32.xlu0 %v237, 127
    %v4527 = vpop.permute.xlu0 %4526
    %4528 = vrot.lane.b32.xlu0 %v239, 127
    %v4529 = vpop.permute.xlu0 %4528
    %4530 = vrot.lane.b32.xlu0 %v241, 127
    %v4531 = vpop.permute.xlu0 %4530
    %4532 = vrot.lane.b32.xlu0 %v243, 127
    %v4533 = vpop.permute.xlu0 %4532
    %4534 = vrot.lane.b32.xlu0 %v245, 127
    %v4535 = vpop.permute.xlu0 %4534
    %4536 = vrot.lane.b32.xlu0 %v248, 127
    %v4537 = vpop.permute.xlu0 %4536
    %4538 = vrot.lane.b32.xlu0 %v251, 127
    %v4539 = vpop.permute.xlu0 %4538
    %4540 = vrot.lane.b32.xlu0 %v253, 127
    %v4541 = vpop.permute.xlu0 %4540
    %4542 = vrot.lane.b32.xlu0 %v255, 127
    %v4543 = vpop.permute.xlu0 %4542
    %4544 = vrot.lane.b32.xlu0 %v257, 127
    %v4545 = vpop.permute.xlu0 %4544
    %4546 = vrot.lane.b32.xlu0 %v259, 127
    %v4547 = vpop.permute.xlu0 %4546
    %4548 = vrot.lane.b32.xlu0 %v261, 127
    %v4549 = vpop.permute.xlu0 %4548
    %4550 = vrot.lane.b32.xlu0 %v263, 127
    %v4551 = vpop.permute.xlu0 %4550
    %v4552 = vsel %vm961, %v4457, %v4459
    %v4553 = vsel %vm961, %v4461, %v4463
    %v4554 = vsel %vm961, %v4465, %v4467
    %v4555 = vsel %vm961, %v4469, %v4471
    %v4556 = vsel %vm961, %v4473, %v4475
    %v4557 = vsel %vm961, %v4477, %v4479
    %v4558 = vsel %vm961, %v4481, %v4483
    %v4559 = vsel %vm961, %v4485, %v4487
    %v4560 = vsel %vm961, %v4489, %v4491
    %v4561 = vsel %vm961, %v4493, %v4495
    %v4562 = vsel %vm961, %v4497, %v4499
    %v4563 = vsel %vm961, %v4501, %v4503
    %v4564 = vsel %vm961, %v4505, %v4507
    %v4565 = vsel %vm961, %v4509, %v4511
    %v4566 = vsel %vm961, %v4513, %v4515
    %v4567 = vsel %vm961, %v4517, %v4519
    %v4568 = vsel %vm961, %v4521, %v4523
    %v4569 = vsel %vm961, %v4525, %v4527
    %v4570 = vsel %vm961, %v4529, %v4531
    %v4571 = vsel %vm961, %v4533, %v4535
    %v4572 = vsel %vm961, %v4537, %v4539
    %v4573 = vsel %vm961, %v4541, %v4543
    %v4574 = vsel %vm961, %v4545, %v4547
    %v4575 = vsel %vm961, %v4549, %v4551
    %vm4600 = vcmp.ge.f32.partialorder %v83, %v4552
    %vm4601 = vcmp.ge.f32.partialorder %v25, %v4553
    %vm4602 = vcmp.ge.f32.partialorder %v27, %v4554
    %vm4603 = vcmp.ge.f32.partialorder %v29, %v4555
    %vm4604 = vcmp.ge.f32.partialorder %v85, %v4556
    %vm4605 = vcmp.ge.f32.partialorder %v35, %v4557
    %vm4606 = vcmp.ge.f32.partialorder %v37, %v4558
    %vm4607 = vcmp.ge.f32.partialorder %v39, %v4559
    %vm4608 = vcmp.ge.f32.partialorder %v87, %v4560
    %vm4609 = vcmp.ge.f32.partialorder %v45, %v4561
    %vm4610 = vcmp.ge.f32.partialorder %v47, %v4562
    %vm4611 = vcmp.ge.f32.partialorder %v49, %v4563
    %vm4612 = vcmp.ge.f32.partialorder %v89, %v4564
    %vm4613 = vcmp.ge.f32.partialorder %v55, %v4565
    %vm4614 = vcmp.ge.f32.partialorder %v57, %v4566
    %vm4615 = vcmp.ge.f32.partialorder %v59, %v4567
    %vm4616 = vcmp.ge.f32.partialorder %v91, %v4568
    %vm4617 = vcmp.ge.f32.partialorder %v65, %v4569
    %vm4618 = vcmp.ge.f32.partialorder %v67, %v4570
    %vm4619 = vcmp.ge.f32.partialorder %v69, %v4571
    %vm4620 = vcmp.ge.f32.partialorder %v93, %v4572
    %vm4621 = vcmp.ge.f32.partialorder %v75, %v4573
    %vm4622 = vcmp.ge.f32.partialorder %v77, %v4574
    %vm4623 = vcmp.ge.f32.partialorder %v79, %v4575
    %v4624 = vsel %vm4600, 1, 0
    %v4625 = vsel %vm4601, 1, 0
    %v4626 = vsel %vm4602, 1, 0
    %v4627 = vsel %vm4603, 1, 0
    %v4628 = vsel %vm4604, 1, 0
    %v4629 = vsel %vm4605, 1, 0
    %v4630 = vsel %vm4606, 1, 0
    %v4631 = vsel %vm4607, 1, 0
    %v4632 = vsel %vm4608, 1, 0
    %v4633 = vsel %vm4609, 1, 0
    %v4634 = vsel %vm4610, 1, 0
    %v4635 = vsel %vm4611, 1, 0
    %v4636 = vsel %vm4612, 1, 0
    %v4637 = vsel %vm4613, 1, 0
    %v4638 = vsel %vm4614, 1, 0
    %v4639 = vsel %vm4615, 1, 0
    %v4640 = vsel %vm4616, 1, 0
    %v4641 = vsel %vm4617, 1, 0
    %v4642 = vsel %vm4618, 1, 0
    %v4643 = vsel %vm4619, 1, 0
    %v4644 = vsel %vm4620, 1, 0
    %v4645 = vsel %vm4621, 1, 0
    %v4646 = vsel %vm4622, 1, 0
    %v4647 = vsel %vm4623, 1, 0
    %v4648 = vcvt.s32.f32 %v4624
    %v4649 = vcvt.s32.f32 %v4625
    %v4650 = vcvt.s32.f32 %v4626
    %v4651 = vcvt.s32.f32 %v4627
    %v4652 = vcvt.s32.f32 %v4628
    %v4653 = vcvt.s32.f32 %v4629
    %v4654 = vcvt.s32.f32 %v4630
    %v4655 = vcvt.s32.f32 %v4631
    %v4656 = vcvt.s32.f32 %v4632
    %v4657 = vcvt.s32.f32 %v4633
    %v4658 = vcvt.s32.f32 %v4634
    %v4659 = vcvt.s32.f32 %v4635
    %v4660 = vcvt.s32.f32 %v4636
    %v4661 = vcvt.s32.f32 %v4637
    %v4662 = vcvt.s32.f32 %v4638
    %v4663 = vcvt.s32.f32 %v4639
    %v4664 = vcvt.s32.f32 %v4640
    %v4665 = vcvt.s32.f32 %v4641
    %v4666 = vcvt.s32.f32 %v4642
    %v4667 = vcvt.s32.f32 %v4643
    %v4668 = vcvt.s32.f32 %v4644
    %v4669 = vcvt.s32.f32 %v4645
    %v4670 = vcvt.s32.f32 %v4646
    %v4671 = vcvt.s32.f32 %v4647
    %v4672 = vmul.f32 %v4648, 128.0
    %v4673 = vmul.f32 %v4649, 128.0
    %v4674 = vmul.f32 %v4650, 128.0
    %v4675 = vmul.f32 %v4651, 128.0
    %v4676 = vmul.f32 %v4652, 128.0
    %v4677 = vmul.f32 %v4653, 128.0
    %v4678 = vmul.f32 %v4654, 128.0
    %v4679 = vmul.f32 %v4655, 128.0
    %v4680 = vmul.f32 %v4656, 128.0
    %v4681 = vmul.f32 %v4657, 128.0
    %v4682 = vmul.f32 %v4658, 128.0
    %v4683 = vmul.f32 %v4659, 128.0
    %v4684 = vmul.f32 %v4660, 128.0
    %v4685 = vmul.f32 %v4661, 128.0
    %v4686 = vmul.f32 %v4662, 128.0
    %v4687 = vmul.f32 %v4663, 128.0
    %v4688 = vmul.f32 %v4664, 128.0
    %v4689 = vmul.f32 %v4665, 128.0
    %v4690 = vmul.f32 %v4666, 128.0
    %v4691 = vmul.f32 %v4667, 128.0
    %v4692 = vmul.f32 %v4668, 128.0
    %v4693 = vmul.f32 %v4669, 128.0
    %v4694 = vmul.f32 %v4670, 128.0
    %v4695 = vmul.f32 %v4671, 128.0
    %4720 = vrot.lane.b32.xlu0 %v4672, 1
    %v4721 = vpop.permute.xlu0 %4720
    %4722 = vrot.lane.b32.xlu0 %v4673, 1
    %v4723 = vpop.permute.xlu0 %4722
    %4724 = vrot.lane.b32.xlu0 %v4674, 1
    %v4725 = vpop.permute.xlu0 %4724
    %4726 = vrot.lane.b32.xlu0 %v4675, 1
    %v4727 = vpop.permute.xlu0 %4726
    %4728 = vrot.lane.b32.xlu0 %v4676, 1
    %v4729 = vpop.permute.xlu0 %4728
    %4730 = vrot.lane.b32.xlu0 %v4677, 1
    %v4731 = vpop.permute.xlu0 %4730
    %4732 = vrot.lane.b32.xlu0 %v4678, 1
    %v4733 = vpop.permute.xlu0 %4732
    %4734 = vrot.lane.b32.xlu0 %v4679, 1
    %v4735 = vpop.permute.xlu0 %4734
    %4736 = vrot.lane.b32.xlu0 %v4680, 1
    %v4737 = vpop.permute.xlu0 %4736
    %4738 = vrot.lane.b32.xlu0 %v4681, 1
    %v4739 = vpop.permute.xlu0 %4738
    %4740 = vrot.lane.b32.xlu0 %v4682, 1
    %v4741 = vpop.permute.xlu0 %4740
    %4742 = vrot.lane.b32.xlu0 %v4683, 1
    %v4743 = vpop.permute.xlu0 %4742
    %4744 = vrot.lane.b32.xlu0 %v4684, 1
    %v4745 = vpop.permute.xlu0 %4744
    %4746 = vrot.lane.b32.xlu0 %v4685, 1
    %v4747 = vpop.permute.xlu0 %4746
    %4748 = vrot.lane.b32.xlu0 %v4686, 1
    %v4749 = vpop.permute.xlu0 %4748
    %4750 = vrot.lane.b32.xlu0 %v4687, 1
    %v4751 = vpop.permute.xlu0 %4750
    %4752 = vrot.lane.b32.xlu0 %v4688, 1
    %v4753 = vpop.permute.xlu0 %4752
    %4754 = vrot.lane.b32.xlu0 %v4689, 1
    %v4755 = vpop.permute.xlu0 %4754
    %4756 = vrot.lane.b32.xlu0 %v4690, 1
    %v4757 = vpop.permute.xlu0 %4756
    %4758 = vrot.lane.b32.xlu0 %v4691, 1
    %v4759 = vpop.permute.xlu0 %4758
    %4760 = vrot.lane.b32.xlu0 %v4692, 1
    %v4761 = vpop.permute.xlu0 %4760
    %4762 = vrot.lane.b32.xlu0 %v4693, 1
    %v4763 = vpop.permute.xlu0 %4762
    %4764 = vrot.lane.b32.xlu0 %v4694, 1
    %v4765 = vpop.permute.xlu0 %4764
    %4766 = vrot.lane.b32.xlu0 %v4695, 1
    %v4767 = vpop.permute.xlu0 %4766
    %v4792 = vadd.f32 %v4408, %v4721
    %v4793 = vadd.f32 %v4409, %v4721
    %v4794 = vadd.f32 %v4410, %v4723
    %v4795 = vadd.f32 %v4411, %v4723
    %v4796 = vadd.f32 %v4412, %v4725
    %v4797 = vadd.f32 %v4413, %v4725
    %v4798 = vadd.f32 %v4414, %v4727
    %v4799 = vadd.f32 %v4415, %v4727
    %v4800 = vadd.f32 %v4416, %v4729
    %v4801 = vadd.f32 %v4417, %v4729
    %v4802 = vadd.f32 %v4418, %v4731
    %v4803 = vadd.f32 %v4419, %v4731
    %v4804 = vadd.f32 %v4420, %v4733
    %v4805 = vadd.f32 %v4421, %v4733
    %v4806 = vadd.f32 %v4422, %v4735
    %v4807 = vadd.f32 %v4423, %v4735
    %v4808 = vadd.f32 %v4424, %v4737
    %v4809 = vadd.f32 %v4425, %v4737
    %v4810 = vadd.f32 %v4426, %v4739
    %v4811 = vadd.f32 %v4427, %v4739
    %v4812 = vadd.f32 %v4428, %v4741
    %v4813 = vadd.f32 %v4429, %v4741
    %v4814 = vadd.f32 %v4430, %v4743
    %v4815 = vadd.f32 %v4431, %v4743
    %v4816 = vadd.f32 %v4432, %v4745
    %v4817 = vadd.f32 %v4433, %v4745
    %v4818 = vadd.f32 %v4434, %v4747
    %v4819 = vadd.f32 %v4435, %v4747
    %v4820 = vadd.f32 %v4436, %v4749
    %v4821 = vadd.f32 %v4437, %v4749
    %v4822 = vadd.f32 %v4438, %v4751
    %v4823 = vadd.f32 %v4439, %v4751
    %v4824 = vadd.f32 %v4440, %v4753
    %v4825 = vadd.f32 %v4441, %v4753
    %v4826 = vadd.f32 %v4442, %v4755
    %v4827 = vadd.f32 %v4443, %v4755
    %v4828 = vadd.f32 %v4444, %v4757
    %v4829 = vadd.f32 %v4445, %v4757
    %v4830 = vadd.f32 %v4446, %v4759
    %v4831 = vadd.f32 %v4447, %v4759
    %v4832 = vadd.f32 %v4448, %v4761
    %v4833 = vadd.f32 %v4449, %v4761
    %v4834 = vadd.f32 %v4450, %v4763
    %v4835 = vadd.f32 %v4451, %v4763
    %v4836 = vadd.f32 %v4452, %v4765
    %v4837 = vadd.f32 %v4453, %v4765
    %v4838 = vadd.f32 %v4454, %v4767
    %v4839 = vadd.f32 %v4455, %v4767
    %4888 = vrot.lane.b32.xlu0 %v4792, 127
    %v4889 = vpop.permute.xlu0 %4888
    %4890 = vrot.lane.b32.xlu0 %v4793, 127
    %v4891 = vpop.permute.xlu0 %4890
    %4892 = vrot.lane.b32.xlu0 %v4794, 127
    %v4893 = vpop.permute.xlu0 %4892
    %4894 = vrot.lane.b32.xlu0 %v4795, 127
    %v4895 = vpop.permute.xlu0 %4894
    %4896 = vrot.lane.b32.xlu0 %v4796, 127
    %v4897 = vpop.permute.xlu0 %4896
    %4898 = vrot.lane.b32.xlu0 %v4797, 127
    %v4899 = vpop.permute.xlu0 %4898
    %4900 = vrot.lane.b32.xlu0 %v4798, 127
    %v4901 = vpop.permute.xlu0 %4900
    %4902 = vrot.lane.b32.xlu0 %v4799, 127
    %v4903 = vpop.permute.xlu0 %4902
    %4904 = vrot.lane.b32.xlu0 %v4800, 127
    %v4905 = vpop.permute.xlu0 %4904
    %4906 = vrot.lane.b32.xlu0 %v4801, 127
    %v4907 = vpop.permute.xlu0 %4906
    %4908 = vrot.lane.b32.xlu0 %v4802, 127
    %v4909 = vpop.permute.xlu0 %4908
    %4910 = vrot.lane.b32.xlu0 %v4803, 127
    %v4911 = vpop.permute.xlu0 %4910
    %4912 = vrot.lane.b32.xlu0 %v4804, 127
    %v4913 = vpop.permute.xlu0 %4912
    %4914 = vrot.lane.b32.xlu0 %v4805, 127
    %v4915 = vpop.permute.xlu0 %4914
    %4916 = vrot.lane.b32.xlu0 %v4806, 127
    %v4917 = vpop.permute.xlu0 %4916
    %4918 = vrot.lane.b32.xlu0 %v4807, 127
    %v4919 = vpop.permute.xlu0 %4918
    %4920 = vrot.lane.b32.xlu0 %v4808, 127
    %v4921 = vpop.permute.xlu0 %4920
    %4922 = vrot.lane.b32.xlu0 %v4809, 127
    %v4923 = vpop.permute.xlu0 %4922
    %4924 = vrot.lane.b32.xlu0 %v4810, 127
    %v4925 = vpop.permute.xlu0 %4924
    %4926 = vrot.lane.b32.xlu0 %v4811, 127
    %v4927 = vpop.permute.xlu0 %4926
    %4928 = vrot.lane.b32.xlu0 %v4812, 127
    %v4929 = vpop.permute.xlu0 %4928
    %4930 = vrot.lane.b32.xlu0 %v4813, 127
    %v4931 = vpop.permute.xlu0 %4930
    %4932 = vrot.lane.b32.xlu0 %v4814, 127
    %v4933 = vpop.permute.xlu0 %4932
    %4934 = vrot.lane.b32.xlu0 %v4815, 127
    %v4935 = vpop.permute.xlu0 %4934
    %4936 = vrot.lane.b32.xlu0 %v4816, 127
    %v4937 = vpop.permute.xlu0 %4936
    %4938 = vrot.lane.b32.xlu0 %v4817, 127
    %v4939 = vpop.permute.xlu0 %4938
    %4940 = vrot.lane.b32.xlu0 %v4818, 127
    %v4941 = vpop.permute.xlu0 %4940
    %4942 = vrot.lane.b32.xlu0 %v4819, 127
    %v4943 = vpop.permute.xlu0 %4942
    %4944 = vrot.lane.b32.xlu0 %v4820, 127
    %v4945 = vpop.permute.xlu0 %4944
    %4946 = vrot.lane.b32.xlu0 %v4821, 127
    %v4947 = vpop.permute.xlu0 %4946
    %4948 = vrot.lane.b32.xlu0 %v4822, 127
    %v4949 = vpop.permute.xlu0 %4948
    %4950 = vrot.lane.b32.xlu0 %v4823, 127
    %v4951 = vpop.permute.xlu0 %4950
    %4952 = vrot.lane.b32.xlu0 %v4824, 127
    %v4953 = vpop.permute.xlu0 %4952
    %4954 = vrot.lane.b32.xlu0 %v4825, 127
    %v4955 = vpop.permute.xlu0 %4954
    %4956 = vrot.lane.b32.xlu0 %v4826, 127
    %v4957 = vpop.permute.xlu0 %4956
    %4958 = vrot.lane.b32.xlu0 %v4827, 127
    %v4959 = vpop.permute.xlu0 %4958
    %4960 = vrot.lane.b32.xlu0 %v4828, 127
    %v4961 = vpop.permute.xlu0 %4960
    %4962 = vrot.lane.b32.xlu0 %v4829, 127
    %v4963 = vpop.permute.xlu0 %4962
    %4964 = vrot.lane.b32.xlu0 %v4830, 127
    %v4965 = vpop.permute.xlu0 %4964
    %4966 = vrot.lane.b32.xlu0 %v4831, 127
    %v4967 = vpop.permute.xlu0 %4966
    %4968 = vrot.lane.b32.xlu0 %v4832, 127
    %v4969 = vpop.permute.xlu0 %4968
    %4970 = vrot.lane.b32.xlu0 %v4833, 127
    %v4971 = vpop.permute.xlu0 %4970
    %4972 = vrot.lane.b32.xlu0 %v4834, 127
    %v4973 = vpop.permute.xlu0 %4972
    %4974 = vrot.lane.b32.xlu0 %v4835, 127
    %v4975 = vpop.permute.xlu0 %4974
    %4976 = vrot.lane.b32.xlu0 %v4836, 127
    %v4977 = vpop.permute.xlu0 %4976
    %4978 = vrot.lane.b32.xlu0 %v4837, 127
    %v4979 = vpop.permute.xlu0 %4978
    %4980 = vrot.lane.b32.xlu0 %v4838, 127
    %v4981 = vpop.permute.xlu0 %4980
    %4982 = vrot.lane.b32.xlu0 %v4839, 127
    %v4983 = vpop.permute.xlu0 %4982
    %v4984 = vsel %vm961, %v4889, %v4891
    %v4985 = vsel %vm961, %v4893, %v4895
    %v4986 = vsel %vm961, %v4897, %v4899
    %v4987 = vsel %vm961, %v4901, %v4903
    %v4988 = vsel %vm961, %v4905, %v4907
    %v4989 = vsel %vm961, %v4909, %v4911
    %v4990 = vsel %vm961, %v4913, %v4915
    %v4991 = vsel %vm961, %v4917, %v4919
    %v4992 = vsel %vm961, %v4921, %v4923
    %v4993 = vsel %vm961, %v4925, %v4927
    %v4994 = vsel %vm961, %v4929, %v4931
    %v4995 = vsel %vm961, %v4933, %v4935
    %v4996 = vsel %vm961, %v4937, %v4939
    %v4997 = vsel %vm961, %v4941, %v4943
    %v4998 = vsel %vm961, %v4945, %v4947
    %v4999 = vsel %vm961, %v4949, %v4951
    %v5000 = vsel %vm961, %v4953, %v4955
    %v5001 = vsel %vm961, %v4957, %v4959
    %v5002 = vsel %vm961, %v4961, %v4963
    %v5003 = vsel %vm961, %v4965, %v4967
    %v5004 = vsel %vm961, %v4969, %v4971
    %v5005 = vsel %vm961, %v4973, %v4975
    %v5006 = vsel %vm961, %v4977, %v4979
    %v5007 = vsel %vm961, %v4981, %v4983
    %5032 = vst [vmem:[#allocation5] sm:$0xff] %v4984
    %5033 = vst [vmem:[#allocation5 + $0x8] sm:$0xff] %v4985
    %5034 = vst [vmem:[#allocation5 + $0x10] sm:$0xff] %v4986
    %5035 = vst [vmem:[#allocation5 + $0x18] sm:$0xff] %v4987
    %5036 = vst [vmem:[#allocation5 + $0x20] sm:$0xff] %v4988
    %5037 = vst [vmem:[#allocation5 + $0x28] sm:$0xff] %v4989
    %5038 = vst [vmem:[#allocation5 + $0x30] sm:$0xff] %v4990
    %5039 = vst [vmem:[#allocation5 + $0x38] sm:$0xff] %v4991
    %5040 = vst [vmem:[#allocation5 + $0x40] sm:$0xff] %v4992
    %5041 = vst [vmem:[#allocation5 + $0x48] sm:$0xff] %v4993
    %5042 = vst [vmem:[#allocation5 + $0x50] sm:$0xff] %v4994
    %5043 = vst [vmem:[#allocation5 + $0x58] sm:$0xff] %v4995
    %5044 = vst [vmem:[#allocation5 + $0x60] sm:$0xff] %v4996
    %5045 = vst [vmem:[#allocation5 + $0x68] sm:$0xff] %v4997
    %5046 = vst [vmem:[#allocation5 + $0x70] sm:$0xff] %v4998
    %5047 = vst [vmem:[#allocation5 + $0x78] sm:$0xff] %v4999
    %5048 = vst [vmem:[#allocation5 + $0x80] sm:$0xff] %v5000
    %5049 = vst [vmem:[#allocation5 + $0x88] sm:$0xff] %v5001
    %5050 = vst [vmem:[#allocation5 + $0x90] sm:$0xff] %v5002
    %5051 = vst [vmem:[#allocation5 + $0x98] sm:$0xff] %v5003
    %5052 = vst [vmem:[#allocation5 + $0xa0] sm:$0xff] %v5004
    %5053 = vst [vmem:[#allocation5 + $0xa8] sm:$0xff] %v5005
    %5054 = vst [vmem:[#allocation5 + $0xb0] sm:$0xff] %v5006
    %5055 = vst [vmem:[#allocation5 + $0xb8] sm:$0xff] %v5007
    // Predicated region
    $region10: #{tpu_custom_call.1} parent=1 // pred_check
      _
    $region11: #{tpu_custom_call.1} parent=1 // pred_check_branch
      %5057 = sbr.rel (0) target = $region13
    $region12: #{tpu_custom_call.1} parent=1 // pred_region
      %s5059 = ssub.s32 3072, 3072
      %5060 = vsyncadd [#allocation4], %s5059
      %s5061 = sshll.u32 [#allocation5], 4
      %s5062 = int_to_ptr.vmem [resolvable:$true] %s5061
      %5067 = dma.vmem_to_hbm [thread:$0]  %s5062, 3072, %s1, [#allocation4], 128, 128, 8
    $region13: #{tpu_custom_call.1} parent=1 // pred_fallthru
      _
    // Predicated region
    $region14: #{tpu_custom_call.1} parent=1 // pred_check
      _
    $region15: #{tpu_custom_call.1} parent=1 // pred_check_branch
      %5069 = sbr.rel (0) target = $region17
    $region16: #{tpu_custom_call.1} parent=1 // pred_region
      %5070 = dma.done [#allocation4], 3072
    $region17: #{tpu_custom_call.1} parent=1 // pred_fallthru
      _
    %5071 = vsyncpa [#allocation3], 1
    %5072 = vsyncpa [#allocation4], 1

</llo_original>
